<compile_context>
chip_gen: v6e
topology: v6e:2x2x1
jax: 0.10.0
libtpu: 0.0.40
codegen_flags: <defaults>
</compile_context>

<pallas_src>
import math
import jax
import jax.numpy as jnp
from jax.experimental import pallas as pl
from jax.experimental.pallas import tpu as pltpu

# ----- mini-BERT config (small shapes consistent with the module's forward) -----
B, S, D, H, FFN, L = 2, 8, 128, 4, 256, 2
DH = D // H
VOCAB, NTYPES = 100, 2
LN_EPS = 1e-12
NEG = -1e9


# ---------------------------- fused Pallas kernel -------------------------------

def _layer_norm(x, g, b):
    mu = jnp.mean(x, axis=-1, keepdims=True)
    var = jnp.mean((x - mu) ** 2, axis=-1, keepdims=True)
    return (x - mu) * jax.lax.rsqrt(var + LN_EPS) * g + b


def _bert_fused_kernel(emb_ref, mask_ref,
                       emb_ln_g_ref, emb_ln_b_ref,
                       wqkv_ref, bqkv_ref, wo_ref, bo_ref,
                       w1_ref, b1_ref, w2_ref, b2_ref,
                       ln1_g_ref, ln1_b_ref, ln2_g_ref, ln2_b_ref,
                       last_ref, cls_ref, mean_ref,
                       qkv_sc, ctx_sc):
    scale = 1.0 / math.sqrt(DH)

    # additive attention-mask bias per batch row, hoisted out of the layer loop
    bias_rows = [(1.0 - mask_ref[b:b + 1, :]) * NEG for b in range(B)]   # each (1, S)

    # embedding LayerNorm (no residual input)
    x = _layer_norm(emb_ref[...], emb_ln_g_ref[...], emb_ln_b_ref[...])  # (B*S, D)

    for l in range(L):
        # ---- fused QKV projection: one (B*S, D) @ (D, 3D) matmul ----
        qkv_sc[...] = (jnp.dot(x, wqkv_ref[l], preferred_element_type=jnp.float32)
                       + bqkv_ref[l])                                    # (B*S, 3D)

        # ---- multi-head self-attention, all in VMEM ----
        for b in range(B):
            r0, r1 = b * S, (b + 1) * S
            bias_b = bias_rows[b]                                        # (1, S)
            for h in range(H):
                c0, c1 = h * DH, (h + 1) * DH
                qh = qkv_sc[r0:r1, 0 * D + c0:0 * D + c1]                # (S, DH)
                kh = qkv_sc[r0:r1, 1 * D + c0:1 * D + c1]                # (S, DH)
                vh = qkv_sc[r0:r1, 2 * D + c0:2 * D + c1]                # (S, DH)
                s = (jnp.dot(qh, kh.T, preferred_element_type=jnp.float32) * scale
                     + bias_b)                                           # (S, S)
                s_max = jnp.max(s, axis=-1, keepdims=True)
                p = jnp.exp(s - s_max)
                p = p * pl.reciprocal(jnp.sum(p, axis=-1, keepdims=True), approx=True)
                ctx_sc[r0:r1, c0:c1] = jnp.dot(p, vh,
                                               preferred_element_type=jnp.float32)

        # ---- output projection + residual + LayerNorm ----
        attn_out = (jnp.dot(ctx_sc[...], wo_ref[l],
                            preferred_element_type=jnp.float32) + bo_ref[l])
        x1 = _layer_norm(attn_out + x, ln1_g_ref[l], ln1_b_ref[l])

        # ---- FFN + residual + LayerNorm ----
        # TODO(synk): HF BERT uses exact erf-GELU; tanh-approx GELU is used here (EUP-friendly).
        hmid = jax.nn.gelu(jnp.dot(x1, w1_ref[l],
                                   preferred_element_type=jnp.float32) + b1_ref[l],
                           approximate=True)
        ffn_out = (jnp.dot(hmid, w2_ref[l],
                           preferred_element_type=jnp.float32) + b2_ref[l])
        x = _layer_norm(ffn_out + x1, ln2_g_ref[l], ln2_b_ref[l])

    # ---- outputs: last_hidden_state + encode() pooling variants ----
    last_ref[...] = x                                                    # (B*S, D)
    for b in range(B):
        r0, r1 = b * S, (b + 1) * S
        cls_ref[b:b + 1, :] = x[r0:r0 + 1, :]                            # CLS token
        mb = mask_ref[b:b + 1, :]                                        # (1, S)
        num = jnp.dot(mb, x[r0:r1, :], preferred_element_type=jnp.float32)  # (1, D)
        den = jnp.sum(mb)
        # NOTE: no epsilon guard (fully-masked sequence -> inf/NaN), matching the torch module.
        mean_ref[b:b + 1, :] = num / den


# ---------------------------- wrapper --------------------------------------------

def bert_forward(params, input_ids, token_type_ids, attention_mask):
    # embedding lookup is glue (gather) in plain JAX
    emb = (params['word_emb'][input_ids]
           + params['pos_emb'][None, :, :]
           + params['type_emb'][token_type_ids]).reshape(B * S, D).astype(jnp.float32)
    mask = attention_mask.astype(jnp.float32)

    last2d, cls_emb, mean_emb = pl.pallas_call(
        _bert_fused_kernel,
        out_shape=(jax.ShapeDtypeStruct((B * S, D), jnp.float32),
                   jax.ShapeDtypeStruct((B, D), jnp.float32),
                   jax.ShapeDtypeStruct((B, D), jnp.float32)),
        scratch_shapes=[pltpu.VMEM((B * S, 3 * D), jnp.float32),   # fused QKV
                        pltpu.VMEM((B * S, D), jnp.float32)],      # attention context
    )(emb, mask,
      params['emb_ln_g'], params['emb_ln_b'],
      params['wqkv'], params['bqkv'], params['wo'], params['bo'],
      params['w1'], params['b1'], params['w2'], params['b2'],
      params['ln1_g'], params['ln1_b'], params['ln2_g'], params['ln2_b'])

    return last2d.reshape(B, S, D), cls_emb, mean_emb


# ---------------------------- parameters ----------------------------------------

def init_params(key):
    def dense(k, din, dout):
        return 0.02 * jax.random.normal(k, (din, dout), jnp.float32)

    keys = jax.random.split(key, 3 + L)
    p = {
        'word_emb': 0.02 * jax.random.normal(keys[0], (VOCAB, D), jnp.float32),
        'pos_emb': 0.02 * jax.random.normal(keys[1], (S, D), jnp.float32),
        'type_emb': 0.02 * jax.random.normal(keys[2], (NTYPES, D), jnp.float32),
        'emb_ln_g': jnp.ones((1, D), jnp.float32),
        'emb_ln_b': jnp.zeros((1, D), jnp.float32),
    }
    wqkv, wo, w1, w2 = [], [], [], []
    for l in range(L):
        lk = jax.random.split(keys[3 + l], 6)
        wq, wk, wv = dense(lk[0], D, D), dense(lk[1], D, D), dense(lk[2], D, D)
        wqkv.append(jnp.concatenate([wq, wk, wv], axis=1))     # fused QKV weight
        wo.append(dense(lk[3], D, D))
        w1.append(dense(lk[4], D, FFN))
        w2.append(dense(lk[5], FFN, D))
    p['wqkv'] = jnp.stack(wqkv)                                 # (L, D, 3D)
    p['bqkv'] = jnp.zeros((L, 1, 3 * D), jnp.float32)
    p['wo'] = jnp.stack(wo)
    p['bo'] = jnp.zeros((L, 1, D), jnp.float32)
    p['w1'] = jnp.stack(w1)
    p['b1'] = jnp.zeros((L, 1, FFN), jnp.float32)
    p['w2'] = jnp.stack(w2)
    p['b2'] = jnp.zeros((L, 1, D), jnp.float32)
    p['ln1_g'] = jnp.ones((L, 1, D), jnp.float32)
    p['ln1_b'] = jnp.zeros((L, 1, D), jnp.float32)
    p['ln2_g'] = jnp.ones((L, 1, D), jnp.float32)
    p['ln2_b'] = jnp.zeros((L, 1, D), jnp.float32)
    return p


# ---------------------------- pure-JAX reference ---------------------------------

def ref_forward(params, input_ids, token_type_ids, attention_mask):
    hp = jax.lax.Precision.HIGHEST

    def ln(x, g, b):
        mu = jnp.mean(x, -1, keepdims=True)
        var = jnp.mean((x - mu) ** 2, -1, keepdims=True)
        return (x - mu) * jax.lax.rsqrt(var + LN_EPS) * g + b

    emb = (params['word_emb'][input_ids] + params['pos_emb'][None]
           + params['type_emb'][token_type_ids])
    x = ln(emb.reshape(B * S, D), params['emb_ln_g'], params['emb_ln_b'])
    bias = ((1.0 - attention_mask) * NEG)[:, None, None, :]
    for l in range(L):
        qkv = jnp.dot(x, params['wqkv'][l], precision=hp) + params['bqkv'][l]
        q = qkv[:, 0 * D:1 * D].reshape(B, S, H, DH).transpose(0, 2, 1, 3)
        k = qkv[:, 1 * D:2 * D].reshape(B, S, H, DH).transpose(0, 2, 1, 3)
        v = qkv[:, 2 * D:3 * D].reshape(B, S, H, DH).transpose(0, 2, 1, 3)
        s = jnp.einsum('bhqd,bhkd->bhqk', q, k, precision=hp) / math.sqrt(DH) + bias
        p = jax.nn.softmax(s, axis=-1)
        ctx = jnp.einsum('bhqk,bhkd->bhqd', p, v,
                         precision=hp).transpose(0, 2, 1, 3).reshape(B * S, D)
        x1 = ln(jnp.dot(ctx, params['wo'][l], precision=hp) + params['bo'][l] + x,
                params['ln1_g'][l], params['ln1_b'][l])
        hmid = jax.nn.gelu(jnp.dot(x1, params['w1'][l], precision=hp) + params['b1'][l],
                           approximate=True)
        x = ln(jnp.dot(hmid, params['w2'][l], precision=hp) + params['b2'][l] + x1,
               params['ln2_g'][l], params['ln2_b'][l])
    last = x.reshape(B, S, D)
    cls = last[:, 0, :]
    m = attention_mask[:, :, None]
    mean = (last * m).sum(1) / m.sum(1)
    return last, cls, mean


# ---------------------------- main ------------------------------------------------

if __name__ == "__main__":
    root = jax.random.PRNGKey(0)
    kp, kid = jax.random.split(root)
    params = init_params(kp)

    input_ids = jax.random.randint(kid, (B, S), 0, VOCAB)
    token_type_ids = jnp.zeros((B, S), dtype=jnp.int32)
    attention_mask = jnp.array([[1, 1, 1, 1, 1, 1, 1, 1],
                                [1, 1, 1, 1, 1, 1, 0, 0]], dtype=jnp.float32)

    fwd = jax.jit(bert_forward)
    last_hidden, cls_emb, mean_emb = fwd(params, input_ids, token_type_ids, attention_mask)
    jax.block_until_ready((last_hidden, cls_emb, mean_emb))

    ref_last, ref_cls, ref_mean = ref_forward(params, input_ids, token_type_ids, attention_mask)
    assert jnp.allclose(last_hidden, ref_last, rtol=2e-3, atol=2e-3), "last_hidden mismatch"
    assert jnp.allclose(cls_emb, ref_cls, rtol=2e-3, atol=2e-3), "cls_embedding mismatch"
    assert jnp.allclose(mean_emb, ref_mean, rtol=2e-3, atol=2e-3), "mean_embedding mismatch"

    print("KERNEL_OK")
</pallas_src>

<mosaic_0001>
module attributes {stable_mosaic.version = 11 : i64} {
  func.func @_bert_fused_kernel(%arg0: memref<16x128xf32, #tpu.memory_space<vmem>>, %arg1: memref<2x8xf32, #tpu.memory_space<vmem>>, %arg2: memref<1x128xf32, #tpu.memory_space<vmem>>, %arg3: memref<1x128xf32, #tpu.memory_space<vmem>>, %arg4: memref<2x128x384xf32, #tpu.memory_space<vmem>>, %arg5: memref<2x1x384xf32, #tpu.memory_space<vmem>>, %arg6: memref<2x128x128xf32, #tpu.memory_space<vmem>>, %arg7: memref<2x1x128xf32, #tpu.memory_space<vmem>>, %arg8: memref<2x128x256xf32, #tpu.memory_space<vmem>>, %arg9: memref<2x1x256xf32, #tpu.memory_space<vmem>>, %arg10: memref<2x256x128xf32, #tpu.memory_space<vmem>>, %arg11: memref<2x1x128xf32, #tpu.memory_space<vmem>>, %arg12: memref<2x1x128xf32, #tpu.memory_space<vmem>>, %arg13: memref<2x1x128xf32, #tpu.memory_space<vmem>>, %arg14: memref<2x1x128xf32, #tpu.memory_space<vmem>>, %arg15: memref<2x1x128xf32, #tpu.memory_space<vmem>>, %arg16: memref<16x128xf32, #tpu.memory_space<vmem>>, %arg17: memref<2x128xf32, #tpu.memory_space<vmem>>, %arg18: memref<2x128xf32, #tpu.memory_space<vmem>>, %arg19: memref<16x384xf32, #tpu.memory_space<vmem>>, %arg20: memref<16x128xf32, #tpu.memory_space<vmem>>) attributes {dimension_semantics = [], scalar_prefetch = 0 : i64, scratch_operands = 2 : i64, tpu.core_type = #tpu.core_type<tc>} {
    %c0 = arith.constant 0 : index
    %c0_0 = arith.constant 0 : index
    %0 = vector.load %arg1[%c0, %c0_0] : memref<2x8xf32, #tpu.memory_space<vmem>>, vector<1x8xf32>
    %cst = arith.constant 1.000000e+00 : f32
    %1 = vector.broadcast %cst : f32 to vector<1x8xf32>
    %2 = arith.subf %1, %0 : vector<1x8xf32>
    %cst_1 = arith.constant -1.000000e+09 : f32
    %3 = vector.broadcast %cst_1 : f32 to vector<1x8xf32>
    %4 = arith.mulf %2, %3 : vector<1x8xf32>
    %c1 = arith.constant 1 : index
    %c0_2 = arith.constant 0 : index
    %5 = vector.load %arg1[%c1, %c0_2] : memref<2x8xf32, #tpu.memory_space<vmem>>, vector<1x8xf32>
    %cst_3 = arith.constant 1.000000e+00 : f32
    %6 = vector.broadcast %cst_3 : f32 to vector<1x8xf32>
    %7 = arith.subf %6, %5 : vector<1x8xf32>
    %cst_4 = arith.constant -1.000000e+09 : f32
    %8 = vector.broadcast %cst_4 : f32 to vector<1x8xf32>
    %9 = arith.mulf %7, %8 : vector<1x8xf32>
    %c0_5 = arith.constant 0 : index
    %c0_6 = arith.constant 0 : index
    %10 = vector.load %arg0[%c0_5, %c0_6] : memref<16x128xf32, #tpu.memory_space<vmem>>, vector<16x128xf32>
    %c0_7 = arith.constant 0 : index
    %c0_8 = arith.constant 0 : index
    %11 = vector.load %arg2[%c0_7, %c0_8] : memref<1x128xf32, #tpu.memory_space<vmem>>, vector<1x128xf32>
    %c0_9 = arith.constant 0 : index
    %c0_10 = arith.constant 0 : index
    %12 = vector.load %arg3[%c0_9, %c0_10] : memref<1x128xf32, #tpu.memory_space<vmem>>, vector<1x128xf32>
    %cst_11 = arith.constant dense<0.000000e+00> : vector<16xf32>
    %13 = vector.multi_reduction <add>, %10, %cst_11 [1] : vector<16x128xf32> to vector<16xf32>
    %14 = vector.shape_cast %13 : vector<16xf32> to vector<16x1xf32>
    %cst_12 = arith.constant 1.280000e+02 : f32
    %15 = vector.broadcast %cst_12 : f32 to vector<16x1xf32>
    %16 = arith.divf %14, %15 : vector<16x1xf32>
    %17 = vector.broadcast %16 : vector<16x1xf32> to vector<16x128xf32>
    %18 = arith.subf %10, %17 : vector<16x128xf32>
    %19 = arith.mulf %18, %18 : vector<16x128xf32>
    %cst_13 = arith.constant dense<0.000000e+00> : vector<16xf32>
    %20 = vector.multi_reduction <add>, %19, %cst_13 [1] : vector<16x128xf32> to vector<16xf32>
    %21 = vector.shape_cast %20 : vector<16xf32> to vector<16x1xf32>
    %cst_14 = arith.constant 1.280000e+02 : f32
    %22 = vector.broadcast %cst_14 : f32 to vector<16x1xf32>
    %23 = arith.divf %21, %22 : vector<16x1xf32>
    %24 = vector.broadcast %16 : vector<16x1xf32> to vector<16x128xf32>
    %25 = arith.subf %10, %24 : vector<16x128xf32>
    %cst_15 = arith.constant 9.99999996E-13 : f32
    %26 = vector.broadcast %cst_15 : f32 to vector<16x1xf32>
    %27 = arith.addf %23, %26 : vector<16x1xf32>
    %28 = math.rsqrt %27 : vector<16x1xf32>
    %29 = vector.broadcast %28 : vector<16x1xf32> to vector<16x128xf32>
    %30 = arith.mulf %25, %29 : vector<16x128xf32>
    %31 = vector.broadcast %11 : vector<1x128xf32> to vector<16x128xf32>
    %32 = arith.mulf %30, %31 : vector<16x128xf32>
    %33 = vector.broadcast %12 : vector<1x128xf32> to vector<16x128xf32>
    %34 = arith.addf %32, %33 : vector<16x128xf32>
    %c0_16 = arith.constant 0 : index
    %c0_17 = arith.constant 0 : index
    %c0_18 = arith.constant 0 : index
    %35 = vector.load %arg4[%c0_16, %c0_17, %c0_18] : memref<2x128x384xf32, #tpu.memory_space<vmem>>, vector<1x128x384xf32>
    %36 = vector.shape_cast %35 : vector<1x128x384xf32> to vector<128x384xf32>
    %cst_19 = arith.constant dense<0.000000e+00> : vector<16x384xf32>
    %37 = tpu.matmul %34, %36, %cst_19 {dimension_numbers = #tpu.dot_dimension_numbers<[1], [0], [0], [1], [0, 0, 1, 1], [], []>} : vector<16x128xf32>, vector<128x384xf32>, vector<16x384xf32> -> vector<16x384xf32>
    %c0_20 = arith.constant 0 : index
    %c0_21 = arith.constant 0 : index
    %c0_22 = arith.constant 0 : index
    %38 = vector.load %arg5[%c0_20, %c0_21, %c0_22] : memref<2x1x384xf32, #tpu.memory_space<vmem>>, vector<1x1x384xf32>
    %39 = vector.shape_cast %38 : vector<1x1x384xf32> to vector<1x384xf32>
    %40 = vector.broadcast %39 : vector<1x384xf32> to vector<16x384xf32>
    %41 = arith.addf %37, %40 : vector<16x384xf32>
    %c0_23 = arith.constant 0 : index
    %c0_24 = arith.constant 0 : index
    %42 = vector.load %arg19[%c0_23, %c0_24] : memref<16x384xf32, #tpu.memory_space<vmem>>, vector<16x384xf32>
    tpu.vector_store %arg19[%c0_23, %c0_24], %41 {strides = array<i32>} : memref<16x384xf32, #tpu.memory_space<vmem>>, vector<16x384xf32>,
    %c0_25 = arith.constant 0 : index
    %c0_26 = arith.constant 0 : index
    %43 = vector.load %arg19[%c0_25, %c0_26] : memref<16x384xf32, #tpu.memory_space<vmem>>, vector<8x32xf32>
    %c0_27 = arith.constant 0 : index
    %c128 = arith.constant 128 : index
    %44 = vector.load %arg19[%c0_27, %c128] : memref<16x384xf32, #tpu.memory_space<vmem>>, vector<8x32xf32>
    %c0_28 = arith.constant 0 : index
    %c256 = arith.constant 256 : index
    %45 = vector.load %arg19[%c0_28, %c256] : memref<16x384xf32, #tpu.memory_space<vmem>>, vector<8x32xf32>
    %46 = tpu.transpose %44, [1, 0] : vector<8x32xf32> -> vector<32x8xf32>
    %cst_29 = arith.constant dense<0.000000e+00> : vector<8x8xf32>
    %47 = tpu.matmul %43, %46, %cst_29 {dimension_numbers = #tpu.dot_dimension_numbers<[1], [0], [0], [1], [0, 0, 1, 1], [], []>} : vector<8x32xf32>, vector<32x8xf32>, vector<8x8xf32> -> vector<8x8xf32>
    %cst_30 = arith.constant 0.176776692 : f32
    %48 = vector.broadcast %cst_30 : f32 to vector<8x8xf32>
    %49 = arith.mulf %47, %48 : vector<8x8xf32>
    %50 = vector.broadcast %4 : vector<1x8xf32> to vector<8x8xf32>
    %51 = arith.addf %49, %50 : vector<8x8xf32>
    %cst_31 = arith.constant dense<0xFF800000> : vector<8xf32>
    %52 = vector.multi_reduction <maximumf>, %51, %cst_31 [1] : vector<8x8xf32> to vector<8xf32>
    %53 = vector.shape_cast %52 : vector<8xf32> to vector<8x1xf32>
    %54 = vector.broadcast %53 : vector<8x1xf32> to vector<8x8xf32>
    %55 = arith.subf %51, %54 : vector<8x8xf32>
    %56 = math.exp %55 : vector<8x8xf32>
    %cst_32 = arith.constant dense<0.000000e+00> : vector<8xf32>
    %57 = vector.multi_reduction <add>, %56, %cst_32 [1] : vector<8x8xf32> to vector<8xf32>
    %58 = vector.shape_cast %57 : vector<8xf32> to vector<8x1xf32>
    %59 = tpu.reciprocal %58 {approx = true} : vector<8x1xf32> -> vector<8x1xf32>
    %60 = vector.broadcast %59 : vector<8x1xf32> to vector<8x8xf32>
    %61 = arith.mulf %56, %60 : vector<8x8xf32>
    %cst_33 = arith.constant dense<0.000000e+00> : vector<8x32xf32>
    %62 = tpu.matmul %61, %45, %cst_33 {dimension_numbers = #tpu.dot_dimension_numbers<[1], [0], [0], [1], [0, 0, 1, 1], [], []>} : vector<8x8xf32>, vector<8x32xf32>, vector<8x32xf32> -> vector<8x32xf32>
    %c0_34 = arith.constant 0 : index
    %c0_35 = arith.constant 0 : index
    %63 = vector.load %arg20[%c0_34, %c0_35] : memref<16x128xf32, #tpu.memory_space<vmem>>, vector<8x32xf32>
    tpu.vector_store %arg20[%c0_34, %c0_35], %62 {strides = array<i32>} : memref<16x128xf32, #tpu.memory_space<vmem>>, vector<8x32xf32>,
    %c0_36 = arith.constant 0 : index
    %c32 = arith.constant 32 : index
    %64 = vector.load %arg19[%c0_36, %c32] : memref<16x384xf32, #tpu.memory_space<vmem>>, vector<8x32xf32>
    %c0_37 = arith.constant 0 : index
    %c160 = arith.constant 160 : index
    %65 = vector.load %arg19[%c0_37, %c160] : memref<16x384xf32, #tpu.memory_space<vmem>>, vector<8x32xf32>
    %c0_38 = arith.constant 0 : index
    %c288 = arith.constant 288 : index
    %66 = vector.load %arg19[%c0_38, %c288] : memref<16x384xf32, #tpu.memory_space<vmem>>, vector<8x32xf32>
    %67 = tpu.transpose %65, [1, 0] : vector<8x32xf32> -> vector<32x8xf32>
    %cst_39 = arith.constant dense<0.000000e+00> : vector<8x8xf32>
    %68 = tpu.matmul %64, %67, %cst_39 {dimension_numbers = #tpu.dot_dimension_numbers<[1], [0], [0], [1], [0, 0, 1, 1], [], []>} : vector<8x32xf32>, vector<32x8xf32>, vector<8x8xf32> -> vector<8x8xf32>
    %cst_40 = arith.constant 0.176776692 : f32
    %69 = vector.broadcast %cst_40 : f32 to vector<8x8xf32>
    %70 = arith.mulf %68, %69 : vector<8x8xf32>
    %71 = vector.broadcast %4 : vector<1x8xf32> to vector<8x8xf32>
    %72 = arith.addf %70, %71 : vector<8x8xf32>
    %cst_41 = arith.constant dense<0xFF800000> : vector<8xf32>
    %73 = vector.multi_reduction <maximumf>, %72, %cst_41 [1] : vector<8x8xf32> to vector<8xf32>
    %74 = vector.shape_cast %73 : vector<8xf32> to vector<8x1xf32>
    %75 = vector.broadcast %74 : vector<8x1xf32> to vector<8x8xf32>
    %76 = arith.subf %72, %75 : vector<8x8xf32>
    %77 = math.exp %76 : vector<8x8xf32>
    %cst_42 = arith.constant dense<0.000000e+00> : vector<8xf32>
    %78 = vector.multi_reduction <add>, %77, %cst_42 [1] : vector<8x8xf32> to vector<8xf32>
    %79 = vector.shape_cast %78 : vector<8xf32> to vector<8x1xf32>
    %80 = tpu.reciprocal %79 {approx = true} : vector<8x1xf32> -> vector<8x1xf32>
    %81 = vector.broadcast %80 : vector<8x1xf32> to vector<8x8xf32>
    %82 = arith.mulf %77, %81 : vector<8x8xf32>
    %cst_43 = arith.constant dense<0.000000e+00> : vector<8x32xf32>
    %83 = tpu.matmul %82, %66, %cst_43 {dimension_numbers = #tpu.dot_dimension_numbers<[1], [0], [0], [1], [0, 0, 1, 1], [], []>} : vector<8x8xf32>, vector<8x32xf32>, vector<8x32xf32> -> vector<8x32xf32>
    %c0_44 = arith.constant 0 : index
    %c32_45 = arith.constant 32 : index
    %84 = vector.load %arg20[%c0_44, %c32_45] : memref<16x128xf32, #tpu.memory_space<vmem>>, vector<8x32xf32>
    tpu.vector_store %arg20[%c0_44, %c32_45], %83 {strides = array<i32>} : memref<16x128xf32, #tpu.memory_space<vmem>>, vector<8x32xf32>,
    %c0_46 = arith.constant 0 : index
    %c64 = arith.constant 64 : index
    %85 = vector.load %arg19[%c0_46, %c64] : memref<16x384xf32, #tpu.memory_space<vmem>>, vector<8x32xf32>
    %c0_47 = arith.constant 0 : index
    %c192 = arith.constant 192 : index
    %86 = vector.load %arg19[%c0_47, %c192] : memref<16x384xf32, #tpu.memory_space<vmem>>, vector<8x32xf32>
    %c0_48 = arith.constant 0 : index
    %c320 = arith.constant 320 : index
    %87 = vector.load %arg19[%c0_48, %c320] : memref<16x384xf32, #tpu.memory_space<vmem>>, vector<8x32xf32>
    %88 = tpu.transpose %86, [1, 0] : vector<8x32xf32> -> vector<32x8xf32>
    %cst_49 = arith.constant dense<0.000000e+00> : vector<8x8xf32>
    %89 = tpu.matmul %85, %88, %cst_49 {dimension_numbers = #tpu.dot_dimension_numbers<[1], [0], [0], [1], [0, 0, 1, 1], [], []>} : vector<8x32xf32>, vector<32x8xf32>, vector<8x8xf32> -> vector<8x8xf32>
    %cst_50 = arith.constant 0.176776692 : f32
    %90 = vector.broadcast %cst_50 : f32 to vector<8x8xf32>
    %91 = arith.mulf %89, %90 : vector<8x8xf32>
    %92 = vector.broadcast %4 : vector<1x8xf32> to vector<8x8xf32>
    %93 = arith.addf %91, %92 : vector<8x8xf32>
    %cst_51 = arith.constant dense<0xFF800000> : vector<8xf32>
    %94 = vector.multi_reduction <maximumf>, %93, %cst_51 [1] : vector<8x8xf32> to vector<8xf32>
    %95 = vector.shape_cast %94 : vector<8xf32> to vector<8x1xf32>
    %96 = vector.broadcast %95 : vector<8x1xf32> to vector<8x8xf32>
    %97 = arith.subf %93, %96 : vector<8x8xf32>
    %98 = math.exp %97 : vector<8x8xf32>
    %cst_52 = arith.constant dense<0.000000e+00> : vector<8xf32>
    %99 = vector.multi_reduction <add>, %98, %cst_52 [1] : vector<8x8xf32> to vector<8xf32>
    %100 = vector.shape_cast %99 : vector<8xf32> to vector<8x1xf32>
    %101 = tpu.reciprocal %100 {approx = true} : vector<8x1xf32> -> vector<8x1xf32>
    %102 = vector.broadcast %101 : vector<8x1xf32> to vector<8x8xf32>
    %103 = arith.mulf %98, %102 : vector<8x8xf32>
    %cst_53 = arith.constant dense<0.000000e+00> : vector<8x32xf32>
    %104 = tpu.matmul %103, %87, %cst_53 {dimension_numbers = #tpu.dot_dimension_numbers<[1], [0], [0], [1], [0, 0, 1, 1], [], []>} : vector<8x8xf32>, vector<8x32xf32>, vector<8x32xf32> -> vector<8x32xf32>
    %c0_54 = arith.constant 0 : index
    %c64_55 = arith.constant 64 : index
    %105 = vector.load %arg20[%c0_54, %c64_55] : memref<16x128xf32, #tpu.memory_space<vmem>>, vector<8x32xf32>
    tpu.vector_store %arg20[%c0_54, %c64_55], %104 {strides = array<i32>} : memref<16x128xf32, #tpu.memory_space<vmem>>, vector<8x32xf32>,
    %c0_56 = arith.constant 0 : index
    %c96 = arith.constant 96 : index
    %106 = vector.load %arg19[%c0_56, %c96] : memref<16x384xf32, #tpu.memory_space<vmem>>, vector<8x32xf32>
    %c0_57 = arith.constant 0 : index
    %c224 = arith.constant 224 : index
    %107 = vector.load %arg19[%c0_57, %c224] : memref<16x384xf32, #tpu.memory_space<vmem>>, vector<8x32xf32>
    %c0_58 = arith.constant 0 : index
    %c352 = arith.constant 352 : index
    %108 = vector.load %arg19[%c0_58, %c352] : memref<16x384xf32, #tpu.memory_space<vmem>>, vector<8x32xf32>
    %109 = tpu.transpose %107, [1, 0] : vector<8x32xf32> -> vector<32x8xf32>
    %cst_59 = arith.constant dense<0.000000e+00> : vector<8x8xf32>
    %110 = tpu.matmul %106, %109, %cst_59 {dimension_numbers = #tpu.dot_dimension_numbers<[1], [0], [0], [1], [0, 0, 1, 1], [], []>} : vector<8x32xf32>, vector<32x8xf32>, vector<8x8xf32> -> vector<8x8xf32>
    %cst_60 = arith.constant 0.176776692 : f32
    %111 = vector.broadcast %cst_60 : f32 to vector<8x8xf32>
    %112 = arith.mulf %110, %111 : vector<8x8xf32>
    %113 = vector.broadcast %4 : vector<1x8xf32> to vector<8x8xf32>
    %114 = arith.addf %112, %113 : vector<8x8xf32>
    %cst_61 = arith.constant dense<0xFF800000> : vector<8xf32>
    %115 = vector.multi_reduction <maximumf>, %114, %cst_61 [1] : vector<8x8xf32> to vector<8xf32>
    %116 = vector.shape_cast %115 : vector<8xf32> to vector<8x1xf32>
    %117 = vector.broadcast %116 : vector<8x1xf32> to vector<8x8xf32>
    %118 = arith.subf %114, %117 : vector<8x8xf32>
    %119 = math.exp %118 : vector<8x8xf32>
    %cst_62 = arith.constant dense<0.000000e+00> : vector<8xf32>
    %120 = vector.multi_reduction <add>, %119, %cst_62 [1] : vector<8x8xf32> to vector<8xf32>
    %121 = vector.shape_cast %120 : vector<8xf32> to vector<8x1xf32>
    %122 = tpu.reciprocal %121 {approx = true} : vector<8x1xf32> -> vector<8x1xf32>
    %123 = vector.broadcast %122 : vector<8x1xf32> to vector<8x8xf32>
    %124 = arith.mulf %119, %123 : vector<8x8xf32>
    %cst_63 = arith.constant dense<0.000000e+00> : vector<8x32xf32>
    %125 = tpu.matmul %124, %108, %cst_63 {dimension_numbers = #tpu.dot_dimension_numbers<[1], [0], [0], [1], [0, 0, 1, 1], [], []>} : vector<8x8xf32>, vector<8x32xf32>, vector<8x32xf32> -> vector<8x32xf32>
    %c0_64 = arith.constant 0 : index
    %c96_65 = arith.constant 96 : index
    %126 = vector.load %arg20[%c0_64, %c96_65] : memref<16x128xf32, #tpu.memory_space<vmem>>, vector<8x32xf32>
    tpu.vector_store %arg20[%c0_64, %c96_65], %125 {strides = array<i32>} : memref<16x128xf32, #tpu.memory_space<vmem>>, vector<8x32xf32>,
    %c8 = arith.constant 8 : index
    %c0_66 = arith.constant 0 : index
    %127 = vector.load %arg19[%c8, %c0_66] : memref<16x384xf32, #tpu.memory_space<vmem>>, vector<8x32xf32>
    %c8_67 = arith.constant 8 : index
    %c128_68 = arith.constant 128 : index
    %128 = vector.load %arg19[%c8_67, %c128_68] : memref<16x384xf32, #tpu.memory_space<vmem>>, vector<8x32xf32>
    %c8_69 = arith.constant 8 : index
    %c256_70 = arith.constant 256 : index
    %129 = vector.load %arg19[%c8_69, %c256_70] : memref<16x384xf32, #tpu.memory_space<vmem>>, vector<8x32xf32>
    %130 = tpu.transpose %128, [1, 0] : vector<8x32xf32> -> vector<32x8xf32>
    %cst_71 = arith.constant dense<0.000000e+00> : vector<8x8xf32>
    %131 = tpu.matmul %127, %130, %cst_71 {dimension_numbers = #tpu.dot_dimension_numbers<[1], [0], [0], [1], [0, 0, 1, 1], [], []>} : vector<8x32xf32>, vector<32x8xf32>, vector<8x8xf32> -> vector<8x8xf32>
    %cst_72 = arith.constant 0.176776692 : f32
    %132 = vector.broadcast %cst_72 : f32 to vector<8x8xf32>
    %133 = arith.mulf %131, %132 : vector<8x8xf32>
    %134 = vector.broadcast %9 : vector<1x8xf32> to vector<8x8xf32>
    %135 = arith.addf %133, %134 : vector<8x8xf32>
    %cst_73 = arith.constant dense<0xFF800000> : vector<8xf32>
    %136 = vector.multi_reduction <maximumf>, %135, %cst_73 [1] : vector<8x8xf32> to vector<8xf32>
    %137 = vector.shape_cast %136 : vector<8xf32> to vector<8x1xf32>
    %138 = vector.broadcast %137 : vector<8x1xf32> to vector<8x8xf32>
    %139 = arith.subf %135, %138 : vector<8x8xf32>
    %140 = math.exp %139 : vector<8x8xf32>
    %cst_74 = arith.constant dense<0.000000e+00> : vector<8xf32>
    %141 = vector.multi_reduction <add>, %140, %cst_74 [1] : vector<8x8xf32> to vector<8xf32>
    %142 = vector.shape_cast %141 : vector<8xf32> to vector<8x1xf32>
    %143 = tpu.reciprocal %142 {approx = true} : vector<8x1xf32> -> vector<8x1xf32>
    %144 = vector.broadcast %143 : vector<8x1xf32> to vector<8x8xf32>
    %145 = arith.mulf %140, %144 : vector<8x8xf32>
    %cst_75 = arith.constant dense<0.000000e+00> : vector<8x32xf32>
    %146 = tpu.matmul %145, %129, %cst_75 {dimension_numbers = #tpu.dot_dimension_numbers<[1], [0], [0], [1], [0, 0, 1, 1], [], []>} : vector<8x8xf32>, vector<8x32xf32>, vector<8x32xf32> -> vector<8x32xf32>
    %c8_76 = arith.constant 8 : index
    %c0_77 = arith.constant 0 : index
    %147 = vector.load %arg20[%c8_76, %c0_77] : memref<16x128xf32, #tpu.memory_space<vmem>>, vector<8x32xf32>
    tpu.vector_store %arg20[%c8_76, %c0_77], %146 {strides = array<i32>} : memref<16x128xf32, #tpu.memory_space<vmem>>, vector<8x32xf32>,
    %c8_78 = arith.constant 8 : index
    %c32_79 = arith.constant 32 : index
    %148 = vector.load %arg19[%c8_78, %c32_79] : memref<16x384xf32, #tpu.memory_space<vmem>>, vector<8x32xf32>
    %c8_80 = arith.constant 8 : index
    %c160_81 = arith.constant 160 : index
    %149 = vector.load %arg19[%c8_80, %c160_81] : memref<16x384xf32, #tpu.memory_space<vmem>>, vector<8x32xf32>
    %c8_82 = arith.constant 8 : index
    %c288_83 = arith.constant 288 : index
    %150 = vector.load %arg19[%c8_82, %c288_83] : memref<16x384xf32, #tpu.memory_space<vmem>>, vector<8x32xf32>
    %151 = tpu.transpose %149, [1, 0] : vector<8x32xf32> -> vector<32x8xf32>
    %cst_84 = arith.constant dense<0.000000e+00> : vector<8x8xf32>
    %152 = tpu.matmul %148, %151, %cst_84 {dimension_numbers = #tpu.dot_dimension_numbers<[1], [0], [0], [1], [0, 0, 1, 1], [], []>} : vector<8x32xf32>, vector<32x8xf32>, vector<8x8xf32> -> vector<8x8xf32>
    %cst_85 = arith.constant 0.176776692 : f32
    %153 = vector.broadcast %cst_85 : f32 to vector<8x8xf32>
    %154 = arith.mulf %152, %153 : vector<8x8xf32>
    %155 = vector.broadcast %9 : vector<1x8xf32> to vector<8x8xf32>
    %156 = arith.addf %154, %155 : vector<8x8xf32>
    %cst_86 = arith.constant dense<0xFF800000> : vector<8xf32>
    %157 = vector.multi_reduction <maximumf>, %156, %cst_86 [1] : vector<8x8xf32> to vector<8xf32>
    %158 = vector.shape_cast %157 : vector<8xf32> to vector<8x1xf32>
    %159 = vector.broadcast %158 : vector<8x1xf32> to vector<8x8xf32>
    %160 = arith.subf %156, %159 : vector<8x8xf32>
    %161 = math.exp %160 : vector<8x8xf32>
    %cst_87 = arith.constant dense<0.000000e+00> : vector<8xf32>
    %162 = vector.multi_reduction <add>, %161, %cst_87 [1] : vector<8x8xf32> to vector<8xf32>
    %163 = vector.shape_cast %162 : vector<8xf32> to vector<8x1xf32>
    %164 = tpu.reciprocal %163 {approx = true} : vector<8x1xf32> -> vector<8x1xf32>
    %165 = vector.broadcast %164 : vector<8x1xf32> to vector<8x8xf32>
    %166 = arith.mulf %161, %165 : vector<8x8xf32>
    %cst_88 = arith.constant dense<0.000000e+00> : vector<8x32xf32>
    %167 = tpu.matmul %166, %150, %cst_88 {dimension_numbers = #tpu.dot_dimension_numbers<[1], [0], [0], [1], [0, 0, 1, 1], [], []>} : vector<8x8xf32>, vector<8x32xf32>, vector<8x32xf32> -> vector<8x32xf32>
    %c8_89 = arith.constant 8 : index
    %c32_90 = arith.constant 32 : index
    %168 = vector.load %arg20[%c8_89, %c32_90] : memref<16x128xf32, #tpu.memory_space<vmem>>, vector<8x32xf32>
    tpu.vector_store %arg20[%c8_89, %c32_90], %167 {strides = array<i32>} : memref<16x128xf32, #tpu.memory_space<vmem>>, vector<8x32xf32>,
    %c8_91 = arith.constant 8 : index
    %c64_92 = arith.constant 64 : index
    %169 = vector.load %arg19[%c8_91, %c64_92] : memref<16x384xf32, #tpu.memory_space<vmem>>, vector<8x32xf32>
    %c8_93 = arith.constant 8 : index
    %c192_94 = arith.constant 192 : index
    %170 = vector.load %arg19[%c8_93, %c192_94] : memref<16x384xf32, #tpu.memory_space<vmem>>, vector<8x32xf32>
    %c8_95 = arith.constant 8 : index
    %c320_96 = arith.constant 320 : index
    %171 = vector.load %arg19[%c8_95, %c320_96] : memref<16x384xf32, #tpu.memory_space<vmem>>, vector<8x32xf32>
    %172 = tpu.transpose %170, [1, 0] : vector<8x32xf32> -> vector<32x8xf32>
    %cst_97 = arith.constant dense<0.000000e+00> : vector<8x8xf32>
    %173 = tpu.matmul %169, %172, %cst_97 {dimension_numbers = #tpu.dot_dimension_numbers<[1], [0], [0], [1], [0, 0, 1, 1], [], []>} : vector<8x32xf32>, vector<32x8xf32>, vector<8x8xf32> -> vector<8x8xf32>
    %cst_98 = arith.constant 0.176776692 : f32
    %174 = vector.broadcast %cst_98 : f32 to vector<8x8xf32>
    %175 = arith.mulf %173, %174 : vector<8x8xf32>
    %176 = vector.broadcast %9 : vector<1x8xf32> to vector<8x8xf32>
    %177 = arith.addf %175, %176 : vector<8x8xf32>
    %cst_99 = arith.constant dense<0xFF800000> : vector<8xf32>
    %178 = vector.multi_reduction <maximumf>, %177, %cst_99 [1] : vector<8x8xf32> to vector<8xf32>
    %179 = vector.shape_cast %178 : vector<8xf32> to vector<8x1xf32>
    %180 = vector.broadcast %179 : vector<8x1xf32> to vector<8x8xf32>
    %181 = arith.subf %177, %180 : vector<8x8xf32>
    %182 = math.exp %181 : vector<8x8xf32>
    %cst_100 = arith.constant dense<0.000000e+00> : vector<8xf32>
    %183 = vector.multi_reduction <add>, %182, %cst_100 [1] : vector<8x8xf32> to vector<8xf32>
    %184 = vector.shape_cast %183 : vector<8xf32> to vector<8x1xf32>
    %185 = tpu.reciprocal %184 {approx = true} : vector<8x1xf32> -> vector<8x1xf32>
    %186 = vector.broadcast %185 : vector<8x1xf32> to vector<8x8xf32>
    %187 = arith.mulf %182, %186 : vector<8x8xf32>
    %cst_101 = arith.constant dense<0.000000e+00> : vector<8x32xf32>
    %188 = tpu.matmul %187, %171, %cst_101 {dimension_numbers = #tpu.dot_dimension_numbers<[1], [0], [0], [1], [0, 0, 1, 1], [], []>} : vector<8x8xf32>, vector<8x32xf32>, vector<8x32xf32> -> vector<8x32xf32>
    %c8_102 = arith.constant 8 : index
    %c64_103 = arith.constant 64 : index
    %189 = vector.load %arg20[%c8_102, %c64_103] : memref<16x128xf32, #tpu.memory_space<vmem>>, vector<8x32xf32>
    tpu.vector_store %arg20[%c8_102, %c64_103], %188 {strides = array<i32>} : memref<16x128xf32, #tpu.memory_space<vmem>>, vector<8x32xf32>,
    %c8_104 = arith.constant 8 : index
    %c96_105 = arith.constant 96 : index
    %190 = vector.load %arg19[%c8_104, %c96_105] : memref<16x384xf32, #tpu.memory_space<vmem>>, vector<8x32xf32>
    %c8_106 = arith.constant 8 : index
    %c224_107 = arith.constant 224 : index
    %191 = vector.load %arg19[%c8_106, %c224_107] : memref<16x384xf32, #tpu.memory_space<vmem>>, vector<8x32xf32>
    %c8_108 = arith.constant 8 : index
    %c352_109 = arith.constant 352 : index
    %192 = vector.load %arg19[%c8_108, %c352_109] : memref<16x384xf32, #tpu.memory_space<vmem>>, vector<8x32xf32>
    %193 = tpu.transpose %191, [1, 0] : vector<8x32xf32> -> vector<32x8xf32>
    %cst_110 = arith.constant dense<0.000000e+00> : vector<8x8xf32>
    %194 = tpu.matmul %190, %193, %cst_110 {dimension_numbers = #tpu.dot_dimension_numbers<[1], [0], [0], [1], [0, 0, 1, 1], [], []>} : vector<8x32xf32>, vector<32x8xf32>, vector<8x8xf32> -> vector<8x8xf32>
    %cst_111 = arith.constant 0.176776692 : f32
    %195 = vector.broadcast %cst_111 : f32 to vector<8x8xf32>
    %196 = arith.mulf %194, %195 : vector<8x8xf32>
    %197 = vector.broadcast %9 : vector<1x8xf32> to vector<8x8xf32>
    %198 = arith.addf %196, %197 : vector<8x8xf32>
    %cst_112 = arith.constant dense<0xFF800000> : vector<8xf32>
    %199 = vector.multi_reduction <maximumf>, %198, %cst_112 [1] : vector<8x8xf32> to vector<8xf32>
    %200 = vector.shape_cast %199 : vector<8xf32> to vector<8x1xf32>
    %201 = vector.broadcast %200 : vector<8x1xf32> to vector<8x8xf32>
    %202 = arith.subf %198, %201 : vector<8x8xf32>
    %203 = math.exp %202 : vector<8x8xf32>
    %cst_113 = arith.constant dense<0.000000e+00> : vector<8xf32>
    %204 = vector.multi_reduction <add>, %203, %cst_113 [1] : vector<8x8xf32> to vector<8xf32>
    %205 = vector.shape_cast %204 : vector<8xf32> to vector<8x1xf32>
    %206 = tpu.reciprocal %205 {approx = true} : vector<8x1xf32> -> vector<8x1xf32>
    %207 = vector.broadcast %206 : vector<8x1xf32> to vector<8x8xf32>
    %208 = arith.mulf %203, %207 : vector<8x8xf32>
    %cst_114 = arith.constant dense<0.000000e+00> : vector<8x32xf32>
    %209 = tpu.matmul %208, %192, %cst_114 {dimension_numbers = #tpu.dot_dimension_numbers<[1], [0], [0], [1], [0, 0, 1, 1], [], []>} : vector<8x8xf32>, vector<8x32xf32>, vector<8x32xf32> -> vector<8x32xf32>
    %c8_115 = arith.constant 8 : index
    %c96_116 = arith.constant 96 : index
    %210 = vector.load %arg20[%c8_115, %c96_116] : memref<16x128xf32, #tpu.memory_space<vmem>>, vector<8x32xf32>
    tpu.vector_store %arg20[%c8_115, %c96_116], %209 {strides = array<i32>} : memref<16x128xf32, #tpu.memory_space<vmem>>, vector<8x32xf32>,
    %c0_117 = arith.constant 0 : index
    %c0_118 = arith.constant 0 : index
    %211 = vector.load %arg20[%c0_117, %c0_118] : memref<16x128xf32, #tpu.memory_space<vmem>>, vector<16x128xf32>
    %c0_119 = arith.constant 0 : index
    %c0_120 = arith.constant 0 : index
    %c0_121 = arith.constant 0 : index
    %212 = vector.load %arg6[%c0_119, %c0_120, %c0_121] : memref<2x128x128xf32, #tpu.memory_space<vmem>>, vector<1x128x128xf32>
    %213 = vector.shape_cast %212 : vector<1x128x128xf32> to vector<128x128xf32>
    %cst_122 = arith.constant dense<0.000000e+00> : vector<16x128xf32>
    %214 = tpu.matmul %211, %213, %cst_122 {dimension_numbers = #tpu.dot_dimension_numbers<[1], [0], [0], [1], [0, 0, 1, 1], [], []>} : vector<16x128xf32>, vector<128x128xf32>, vector<16x128xf32> -> vector<16x128xf32>
    %c0_123 = arith.constant 0 : index
    %c0_124 = arith.constant 0 : index
    %c0_125 = arith.constant 0 : index
    %215 = vector.load %arg7[%c0_123, %c0_124, %c0_125] : memref<2x1x128xf32, #tpu.memory_space<vmem>>, vector<1x1x128xf32>
    %216 = vector.shape_cast %215 : vector<1x1x128xf32> to vector<1x128xf32>
    %217 = vector.broadcast %216 : vector<1x128xf32> to vector<16x128xf32>
    %218 = arith.addf %214, %217 : vector<16x128xf32>
    %219 = arith.addf %218, %34 : vector<16x128xf32>
    %c0_126 = arith.constant 0 : index
    %c0_127 = arith.constant 0 : index
    %c0_128 = arith.constant 0 : index
    %220 = vector.load %arg12[%c0_126, %c0_127, %c0_128] : memref<2x1x128xf32, #tpu.memory_space<vmem>>, vector<1x1x128xf32>
    %221 = vector.shape_cast %220 : vector<1x1x128xf32> to vector<1x128xf32>
    %c0_129 = arith.constant 0 : index
    %c0_130 = arith.constant 0 : index
    %c0_131 = arith.constant 0 : index
    %222 = vector.load %arg13[%c0_129, %c0_130, %c0_131] : memref<2x1x128xf32, #tpu.memory_space<vmem>>, vector<1x1x128xf32>
    %223 = vector.shape_cast %222 : vector<1x1x128xf32> to vector<1x128xf32>
    %cst_132 = arith.constant dense<0.000000e+00> : vector<16xf32>
    %224 = vector.multi_reduction <add>, %219, %cst_132 [1] : vector<16x128xf32> to vector<16xf32>
    %225 = vector.shape_cast %224 : vector<16xf32> to vector<16x1xf32>
    %cst_133 = arith.constant 1.280000e+02 : f32
    %226 = vector.broadcast %cst_133 : f32 to vector<16x1xf32>
    %227 = arith.divf %225, %226 : vector<16x1xf32>
    %228 = vector.broadcast %227 : vector<16x1xf32> to vector<16x128xf32>
    %229 = arith.subf %219, %228 : vector<16x128xf32>
    %230 = arith.mulf %229, %229 : vector<16x128xf32>
    %cst_134 = arith.constant dense<0.000000e+00> : vector<16xf32>
    %231 = vector.multi_reduction <add>, %230, %cst_134 [1] : vector<16x128xf32> to vector<16xf32>
    %232 = vector.shape_cast %231 : vector<16xf32> to vector<16x1xf32>
    %cst_135 = arith.constant 1.280000e+02 : f32
    %233 = vector.broadcast %cst_135 : f32 to vector<16x1xf32>
    %234 = arith.divf %232, %233 : vector<16x1xf32>
    %235 = vector.broadcast %227 : vector<16x1xf32> to vector<16x128xf32>
    %236 = arith.subf %219, %235 : vector<16x128xf32>
    %cst_136 = arith.constant 9.99999996E-13 : f32
    %237 = vector.broadcast %cst_136 : f32 to vector<16x1xf32>
    %238 = arith.addf %234, %237 : vector<16x1xf32>
    %239 = math.rsqrt %238 : vector<16x1xf32>
    %240 = vector.broadcast %239 : vector<16x1xf32> to vector<16x128xf32>
    %241 = arith.mulf %236, %240 : vector<16x128xf32>
    %242 = vector.broadcast %221 : vector<1x128xf32> to vector<16x128xf32>
    %243 = arith.mulf %241, %242 : vector<16x128xf32>
    %244 = vector.broadcast %223 : vector<1x128xf32> to vector<16x128xf32>
    %245 = arith.addf %243, %244 : vector<16x128xf32>
    %c0_137 = arith.constant 0 : index
    %c0_138 = arith.constant 0 : index
    %c0_139 = arith.constant 0 : index
    %246 = vector.load %arg8[%c0_137, %c0_138, %c0_139] : memref<2x128x256xf32, #tpu.memory_space<vmem>>, vector<1x128x256xf32>
    %247 = vector.shape_cast %246 : vector<1x128x256xf32> to vector<128x256xf32>
    %cst_140 = arith.constant dense<0.000000e+00> : vector<16x256xf32>
    %248 = tpu.matmul %245, %247, %cst_140 {dimension_numbers = #tpu.dot_dimension_numbers<[1], [0], [0], [1], [0, 0, 1, 1], [], []>} : vector<16x128xf32>, vector<128x256xf32>, vector<16x256xf32> -> vector<16x256xf32>
    %c0_141 = arith.constant 0 : index
    %c0_142 = arith.constant 0 : index
    %c0_143 = arith.constant 0 : index
    %249 = vector.load %arg9[%c0_141, %c0_142, %c0_143] : memref<2x1x256xf32, #tpu.memory_space<vmem>>, vector<1x1x256xf32>
    %250 = vector.shape_cast %249 : vector<1x1x256xf32> to vector<1x256xf32>
    %251 = vector.broadcast %250 : vector<1x256xf32> to vector<16x256xf32>
    %252 = arith.addf %248, %251 : vector<16x256xf32>
    %253 = arith.mulf %252, %252 : vector<16x256xf32>
    %254 = arith.mulf %252, %253 : vector<16x256xf32>
    %cst_144 = arith.constant 4.471500e-02 : f32
    %255 = vector.broadcast %cst_144 : f32 to vector<16x256xf32>
    %256 = arith.mulf %255, %254 : vector<16x256xf32>
    %257 = arith.addf %252, %256 : vector<16x256xf32>
    %cst_145 = arith.constant 0.797884583 : f32
    %258 = vector.broadcast %cst_145 : f32 to vector<16x256xf32>
    %259 = arith.mulf %258, %257 : vector<16x256xf32>
    %260 = math.tanh %259 : vector<16x256xf32>
    %cst_146 = arith.constant 1.000000e+00 : f32
    %261 = vector.broadcast %cst_146 : f32 to vector<16x256xf32>
    %262 = arith.addf %261, %260 : vector<16x256xf32>
    %cst_147 = arith.constant 5.000000e-01 : f32
    %263 = vector.broadcast %cst_147 : f32 to vector<16x256xf32>
    %264 = arith.mulf %263, %262 : vector<16x256xf32>
    %265 = arith.mulf %252, %264 : vector<16x256xf32>
    %c0_148 = arith.constant 0 : index
    %c0_149 = arith.constant 0 : index
    %c0_150 = arith.constant 0 : index
    %266 = vector.load %arg10[%c0_148, %c0_149, %c0_150] : memref<2x256x128xf32, #tpu.memory_space<vmem>>, vector<1x256x128xf32>
    %267 = vector.shape_cast %266 : vector<1x256x128xf32> to vector<256x128xf32>
    %cst_151 = arith.constant dense<0.000000e+00> : vector<16x128xf32>
    %268 = tpu.matmul %265, %267, %cst_151 {dimension_numbers = #tpu.dot_dimension_numbers<[1], [0], [0], [1], [0, 0, 1, 1], [], []>} : vector<16x256xf32>, vector<256x128xf32>, vector<16x128xf32> -> vector<16x128xf32>
    %c0_152 = arith.constant 0 : index
    %c0_153 = arith.constant 0 : index
    %c0_154 = arith.constant 0 : index
    %269 = vector.load %arg11[%c0_152, %c0_153, %c0_154] : memref<2x1x128xf32, #tpu.memory_space<vmem>>, vector<1x1x128xf32>
    %270 = vector.shape_cast %269 : vector<1x1x128xf32> to vector<1x128xf32>
    %271 = vector.broadcast %270 : vector<1x128xf32> to vector<16x128xf32>
    %272 = arith.addf %268, %271 : vector<16x128xf32>
    %273 = arith.addf %272, %245 : vector<16x128xf32>
    %c0_155 = arith.constant 0 : index
    %c0_156 = arith.constant 0 : index
    %c0_157 = arith.constant 0 : index
    %274 = vector.load %arg14[%c0_155, %c0_156, %c0_157] : memref<2x1x128xf32, #tpu.memory_space<vmem>>, vector<1x1x128xf32>
    %275 = vector.shape_cast %274 : vector<1x1x128xf32> to vector<1x128xf32>
    %c0_158 = arith.constant 0 : index
    %c0_159 = arith.constant 0 : index
    %c0_160 = arith.constant 0 : index
    %276 = vector.load %arg15[%c0_158, %c0_159, %c0_160] : memref<2x1x128xf32, #tpu.memory_space<vmem>>, vector<1x1x128xf32>
    %277 = vector.shape_cast %276 : vector<1x1x128xf32> to vector<1x128xf32>
    %cst_161 = arith.constant dense<0.000000e+00> : vector<16xf32>
    %278 = vector.multi_reduction <add>, %273, %cst_161 [1] : vector<16x128xf32> to vector<16xf32>
    %279 = vector.shape_cast %278 : vector<16xf32> to vector<16x1xf32>
    %cst_162 = arith.constant 1.280000e+02 : f32
    %280 = vector.broadcast %cst_162 : f32 to vector<16x1xf32>
    %281 = arith.divf %279, %280 : vector<16x1xf32>
    %282 = vector.broadcast %281 : vector<16x1xf32> to vector<16x128xf32>
    %283 = arith.subf %273, %282 : vector<16x128xf32>
    %284 = arith.mulf %283, %283 : vector<16x128xf32>
    %cst_163 = arith.constant dense<0.000000e+00> : vector<16xf32>
    %285 = vector.multi_reduction <add>, %284, %cst_163 [1] : vector<16x128xf32> to vector<16xf32>
    %286 = vector.shape_cast %285 : vector<16xf32> to vector<16x1xf32>
    %cst_164 = arith.constant 1.280000e+02 : f32
    %287 = vector.broadcast %cst_164 : f32 to vector<16x1xf32>
    %288 = arith.divf %286, %287 : vector<16x1xf32>
    %289 = vector.broadcast %281 : vector<16x1xf32> to vector<16x128xf32>
    %290 = arith.subf %273, %289 : vector<16x128xf32>
    %cst_165 = arith.constant 9.99999996E-13 : f32
    %291 = vector.broadcast %cst_165 : f32 to vector<16x1xf32>
    %292 = arith.addf %288, %291 : vector<16x1xf32>
    %293 = math.rsqrt %292 : vector<16x1xf32>
    %294 = vector.broadcast %293 : vector<16x1xf32> to vector<16x128xf32>
    %295 = arith.mulf %290, %294 : vector<16x128xf32>
    %296 = vector.broadcast %275 : vector<1x128xf32> to vector<16x128xf32>
    %297 = arith.mulf %295, %296 : vector<16x128xf32>
    %298 = vector.broadcast %277 : vector<1x128xf32> to vector<16x128xf32>
    %299 = arith.addf %297, %298 : vector<16x128xf32>
    %c1_166 = arith.constant 1 : index
    %c0_167 = arith.constant 0 : index
    %c0_168 = arith.constant 0 : index
    %300 = vector.load %arg4[%c1_166, %c0_167, %c0_168] : memref<2x128x384xf32, #tpu.memory_space<vmem>>, vector<1x128x384xf32>
    %301 = vector.shape_cast %300 : vector<1x128x384xf32> to vector<128x384xf32>
    %cst_169 = arith.constant dense<0.000000e+00> : vector<16x384xf32>
    %302 = tpu.matmul %299, %301, %cst_169 {dimension_numbers = #tpu.dot_dimension_numbers<[1], [0], [0], [1], [0, 0, 1, 1], [], []>} : vector<16x128xf32>, vector<128x384xf32>, vector<16x384xf32> -> vector<16x384xf32>
    %c1_170 = arith.constant 1 : index
    %c0_171 = arith.constant 0 : index
    %c0_172 = arith.constant 0 : index
    %303 = vector.load %arg5[%c1_170, %c0_171, %c0_172] : memref<2x1x384xf32, #tpu.memory_space<vmem>>, vector<1x1x384xf32>
    %304 = vector.shape_cast %303 : vector<1x1x384xf32> to vector<1x384xf32>
    %305 = vector.broadcast %304 : vector<1x384xf32> to vector<16x384xf32>
    %306 = arith.addf %302, %305 : vector<16x384xf32>
    %c0_173 = arith.constant 0 : index
    %c0_174 = arith.constant 0 : index
    %307 = vector.load %arg19[%c0_173, %c0_174] : memref<16x384xf32, #tpu.memory_space<vmem>>, vector<16x384xf32>
    tpu.vector_store %arg19[%c0_173, %c0_174], %306 {strides = array<i32>} : memref<16x384xf32, #tpu.memory_space<vmem>>, vector<16x384xf32>,
    %c0_175 = arith.constant 0 : index
    %c0_176 = arith.constant 0 : index
    %308 = vector.load %arg19[%c0_175, %c0_176] : memref<16x384xf32, #tpu.memory_space<vmem>>, vector<8x32xf32>
    %c0_177 = arith.constant 0 : index
    %c128_178 = arith.constant 128 : index
    %309 = vector.load %arg19[%c0_177, %c128_178] : memref<16x384xf32, #tpu.memory_space<vmem>>, vector<8x32xf32>
    %c0_179 = arith.constant 0 : index
    %c256_180 = arith.constant 256 : index
    %310 = vector.load %arg19[%c0_179, %c256_180] : memref<16x384xf32, #tpu.memory_space<vmem>>, vector<8x32xf32>
    %311 = tpu.transpose %309, [1, 0] : vector<8x32xf32> -> vector<32x8xf32>
    %cst_181 = arith.constant dense<0.000000e+00> : vector<8x8xf32>
    %312 = tpu.matmul %308, %311, %cst_181 {dimension_numbers = #tpu.dot_dimension_numbers<[1], [0], [0], [1], [0, 0, 1, 1], [], []>} : vector<8x32xf32>, vector<32x8xf32>, vector<8x8xf32> -> vector<8x8xf32>
    %cst_182 = arith.constant 0.176776692 : f32
    %313 = vector.broadcast %cst_182 : f32 to vector<8x8xf32>
    %314 = arith.mulf %312, %313 : vector<8x8xf32>
    %315 = vector.broadcast %4 : vector<1x8xf32> to vector<8x8xf32>
    %316 = arith.addf %314, %315 : vector<8x8xf32>
    %cst_183 = arith.constant dense<0xFF800000> : vector<8xf32>
    %317 = vector.multi_reduction <maximumf>, %316, %cst_183 [1] : vector<8x8xf32> to vector<8xf32>
    %318 = vector.shape_cast %317 : vector<8xf32> to vector<8x1xf32>
    %319 = vector.broadcast %318 : vector<8x1xf32> to vector<8x8xf32>
    %320 = arith.subf %316, %319 : vector<8x8xf32>
    %321 = math.exp %320 : vector<8x8xf32>
    %cst_184 = arith.constant dense<0.000000e+00> : vector<8xf32>
    %322 = vector.multi_reduction <add>, %321, %cst_184 [1] : vector<8x8xf32> to vector<8xf32>
    %323 = vector.shape_cast %322 : vector<8xf32> to vector<8x1xf32>
    %324 = tpu.reciprocal %323 {approx = true} : vector<8x1xf32> -> vector<8x1xf32>
    %325 = vector.broadcast %324 : vector<8x1xf32> to vector<8x8xf32>
    %326 = arith.mulf %321, %325 : vector<8x8xf32>
    %cst_185 = arith.constant dense<0.000000e+00> : vector<8x32xf32>
    %327 = tpu.matmul %326, %310, %cst_185 {dimension_numbers = #tpu.dot_dimension_numbers<[1], [0], [0], [1], [0, 0, 1, 1], [], []>} : vector<8x8xf32>, vector<8x32xf32>, vector<8x32xf32> -> vector<8x32xf32>
    %c0_186 = arith.constant 0 : index
    %c0_187 = arith.constant 0 : index
    %328 = vector.load %arg20[%c0_186, %c0_187] : memref<16x128xf32, #tpu.memory_space<vmem>>, vector<8x32xf32>
    tpu.vector_store %arg20[%c0_186, %c0_187], %327 {strides = array<i32>} : memref<16x128xf32, #tpu.memory_space<vmem>>, vector<8x32xf32>,
    %c0_188 = arith.constant 0 : index
    %c32_189 = arith.constant 32 : index
    %329 = vector.load %arg19[%c0_188, %c32_189] : memref<16x384xf32, #tpu.memory_space<vmem>>, vector<8x32xf32>
    %c0_190 = arith.constant 0 : index
    %c160_191 = arith.constant 160 : index
    %330 = vector.load %arg19[%c0_190, %c160_191] : memref<16x384xf32, #tpu.memory_space<vmem>>, vector<8x32xf32>
    %c0_192 = arith.constant 0 : index
    %c288_193 = arith.constant 288 : index
    %331 = vector.load %arg19[%c0_192, %c288_193] : memref<16x384xf32, #tpu.memory_space<vmem>>, vector<8x32xf32>
    %332 = tpu.transpose %330, [1, 0] : vector<8x32xf32> -> vector<32x8xf32>
    %cst_194 = arith.constant dense<0.000000e+00> : vector<8x8xf32>
    %333 = tpu.matmul %329, %332, %cst_194 {dimension_numbers = #tpu.dot_dimension_numbers<[1], [0], [0], [1], [0, 0, 1, 1], [], []>} : vector<8x32xf32>, vector<32x8xf32>, vector<8x8xf32> -> vector<8x8xf32>
    %cst_195 = arith.constant 0.176776692 : f32
    %334 = vector.broadcast %cst_195 : f32 to vector<8x8xf32>
    %335 = arith.mulf %333, %334 : vector<8x8xf32>
    %336 = vector.broadcast %4 : vector<1x8xf32> to vector<8x8xf32>
    %337 = arith.addf %335, %336 : vector<8x8xf32>
    %cst_196 = arith.constant dense<0xFF800000> : vector<8xf32>
    %338 = vector.multi_reduction <maximumf>, %337, %cst_196 [1] : vector<8x8xf32> to vector<8xf32>
    %339 = vector.shape_cast %338 : vector<8xf32> to vector<8x1xf32>
    %340 = vector.broadcast %339 : vector<8x1xf32> to vector<8x8xf32>
    %341 = arith.subf %337, %340 : vector<8x8xf32>
    %342 = math.exp %341 : vector<8x8xf32>
    %cst_197 = arith.constant dense<0.000000e+00> : vector<8xf32>
    %343 = vector.multi_reduction <add>, %342, %cst_197 [1] : vector<8x8xf32> to vector<8xf32>
    %344 = vector.shape_cast %343 : vector<8xf32> to vector<8x1xf32>
    %345 = tpu.reciprocal %344 {approx = true} : vector<8x1xf32> -> vector<8x1xf32>
    %346 = vector.broadcast %345 : vector<8x1xf32> to vector<8x8xf32>
    %347 = arith.mulf %342, %346 : vector<8x8xf32>
    %cst_198 = arith.constant dense<0.000000e+00> : vector<8x32xf32>
    %348 = tpu.matmul %347, %331, %cst_198 {dimension_numbers = #tpu.dot_dimension_numbers<[1], [0], [0], [1], [0, 0, 1, 1], [], []>} : vector<8x8xf32>, vector<8x32xf32>, vector<8x32xf32> -> vector<8x32xf32>
    %c0_199 = arith.constant 0 : index
    %c32_200 = arith.constant 32 : index
    %349 = vector.load %arg20[%c0_199, %c32_200] : memref<16x128xf32, #tpu.memory_space<vmem>>, vector<8x32xf32>
    tpu.vector_store %arg20[%c0_199, %c32_200], %348 {strides = array<i32>} : memref<16x128xf32, #tpu.memory_space<vmem>>, vector<8x32xf32>,
    %c0_201 = arith.constant 0 : index
    %c64_202 = arith.constant 64 : index
    %350 = vector.load %arg19[%c0_201, %c64_202] : memref<16x384xf32, #tpu.memory_space<vmem>>, vector<8x32xf32>
    %c0_203 = arith.constant 0 : index
    %c192_204 = arith.constant 192 : index
    %351 = vector.load %arg19[%c0_203, %c192_204] : memref<16x384xf32, #tpu.memory_space<vmem>>, vector<8x32xf32>
    %c0_205 = arith.constant 0 : index
    %c320_206 = arith.constant 320 : index
    %352 = vector.load %arg19[%c0_205, %c320_206] : memref<16x384xf32, #tpu.memory_space<vmem>>, vector<8x32xf32>
    %353 = tpu.transpose %351, [1, 0] : vector<8x32xf32> -> vector<32x8xf32>
    %cst_207 = arith.constant dense<0.000000e+00> : vector<8x8xf32>
    %354 = tpu.matmul %350, %353, %cst_207 {dimension_numbers = #tpu.dot_dimension_numbers<[1], [0], [0], [1], [0, 0, 1, 1], [], []>} : vector<8x32xf32>, vector<32x8xf32>, vector<8x8xf32> -> vector<8x8xf32>
    %cst_208 = arith.constant 0.176776692 : f32
    %355 = vector.broadcast %cst_208 : f32 to vector<8x8xf32>
    %356 = arith.mulf %354, %355 : vector<8x8xf32>
    %357 = vector.broadcast %4 : vector<1x8xf32> to vector<8x8xf32>
    %358 = arith.addf %356, %357 : vector<8x8xf32>
    %cst_209 = arith.constant dense<0xFF800000> : vector<8xf32>
    %359 = vector.multi_reduction <maximumf>, %358, %cst_209 [1] : vector<8x8xf32> to vector<8xf32>
    %360 = vector.shape_cast %359 : vector<8xf32> to vector<8x1xf32>
    %361 = vector.broadcast %360 : vector<8x1xf32> to vector<8x8xf32>
    %362 = arith.subf %358, %361 : vector<8x8xf32>
    %363 = math.exp %362 : vector<8x8xf32>
    %cst_210 = arith.constant dense<0.000000e+00> : vector<8xf32>
    %364 = vector.multi_reduction <add>, %363, %cst_210 [1] : vector<8x8xf32> to vector<8xf32>
    %365 = vector.shape_cast %364 : vector<8xf32> to vector<8x1xf32>
    %366 = tpu.reciprocal %365 {approx = true} : vector<8x1xf32> -> vector<8x1xf32>
    %367 = vector.broadcast %366 : vector<8x1xf32> to vector<8x8xf32>
    %368 = arith.mulf %363, %367 : vector<8x8xf32>
    %cst_211 = arith.constant dense<0.000000e+00> : vector<8x32xf32>
    %369 = tpu.matmul %368, %352, %cst_211 {dimension_numbers = #tpu.dot_dimension_numbers<[1], [0], [0], [1], [0, 0, 1, 1], [], []>} : vector<8x8xf32>, vector<8x32xf32>, vector<8x32xf32> -> vector<8x32xf32>
    %c0_212 = arith.constant 0 : index
    %c64_213 = arith.constant 64 : index
    %370 = vector.load %arg20[%c0_212, %c64_213] : memref<16x128xf32, #tpu.memory_space<vmem>>, vector<8x32xf32>
    tpu.vector_store %arg20[%c0_212, %c64_213], %369 {strides = array<i32>} : memref<16x128xf32, #tpu.memory_space<vmem>>, vector<8x32xf32>,
    %c0_214 = arith.constant 0 : index
    %c96_215 = arith.constant 96 : index
    %371 = vector.load %arg19[%c0_214, %c96_215] : memref<16x384xf32, #tpu.memory_space<vmem>>, vector<8x32xf32>
    %c0_216 = arith.constant 0 : index
    %c224_217 = arith.constant 224 : index
    %372 = vector.load %arg19[%c0_216, %c224_217] : memref<16x384xf32, #tpu.memory_space<vmem>>, vector<8x32xf32>
    %c0_218 = arith.constant 0 : index
    %c352_219 = arith.constant 352 : index
    %373 = vector.load %arg19[%c0_218, %c352_219] : memref<16x384xf32, #tpu.memory_space<vmem>>, vector<8x32xf32>
    %374 = tpu.transpose %372, [1, 0] : vector<8x32xf32> -> vector<32x8xf32>
    %cst_220 = arith.constant dense<0.000000e+00> : vector<8x8xf32>
    %375 = tpu.matmul %371, %374, %cst_220 {dimension_numbers = #tpu.dot_dimension_numbers<[1], [0], [0], [1], [0, 0, 1, 1], [], []>} : vector<8x32xf32>, vector<32x8xf32>, vector<8x8xf32> -> vector<8x8xf32>
    %cst_221 = arith.constant 0.176776692 : f32
    %376 = vector.broadcast %cst_221 : f32 to vector<8x8xf32>
    %377 = arith.mulf %375, %376 : vector<8x8xf32>
    %378 = vector.broadcast %4 : vector<1x8xf32> to vector<8x8xf32>
    %379 = arith.addf %377, %378 : vector<8x8xf32>
    %cst_222 = arith.constant dense<0xFF800000> : vector<8xf32>
    %380 = vector.multi_reduction <maximumf>, %379, %cst_222 [1] : vector<8x8xf32> to vector<8xf32>
    %381 = vector.shape_cast %380 : vector<8xf32> to vector<8x1xf32>
    %382 = vector.broadcast %381 : vector<8x1xf32> to vector<8x8xf32>
    %383 = arith.subf %379, %382 : vector<8x8xf32>
    %384 = math.exp %383 : vector<8x8xf32>
    %cst_223 = arith.constant dense<0.000000e+00> : vector<8xf32>
    %385 = vector.multi_reduction <add>, %384, %cst_223 [1] : vector<8x8xf32> to vector<8xf32>
    %386 = vector.shape_cast %385 : vector<8xf32> to vector<8x1xf32>
    %387 = tpu.reciprocal %386 {approx = true} : vector<8x1xf32> -> vector<8x1xf32>
    %388 = vector.broadcast %387 : vector<8x1xf32> to vector<8x8xf32>
    %389 = arith.mulf %384, %388 : vector<8x8xf32>
    %cst_224 = arith.constant dense<0.000000e+00> : vector<8x32xf32>
    %390 = tpu.matmul %389, %373, %cst_224 {dimension_numbers = #tpu.dot_dimension_numbers<[1], [0], [0], [1], [0, 0, 1, 1], [], []>} : vector<8x8xf32>, vector<8x32xf32>, vector<8x32xf32> -> vector<8x32xf32>
    %c0_225 = arith.constant 0 : index
    %c96_226 = arith.constant 96 : index
    %391 = vector.load %arg20[%c0_225, %c96_226] : memref<16x128xf32, #tpu.memory_space<vmem>>, vector<8x32xf32>
    tpu.vector_store %arg20[%c0_225, %c96_226], %390 {strides = array<i32>} : memref<16x128xf32, #tpu.memory_space<vmem>>, vector<8x32xf32>,
    %c8_227 = arith.constant 8 : index
    %c0_228 = arith.constant 0 : index
    %392 = vector.load %arg19[%c8_227, %c0_228] : memref<16x384xf32, #tpu.memory_space<vmem>>, vector<8x32xf32>
    %c8_229 = arith.constant 8 : index
    %c128_230 = arith.constant 128 : index
    %393 = vector.load %arg19[%c8_229, %c128_230] : memref<16x384xf32, #tpu.memory_space<vmem>>, vector<8x32xf32>
    %c8_231 = arith.constant 8 : index
    %c256_232 = arith.constant 256 : index
    %394 = vector.load %arg19[%c8_231, %c256_232] : memref<16x384xf32, #tpu.memory_space<vmem>>, vector<8x32xf32>
    %395 = tpu.transpose %393, [1, 0] : vector<8x32xf32> -> vector<32x8xf32>
    %cst_233 = arith.constant dense<0.000000e+00> : vector<8x8xf32>
    %396 = tpu.matmul %392, %395, %cst_233 {dimension_numbers = #tpu.dot_dimension_numbers<[1], [0], [0], [1], [0, 0, 1, 1], [], []>} : vector<8x32xf32>, vector<32x8xf32>, vector<8x8xf32> -> vector<8x8xf32>
    %cst_234 = arith.constant 0.176776692 : f32
    %397 = vector.broadcast %cst_234 : f32 to vector<8x8xf32>
    %398 = arith.mulf %396, %397 : vector<8x8xf32>
    %399 = vector.broadcast %9 : vector<1x8xf32> to vector<8x8xf32>
    %400 = arith.addf %398, %399 : vector<8x8xf32>
    %cst_235 = arith.constant dense<0xFF800000> : vector<8xf32>
    %401 = vector.multi_reduction <maximumf>, %400, %cst_235 [1] : vector<8x8xf32> to vector<8xf32>
    %402 = vector.shape_cast %401 : vector<8xf32> to vector<8x1xf32>
    %403 = vector.broadcast %402 : vector<8x1xf32> to vector<8x8xf32>
    %404 = arith.subf %400, %403 : vector<8x8xf32>
    %405 = math.exp %404 : vector<8x8xf32>
    %cst_236 = arith.constant dense<0.000000e+00> : vector<8xf32>
    %406 = vector.multi_reduction <add>, %405, %cst_236 [1] : vector<8x8xf32> to vector<8xf32>
    %407 = vector.shape_cast %406 : vector<8xf32> to vector<8x1xf32>
    %408 = tpu.reciprocal %407 {approx = true} : vector<8x1xf32> -> vector<8x1xf32>
    %409 = vector.broadcast %408 : vector<8x1xf32> to vector<8x8xf32>
    %410 = arith.mulf %405, %409 : vector<8x8xf32>
    %cst_237 = arith.constant dense<0.000000e+00> : vector<8x32xf32>
    %411 = tpu.matmul %410, %394, %cst_237 {dimension_numbers = #tpu.dot_dimension_numbers<[1], [0], [0], [1], [0, 0, 1, 1], [], []>} : vector<8x8xf32>, vector<8x32xf32>, vector<8x32xf32> -> vector<8x32xf32>
    %c8_238 = arith.constant 8 : index
    %c0_239 = arith.constant 0 : index
    %412 = vector.load %arg20[%c8_238, %c0_239] : memref<16x128xf32, #tpu.memory_space<vmem>>, vector<8x32xf32>
    tpu.vector_store %arg20[%c8_238, %c0_239], %411 {strides = array<i32>} : memref<16x128xf32, #tpu.memory_space<vmem>>, vector<8x32xf32>,
    %c8_240 = arith.constant 8 : index
    %c32_241 = arith.constant 32 : index
    %413 = vector.load %arg19[%c8_240, %c32_241] : memref<16x384xf32, #tpu.memory_space<vmem>>, vector<8x32xf32>
    %c8_242 = arith.constant 8 : index
    %c160_243 = arith.constant 160 : index
    %414 = vector.load %arg19[%c8_242, %c160_243] : memref<16x384xf32, #tpu.memory_space<vmem>>, vector<8x32xf32>
    %c8_244 = arith.constant 8 : index
    %c288_245 = arith.constant 288 : index
    %415 = vector.load %arg19[%c8_244, %c288_245] : memref<16x384xf32, #tpu.memory_space<vmem>>, vector<8x32xf32>
    %416 = tpu.transpose %414, [1, 0] : vector<8x32xf32> -> vector<32x8xf32>
    %cst_246 = arith.constant dense<0.000000e+00> : vector<8x8xf32>
    %417 = tpu.matmul %413, %416, %cst_246 {dimension_numbers = #tpu.dot_dimension_numbers<[1], [0], [0], [1], [0, 0, 1, 1], [], []>} : vector<8x32xf32>, vector<32x8xf32>, vector<8x8xf32> -> vector<8x8xf32>
    %cst_247 = arith.constant 0.176776692 : f32
    %418 = vector.broadcast %cst_247 : f32 to vector<8x8xf32>
    %419 = arith.mulf %417, %418 : vector<8x8xf32>
    %420 = vector.broadcast %9 : vector<1x8xf32> to vector<8x8xf32>
    %421 = arith.addf %419, %420 : vector<8x8xf32>
    %cst_248 = arith.constant dense<0xFF800000> : vector<8xf32>
    %422 = vector.multi_reduction <maximumf>, %421, %cst_248 [1] : vector<8x8xf32> to vector<8xf32>
    %423 = vector.shape_cast %422 : vector<8xf32> to vector<8x1xf32>
    %424 = vector.broadcast %423 : vector<8x1xf32> to vector<8x8xf32>
    %425 = arith.subf %421, %424 : vector<8x8xf32>
    %426 = math.exp %425 : vector<8x8xf32>
    %cst_249 = arith.constant dense<0.000000e+00> : vector<8xf32>
    %427 = vector.multi_reduction <add>, %426, %cst_249 [1] : vector<8x8xf32> to vector<8xf32>
    %428 = vector.shape_cast %427 : vector<8xf32> to vector<8x1xf32>
    %429 = tpu.reciprocal %428 {approx = true} : vector<8x1xf32> -> vector<8x1xf32>
    %430 = vector.broadcast %429 : vector<8x1xf32> to vector<8x8xf32>
    %431 = arith.mulf %426, %430 : vector<8x8xf32>
    %cst_250 = arith.constant dense<0.000000e+00> : vector<8x32xf32>
    %432 = tpu.matmul %431, %415, %cst_250 {dimension_numbers = #tpu.dot_dimension_numbers<[1], [0], [0], [1], [0, 0, 1, 1], [], []>} : vector<8x8xf32>, vector<8x32xf32>, vector<8x32xf32> -> vector<8x32xf32>
    %c8_251 = arith.constant 8 : index
    %c32_252 = arith.constant 32 : index
    %433 = vector.load %arg20[%c8_251, %c32_252] : memref<16x128xf32, #tpu.memory_space<vmem>>, vector<8x32xf32>
    tpu.vector_store %arg20[%c8_251, %c32_252], %432 {strides = array<i32>} : memref<16x128xf32, #tpu.memory_space<vmem>>, vector<8x32xf32>,
    %c8_253 = arith.constant 8 : index
    %c64_254 = arith.constant 64 : index
    %434 = vector.load %arg19[%c8_253, %c64_254] : memref<16x384xf32, #tpu.memory_space<vmem>>, vector<8x32xf32>
    %c8_255 = arith.constant 8 : index
    %c192_256 = arith.constant 192 : index
    %435 = vector.load %arg19[%c8_255, %c192_256] : memref<16x384xf32, #tpu.memory_space<vmem>>, vector<8x32xf32>
    %c8_257 = arith.constant 8 : index
    %c320_258 = arith.constant 320 : index
    %436 = vector.load %arg19[%c8_257, %c320_258] : memref<16x384xf32, #tpu.memory_space<vmem>>, vector<8x32xf32>
    %437 = tpu.transpose %435, [1, 0] : vector<8x32xf32> -> vector<32x8xf32>
    %cst_259 = arith.constant dense<0.000000e+00> : vector<8x8xf32>
    %438 = tpu.matmul %434, %437, %cst_259 {dimension_numbers = #tpu.dot_dimension_numbers<[1], [0], [0], [1], [0, 0, 1, 1], [], []>} : vector<8x32xf32>, vector<32x8xf32>, vector<8x8xf32> -> vector<8x8xf32>
    %cst_260 = arith.constant 0.176776692 : f32
    %439 = vector.broadcast %cst_260 : f32 to vector<8x8xf32>
    %440 = arith.mulf %438, %439 : vector<8x8xf32>
    %441 = vector.broadcast %9 : vector<1x8xf32> to vector<8x8xf32>
    %442 = arith.addf %440, %441 : vector<8x8xf32>
    %cst_261 = arith.constant dense<0xFF800000> : vector<8xf32>
    %443 = vector.multi_reduction <maximumf>, %442, %cst_261 [1] : vector<8x8xf32> to vector<8xf32>
    %444 = vector.shape_cast %443 : vector<8xf32> to vector<8x1xf32>
    %445 = vector.broadcast %444 : vector<8x1xf32> to vector<8x8xf32>
    %446 = arith.subf %442, %445 : vector<8x8xf32>
    %447 = math.exp %446 : vector<8x8xf32>
    %cst_262 = arith.constant dense<0.000000e+00> : vector<8xf32>
    %448 = vector.multi_reduction <add>, %447, %cst_262 [1] : vector<8x8xf32> to vector<8xf32>
    %449 = vector.shape_cast %448 : vector<8xf32> to vector<8x1xf32>
    %450 = tpu.reciprocal %449 {approx = true} : vector<8x1xf32> -> vector<8x1xf32>
    %451 = vector.broadcast %450 : vector<8x1xf32> to vector<8x8xf32>
    %452 = arith.mulf %447, %451 : vector<8x8xf32>
    %cst_263 = arith.constant dense<0.000000e+00> : vector<8x32xf32>
    %453 = tpu.matmul %452, %436, %cst_263 {dimension_numbers = #tpu.dot_dimension_numbers<[1], [0], [0], [1], [0, 0, 1, 1], [], []>} : vector<8x8xf32>, vector<8x32xf32>, vector<8x32xf32> -> vector<8x32xf32>
    %c8_264 = arith.constant 8 : index
    %c64_265 = arith.constant 64 : index
    %454 = vector.load %arg20[%c8_264, %c64_265] : memref<16x128xf32, #tpu.memory_space<vmem>>, vector<8x32xf32>
    tpu.vector_store %arg20[%c8_264, %c64_265], %453 {strides = array<i32>} : memref<16x128xf32, #tpu.memory_space<vmem>>, vector<8x32xf32>,
    %c8_266 = arith.constant 8 : index
    %c96_267 = arith.constant 96 : index
    %455 = vector.load %arg19[%c8_266, %c96_267] : memref<16x384xf32, #tpu.memory_space<vmem>>, vector<8x32xf32>
    %c8_268 = arith.constant 8 : index
    %c224_269 = arith.constant 224 : index
    %456 = vector.load %arg19[%c8_268, %c224_269] : memref<16x384xf32, #tpu.memory_space<vmem>>, vector<8x32xf32>
    %c8_270 = arith.constant 8 : index
    %c352_271 = arith.constant 352 : index
    %457 = vector.load %arg19[%c8_270, %c352_271] : memref<16x384xf32, #tpu.memory_space<vmem>>, vector<8x32xf32>
    %458 = tpu.transpose %456, [1, 0] : vector<8x32xf32> -> vector<32x8xf32>
    %cst_272 = arith.constant dense<0.000000e+00> : vector<8x8xf32>
    %459 = tpu.matmul %455, %458, %cst_272 {dimension_numbers = #tpu.dot_dimension_numbers<[1], [0], [0], [1], [0, 0, 1, 1], [], []>} : vector<8x32xf32>, vector<32x8xf32>, vector<8x8xf32> -> vector<8x8xf32>
    %cst_273 = arith.constant 0.176776692 : f32
    %460 = vector.broadcast %cst_273 : f32 to vector<8x8xf32>
    %461 = arith.mulf %459, %460 : vector<8x8xf32>
    %462 = vector.broadcast %9 : vector<1x8xf32> to vector<8x8xf32>
    %463 = arith.addf %461, %462 : vector<8x8xf32>
    %cst_274 = arith.constant dense<0xFF800000> : vector<8xf32>
    %464 = vector.multi_reduction <maximumf>, %463, %cst_274 [1] : vector<8x8xf32> to vector<8xf32>
    %465 = vector.shape_cast %464 : vector<8xf32> to vector<8x1xf32>
    %466 = vector.broadcast %465 : vector<8x1xf32> to vector<8x8xf32>
    %467 = arith.subf %463, %466 : vector<8x8xf32>
    %468 = math.exp %467 : vector<8x8xf32>
    %cst_275 = arith.constant dense<0.000000e+00> : vector<8xf32>
    %469 = vector.multi_reduction <add>, %468, %cst_275 [1] : vector<8x8xf32> to vector<8xf32>
    %470 = vector.shape_cast %469 : vector<8xf32> to vector<8x1xf32>
    %471 = tpu.reciprocal %470 {approx = true} : vector<8x1xf32> -> vector<8x1xf32>
    %472 = vector.broadcast %471 : vector<8x1xf32> to vector<8x8xf32>
    %473 = arith.mulf %468, %472 : vector<8x8xf32>
    %cst_276 = arith.constant dense<0.000000e+00> : vector<8x32xf32>
    %474 = tpu.matmul %473, %457, %cst_276 {dimension_numbers = #tpu.dot_dimension_numbers<[1], [0], [0], [1], [0, 0, 1, 1], [], []>} : vector<8x8xf32>, vector<8x32xf32>, vector<8x32xf32> -> vector<8x32xf32>
    %c8_277 = arith.constant 8 : index
    %c96_278 = arith.constant 96 : index
    %475 = vector.load %arg20[%c8_277, %c96_278] : memref<16x128xf32, #tpu.memory_space<vmem>>, vector<8x32xf32>
    tpu.vector_store %arg20[%c8_277, %c96_278], %474 {strides = array<i32>} : memref<16x128xf32, #tpu.memory_space<vmem>>, vector<8x32xf32>,
    %c0_279 = arith.constant 0 : index
    %c0_280 = arith.constant 0 : index
    %476 = vector.load %arg20[%c0_279, %c0_280] : memref<16x128xf32, #tpu.memory_space<vmem>>, vector<16x128xf32>
    %c1_281 = arith.constant 1 : index
    %c0_282 = arith.constant 0 : index
    %c0_283 = arith.constant 0 : index
    %477 = vector.load %arg6[%c1_281, %c0_282, %c0_283] : memref<2x128x128xf32, #tpu.memory_space<vmem>>, vector<1x128x128xf32>
    %478 = vector.shape_cast %477 : vector<1x128x128xf32> to vector<128x128xf32>
    %cst_284 = arith.constant dense<0.000000e+00> : vector<16x128xf32>
    %479 = tpu.matmul %476, %478, %cst_284 {dimension_numbers = #tpu.dot_dimension_numbers<[1], [0], [0], [1], [0, 0, 1, 1], [], []>} : vector<16x128xf32>, vector<128x128xf32>, vector<16x128xf32> -> vector<16x128xf32>
    %c1_285 = arith.constant 1 : index
    %c0_286 = arith.constant 0 : index
    %c0_287 = arith.constant 0 : index
    %480 = vector.load %arg7[%c1_285, %c0_286, %c0_287] : memref<2x1x128xf32, #tpu.memory_space<vmem>>, vector<1x1x128xf32>
    %481 = vector.shape_cast %480 : vector<1x1x128xf32> to vector<1x128xf32>
    %482 = vector.broadcast %481 : vector<1x128xf32> to vector<16x128xf32>
    %483 = arith.addf %479, %482 : vector<16x128xf32>
    %484 = arith.addf %483, %299 : vector<16x128xf32>
    %c1_288 = arith.constant 1 : index
    %c0_289 = arith.constant 0 : index
    %c0_290 = arith.constant 0 : index
    %485 = vector.load %arg12[%c1_288, %c0_289, %c0_290] : memref<2x1x128xf32, #tpu.memory_space<vmem>>, vector<1x1x128xf32>
    %486 = vector.shape_cast %485 : vector<1x1x128xf32> to vector<1x128xf32>
    %c1_291 = arith.constant 1 : index
    %c0_292 = arith.constant 0 : index
    %c0_293 = arith.constant 0 : index
    %487 = vector.load %arg13[%c1_291, %c0_292, %c0_293] : memref<2x1x128xf32, #tpu.memory_space<vmem>>, vector<1x1x128xf32>
    %488 = vector.shape_cast %487 : vector<1x1x128xf32> to vector<1x128xf32>
    %cst_294 = arith.constant dense<0.000000e+00> : vector<16xf32>
    %489 = vector.multi_reduction <add>, %484, %cst_294 [1] : vector<16x128xf32> to vector<16xf32>
    %490 = vector.shape_cast %489 : vector<16xf32> to vector<16x1xf32>
    %cst_295 = arith.constant 1.280000e+02 : f32
    %491 = vector.broadcast %cst_295 : f32 to vector<16x1xf32>
    %492 = arith.divf %490, %491 : vector<16x1xf32>
    %493 = vector.broadcast %492 : vector<16x1xf32> to vector<16x128xf32>
    %494 = arith.subf %484, %493 : vector<16x128xf32>
    %495 = arith.mulf %494, %494 : vector<16x128xf32>
    %cst_296 = arith.constant dense<0.000000e+00> : vector<16xf32>
    %496 = vector.multi_reduction <add>, %495, %cst_296 [1] : vector<16x128xf32> to vector<16xf32>
    %497 = vector.shape_cast %496 : vector<16xf32> to vector<16x1xf32>
    %cst_297 = arith.constant 1.280000e+02 : f32
    %498 = vector.broadcast %cst_297 : f32 to vector<16x1xf32>
    %499 = arith.divf %497, %498 : vector<16x1xf32>
    %500 = vector.broadcast %492 : vector<16x1xf32> to vector<16x128xf32>
    %501 = arith.subf %484, %500 : vector<16x128xf32>
    %cst_298 = arith.constant 9.99999996E-13 : f32
    %502 = vector.broadcast %cst_298 : f32 to vector<16x1xf32>
    %503 = arith.addf %499, %502 : vector<16x1xf32>
    %504 = math.rsqrt %503 : vector<16x1xf32>
    %505 = vector.broadcast %504 : vector<16x1xf32> to vector<16x128xf32>
    %506 = arith.mulf %501, %505 : vector<16x128xf32>
    %507 = vector.broadcast %486 : vector<1x128xf32> to vector<16x128xf32>
    %508 = arith.mulf %506, %507 : vector<16x128xf32>
    %509 = vector.broadcast %488 : vector<1x128xf32> to vector<16x128xf32>
    %510 = arith.addf %508, %509 : vector<16x128xf32>
    %c1_299 = arith.constant 1 : index
    %c0_300 = arith.constant 0 : index
    %c0_301 = arith.constant 0 : index
    %511 = vector.load %arg8[%c1_299, %c0_300, %c0_301] : memref<2x128x256xf32, #tpu.memory_space<vmem>>, vector<1x128x256xf32>
    %512 = vector.shape_cast %511 : vector<1x128x256xf32> to vector<128x256xf32>
    %cst_302 = arith.constant dense<0.000000e+00> : vector<16x256xf32>
    %513 = tpu.matmul %510, %512, %cst_302 {dimension_numbers = #tpu.dot_dimension_numbers<[1], [0], [0], [1], [0, 0, 1, 1], [], []>} : vector<16x128xf32>, vector<128x256xf32>, vector<16x256xf32> -> vector<16x256xf32>
    %c1_303 = arith.constant 1 : index
    %c0_304 = arith.constant 0 : index
    %c0_305 = arith.constant 0 : index
    %514 = vector.load %arg9[%c1_303, %c0_304, %c0_305] : memref<2x1x256xf32, #tpu.memory_space<vmem>>, vector<1x1x256xf32>
    %515 = vector.shape_cast %514 : vector<1x1x256xf32> to vector<1x256xf32>
    %516 = vector.broadcast %515 : vector<1x256xf32> to vector<16x256xf32>
    %517 = arith.addf %513, %516 : vector<16x256xf32>
    %518 = arith.mulf %517, %517 : vector<16x256xf32>
    %519 = arith.mulf %517, %518 : vector<16x256xf32>
    %cst_306 = arith.constant 4.471500e-02 : f32
    %520 = vector.broadcast %cst_306 : f32 to vector<16x256xf32>
    %521 = arith.mulf %520, %519 : vector<16x256xf32>
    %522 = arith.addf %517, %521 : vector<16x256xf32>
    %cst_307 = arith.constant 0.797884583 : f32
    %523 = vector.broadcast %cst_307 : f32 to vector<16x256xf32>
    %524 = arith.mulf %523, %522 : vector<16x256xf32>
    %525 = math.tanh %524 : vector<16x256xf32>
    %cst_308 = arith.constant 1.000000e+00 : f32
    %526 = vector.broadcast %cst_308 : f32 to vector<16x256xf32>
    %527 = arith.addf %526, %525 : vector<16x256xf32>
    %cst_309 = arith.constant 5.000000e-01 : f32
    %528 = vector.broadcast %cst_309 : f32 to vector<16x256xf32>
    %529 = arith.mulf %528, %527 : vector<16x256xf32>
    %530 = arith.mulf %517, %529 : vector<16x256xf32>
    %c1_310 = arith.constant 1 : index
    %c0_311 = arith.constant 0 : index
    %c0_312 = arith.constant 0 : index
    %531 = vector.load %arg10[%c1_310, %c0_311, %c0_312] : memref<2x256x128xf32, #tpu.memory_space<vmem>>, vector<1x256x128xf32>
    %532 = vector.shape_cast %531 : vector<1x256x128xf32> to vector<256x128xf32>
    %cst_313 = arith.constant dense<0.000000e+00> : vector<16x128xf32>
    %533 = tpu.matmul %530, %532, %cst_313 {dimension_numbers = #tpu.dot_dimension_numbers<[1], [0], [0], [1], [0, 0, 1, 1], [], []>} : vector<16x256xf32>, vector<256x128xf32>, vector<16x128xf32> -> vector<16x128xf32>
    %c1_314 = arith.constant 1 : index
    %c0_315 = arith.constant 0 : index
    %c0_316 = arith.constant 0 : index
    %534 = vector.load %arg11[%c1_314, %c0_315, %c0_316] : memref<2x1x128xf32, #tpu.memory_space<vmem>>, vector<1x1x128xf32>
    %535 = vector.shape_cast %534 : vector<1x1x128xf32> to vector<1x128xf32>
    %536 = vector.broadcast %535 : vector<1x128xf32> to vector<16x128xf32>
    %537 = arith.addf %533, %536 : vector<16x128xf32>
    %538 = arith.addf %537, %510 : vector<16x128xf32>
    %c1_317 = arith.constant 1 : index
    %c0_318 = arith.constant 0 : index
    %c0_319 = arith.constant 0 : index
    %539 = vector.load %arg14[%c1_317, %c0_318, %c0_319] : memref<2x1x128xf32, #tpu.memory_space<vmem>>, vector<1x1x128xf32>
    %540 = vector.shape_cast %539 : vector<1x1x128xf32> to vector<1x128xf32>
    %c1_320 = arith.constant 1 : index
    %c0_321 = arith.constant 0 : index
    %c0_322 = arith.constant 0 : index
    %541 = vector.load %arg15[%c1_320, %c0_321, %c0_322] : memref<2x1x128xf32, #tpu.memory_space<vmem>>, vector<1x1x128xf32>
    %542 = vector.shape_cast %541 : vector<1x1x128xf32> to vector<1x128xf32>
    %cst_323 = arith.constant dense<0.000000e+00> : vector<16xf32>
    %543 = vector.multi_reduction <add>, %538, %cst_323 [1] : vector<16x128xf32> to vector<16xf32>
    %544 = vector.shape_cast %543 : vector<16xf32> to vector<16x1xf32>
    %cst_324 = arith.constant 1.280000e+02 : f32
    %545 = vector.broadcast %cst_324 : f32 to vector<16x1xf32>
    %546 = arith.divf %544, %545 : vector<16x1xf32>
    %547 = vector.broadcast %546 : vector<16x1xf32> to vector<16x128xf32>
    %548 = arith.subf %538, %547 : vector<16x128xf32>
    %549 = arith.mulf %548, %548 : vector<16x128xf32>
    %cst_325 = arith.constant dense<0.000000e+00> : vector<16xf32>
    %550 = vector.multi_reduction <add>, %549, %cst_325 [1] : vector<16x128xf32> to vector<16xf32>
    %551 = vector.shape_cast %550 : vector<16xf32> to vector<16x1xf32>
    %cst_326 = arith.constant 1.280000e+02 : f32
    %552 = vector.broadcast %cst_326 : f32 to vector<16x1xf32>
    %553 = arith.divf %551, %552 : vector<16x1xf32>
    %554 = vector.broadcast %546 : vector<16x1xf32> to vector<16x128xf32>
    %555 = arith.subf %538, %554 : vector<16x128xf32>
    %cst_327 = arith.constant 9.99999996E-13 : f32
    %556 = vector.broadcast %cst_327 : f32 to vector<16x1xf32>
    %557 = arith.addf %553, %556 : vector<16x1xf32>
    %558 = math.rsqrt %557 : vector<16x1xf32>
    %559 = vector.broadcast %558 : vector<16x1xf32> to vector<16x128xf32>
    %560 = arith.mulf %555, %559 : vector<16x128xf32>
    %561 = vector.broadcast %540 : vector<1x128xf32> to vector<16x128xf32>
    %562 = arith.mulf %560, %561 : vector<16x128xf32>
    %563 = vector.broadcast %542 : vector<1x128xf32> to vector<16x128xf32>
    %564 = arith.addf %562, %563 : vector<16x128xf32>
    %c0_328 = arith.constant 0 : index
    %c0_329 = arith.constant 0 : index
    %565 = vector.load %arg16[%c0_328, %c0_329] : memref<16x128xf32, #tpu.memory_space<vmem>>, vector<16x128xf32>
    tpu.vector_store %arg16[%c0_328, %c0_329], %564 {strides = array<i32>} : memref<16x128xf32, #tpu.memory_space<vmem>>, vector<16x128xf32>,
    %566 = vector.extract_strided_slice %564 {offsets = [0, 0], sizes = [1, 128], strides = [1, 1]} : vector<16x128xf32> to vector<1x128xf32>
    %c0_330 = arith.constant 0 : index
    %c0_331 = arith.constant 0 : index
    %567 = vector.load %arg17[%c0_330, %c0_331] : memref<2x128xf32, #tpu.memory_space<vmem>>, vector<1x128xf32>
    tpu.vector_store %arg17[%c0_330, %c0_331], %566 {strides = array<i32>} : memref<2x128xf32, #tpu.memory_space<vmem>>, vector<1x128xf32>,
    %c0_332 = arith.constant 0 : index
    %c0_333 = arith.constant 0 : index
    %568 = vector.load %arg1[%c0_332, %c0_333] : memref<2x8xf32, #tpu.memory_space<vmem>>, vector<1x8xf32>
    %569 = vector.extract_strided_slice %564 {offsets = [0, 0], sizes = [8, 128], strides = [1, 1]} : vector<16x128xf32> to vector<8x128xf32>
    %cst_334 = arith.constant dense<0.000000e+00> : vector<1x128xf32>
    %570 = tpu.matmul %568, %569, %cst_334 {dimension_numbers = #tpu.dot_dimension_numbers<[1], [0], [0], [1], [0, 0, 1, 1], [], []>} : vector<1x8xf32>, vector<8x128xf32>, vector<1x128xf32> -> vector<1x128xf32>
    %571 = vector.shape_cast %568 : vector<1x8xf32> to vector<1x1x8xf32>
    %cst_335 = arith.constant dense<0.000000e+00> : vector<1xf32>
    %572 = vector.multi_reduction <add>, %571, %cst_335 [1, 2] : vector<1x1x8xf32> to vector<1xf32>
    %573 = vector.shape_cast %572 : vector<1xf32> to vector<1x1x1xf32>
    %574 = vector.extract %573[0, 0, 0] : f32 from vector<1x1x1xf32>
    %575 = vector.broadcast %574 : f32 to vector<1x128xf32>
    %576 = arith.divf %570, %575 : vector<1x128xf32>
    %c0_336 = arith.constant 0 : index
    %c0_337 = arith.constant 0 : index
    %577 = vector.load %arg18[%c0_336, %c0_337] : memref<2x128xf32, #tpu.memory_space<vmem>>, vector<1x128xf32>
    tpu.vector_store %arg18[%c0_336, %c0_337], %576 {strides = array<i32>} : memref<2x128xf32, #tpu.memory_space<vmem>>, vector<1x128xf32>,
    %578 = vector.extract_strided_slice %564 {offsets = [8, 0], sizes = [1, 128], strides = [1, 1]} : vector<16x128xf32> to vector<1x128xf32>
    %c1_338 = arith.constant 1 : index
    %c0_339 = arith.constant 0 : index
    %579 = vector.load %arg17[%c1_338, %c0_339] : memref<2x128xf32, #tpu.memory_space<vmem>>, vector<1x128xf32>
    tpu.vector_store %arg17[%c1_338, %c0_339], %578 {strides = array<i32>} : memref<2x128xf32, #tpu.memory_space<vmem>>, vector<1x128xf32>,
    %c1_340 = arith.constant 1 : index
    %c0_341 = arith.constant 0 : index
    %580 = vector.load %arg1[%c1_340, %c0_341] : memref<2x8xf32, #tpu.memory_space<vmem>>, vector<1x8xf32>
    %581 = vector.extract_strided_slice %564 {offsets = [8, 0], sizes = [8, 128], strides = [1, 1]} : vector<16x128xf32> to vector<8x128xf32>
    %cst_342 = arith.constant dense<0.000000e+00> : vector<1x128xf32>
    %582 = tpu.matmul %580, %581, %cst_342 {dimension_numbers = #tpu.dot_dimension_numbers<[1], [0], [0], [1], [0, 0, 1, 1], [], []>} : vector<1x8xf32>, vector<8x128xf32>, vector<1x128xf32> -> vector<1x128xf32>
    %583 = vector.shape_cast %580 : vector<1x8xf32> to vector<1x1x8xf32>
    %cst_343 = arith.constant dense<0.000000e+00> : vector<1xf32>
    %584 = vector.multi_reduction <add>, %583, %cst_343 [1, 2] : vector<1x1x8xf32> to vector<1xf32>
    %585 = vector.shape_cast %584 : vector<1xf32> to vector<1x1x1xf32>
    %586 = vector.extract %585[0, 0, 0] : f32 from vector<1x1x1xf32>
    %587 = vector.broadcast %586 : f32 to vector<1x128xf32>
    %588 = arith.divf %582, %587 : vector<1x128xf32>
    %c1_344 = arith.constant 1 : index
    %c0_345 = arith.constant 0 : index
    %589 = vector.load %arg18[%c1_344, %c0_345] : memref<2x128xf32, #tpu.memory_space<vmem>>, vector<1x128xf32>
    tpu.vector_store %arg18[%c1_344, %c0_345], %588 {strides = array<i32>} : memref<2x128xf32, #tpu.memory_space<vmem>>, vector<1x128xf32>,
    return
  }
}

</mosaic_0001>

<llo_original>
// kernel: bert_forward.1
$region0: #{bert_forward.1}
  #allocation0 [shape = 'u32[]', space=smem, size = 0x4, offset = 0x4, fixed_abs, tag = 'smem constant byte address 0x4 - core index']
  #allocation1 [shape = 'u32[144,128]{1,0:T(1,128)}', space=vmem, size = 0x12000, scoped, tag = 'internal scratch']
  #allocation2 [shape = 'f32[16,384]{1,0:T(8,128)}', space=vmem, size = 0x6000, scoped, tag = 'scratch operand']
  #allocation3 [shape = 'f32[16,128]{1,0:T(8,128)}', space=vmem, size = 0x2000, scoped, tag = 'scratch operand']
  %s0 = inlined_call_operand.vmem [shape: f32[16,128], index: 0, kind: input, shape index: {}]
  %s1 = inlined_call_operand.vmem [shape: f32[2,8], index: 1, kind: input, shape index: {}]
  %s2 = inlined_call_operand.vmem [shape: f32[1,128], index: 2, kind: input, shape index: {}]
  %s3 = inlined_call_operand.vmem [shape: f32[1,128], index: 3, kind: input, shape index: {}]
  %s4 = inlined_call_operand.hbm [shape: f32[2,128,384], index: 4, kind: input, shape index: {}]
  %s5 = inlined_call_operand.vmem [shape: f32[2,1,384], index: 5, kind: input, shape index: {}]
  %s6 = inlined_call_operand.vmem [shape: f32[2,128,128], index: 6, kind: input, shape index: {}]
  %s7 = inlined_call_operand.vmem [shape: f32[2,1,128], index: 7, kind: input, shape index: {}]
  %s8 = inlined_call_operand.hbm [shape: f32[2,128,256], index: 8, kind: input, shape index: {}]
  %s9 = inlined_call_operand.vmem [shape: f32[2,1,256], index: 9, kind: input, shape index: {}]
  %s10 = inlined_call_operand.hbm [shape: f32[2,256,128], index: 10, kind: input, shape index: {}]
  %s11 = inlined_call_operand.vmem [shape: f32[2,1,128], index: 11, kind: input, shape index: {}]
  %s12 = inlined_call_operand.vmem [shape: f32[2,1,128], index: 12, kind: input, shape index: {}]
  %s13 = inlined_call_operand.vmem [shape: f32[2,1,128], index: 13, kind: input, shape index: {}]
  %s14 = inlined_call_operand.vmem [shape: f32[2,1,128], index: 14, kind: input, shape index: {}]
  %s15 = inlined_call_operand.vmem [shape: f32[2,1,128], index: 15, kind: input, shape index: {}]
  %s16 = inlined_call_operand.hbm [shape: f32[16,128], index: 16, kind: output, shape index: {0}]
  %s17 = inlined_call_operand.hbm [shape: f32[2,128], index: 17, kind: output, shape index: {1}]
  %s18 = inlined_call_operand.hbm [shape: f32[2,128], index: 18, kind: output, shape index: {2}]
  %19 = xla_tuple %s16, %s17, %s18
  %s20 = sld [smem:[#allocation0]]
  $region102: #{bert_forward.1} parent=0
    _
  %s22 = ssub.s32 1, %s20
  %s23 = scalar_select 0, %s22, %s20
  $region1: #{bert_forward.1} parent=0
    #allocation4 [shape = 'u8[393216]{0}', space=vmem, size = 0x60000, scoped, tag = 'input window, operand 4, single buffered']
    #allocation5 [shape = 's32[1]{0}', space=sflag, size = 0x4, scoped, tag = 'scoped memory for bert_forward.1']
    #allocation6 [shape = 's32[1]{0}', space=sflag, size = 0x4, scoped, tag = 'scoped memory for bert_forward.1']
    #allocation7 [shape = 'u8[262144]{0}', space=vmem, size = 0x40000, scoped, tag = 'input window, operand 8, single buffered']
    #allocation8 [shape = 's32[1]{0}', space=sflag, size = 0x4, scoped, tag = 'scoped memory for bert_forward.1']
    #allocation9 [shape = 'u8[262144]{0}', space=vmem, size = 0x40000, scoped, tag = 'input window, operand 10, single buffered']
    #allocation10 [shape = 'u8[8192]{0}', space=vmem, size = 0x2000, scoped, tag = 'output window, operand 0, single buffered']
    #allocation11 [shape = 'u8[1024]{0}', space=vmem, size = 0x400, scoped, tag = 'output window, operand 1, single buffered']
    #allocation12 [shape = 's32[1]{0}', space=sflag, size = 0x4, scoped, tag = 'scoped memory for bert_forward.1']
    #allocation13 [shape = 'u8[1024]{0}', space=vmem, size = 0x400, scoped, tag = 'output window, operand 2, single buffered']
    %24 = vsyncpa [#allocation5], 0
    %25 = vsyncpa [#allocation8], 0
    %26 = vsyncpa [#allocation6], 0
    %27 = vsyncpa [#allocation12], 0
    // Predicated region
    $region2: #{bert_forward.1} parent=1 // pred_check
      _
    $region3: #{bert_forward.1} parent=1 // pred_check_branch
      %29 = sbr.rel (0) target = $region5
    $region4: #{bert_forward.1} parent=1 // pred_region
      _
    $region5: #{bert_forward.1} parent=1 // pred_fallthru
      _
    // Predicated region
    $region6: #{bert_forward.1} parent=1 // pred_check
      _
    $region7: #{bert_forward.1} parent=1 // pred_check_branch
      %31 = sbr.rel (0) target = $region9
    $region8: #{bert_forward.1} parent=1 // pred_region
      _
    $region9: #{bert_forward.1} parent=1 // pred_fallthru
      _
    // Predicated region
    $region10: #{bert_forward.1} parent=1 // pred_check
      _
    $region11: #{bert_forward.1} parent=1 // pred_check_branch
      %33 = sbr.rel (0) target = $region13
    $region12: #{bert_forward.1} parent=1 // pred_region
      _
    $region13: #{bert_forward.1} parent=1 // pred_fallthru
      _
    // Predicated region
    $region14: #{bert_forward.1} parent=1 // pred_check
      _
    $region15: #{bert_forward.1} parent=1 // pred_check_branch
      %35 = sbr.rel (0) target = $region17
    $region16: #{bert_forward.1} parent=1 // pred_region
      _
    $region17: #{bert_forward.1} parent=1 // pred_fallthru
      _
    // Predicated region
    $region18: #{bert_forward.1} parent=1 // pred_check
      _
    $region19: #{bert_forward.1} parent=1 // pred_check_branch
      %37 = sbr.rel (0) target = $region21
    $region20: #{bert_forward.1} parent=1 // pred_region
      %s39 = ssub.s32 12288, 12288
      %40 = vsyncadd [#allocation5], %s39
      %s41 = sshll.u32 [#allocation4], 4
      %s42 = int_to_ptr.vmem [resolvable:$true] %s41
      %47 = dma.hbm_to_vmem [thread:$0]  %s4, 12288, %s42, [#allocation5], 384, 384, 24
    $region21: #{bert_forward.1} parent=1 // pred_fallthru
      _
    // Predicated region
    $region22: #{bert_forward.1} parent=1 // pred_check
      _
    $region23: #{bert_forward.1} parent=1 // pred_check_branch
      %49 = sbr.rel (0) target = $region25
    $region24: #{bert_forward.1} parent=1 // pred_region
      _
    $region25: #{bert_forward.1} parent=1 // pred_fallthru
      _
    // Predicated region
    $region26: #{bert_forward.1} parent=1 // pred_check
      _
    $region27: #{bert_forward.1} parent=1 // pred_check_branch
      %51 = sbr.rel (0) target = $region29
    $region28: #{bert_forward.1} parent=1 // pred_region
      _
    $region29: #{bert_forward.1} parent=1 // pred_fallthru
      _
    // Predicated region
    $region30: #{bert_forward.1} parent=1 // pred_check
      _
    $region31: #{bert_forward.1} parent=1 // pred_check_branch
      %53 = sbr.rel (0) target = $region33
    $region32: #{bert_forward.1} parent=1 // pred_region
      _
    $region33: #{bert_forward.1} parent=1 // pred_fallthru
      _
    // Predicated region
    $region34: #{bert_forward.1} parent=1 // pred_check
      _
    $region35: #{bert_forward.1} parent=1 // pred_check_branch
      %55 = sbr.rel (0) target = $region37
    $region36: #{bert_forward.1} parent=1 // pred_region
      %s57 = ssub.s32 8192, 8192
      %58 = vsyncadd [#allocation8], %s57
      %s59 = sshll.u32 [#allocation7], 4
      %s60 = int_to_ptr.vmem [resolvable:$true] %s59
      %65 = dma.hbm_to_vmem [thread:$0]  %s8, 8192, %s60, [#allocation8], 256, 256, 16
    $region37: #{bert_forward.1} parent=1 // pred_fallthru
      _
    // Predicated region
    $region38: #{bert_forward.1} parent=1 // pred_check
      _
    $region39: #{bert_forward.1} parent=1 // pred_check_branch
      %67 = sbr.rel (0) target = $region41
    $region40: #{bert_forward.1} parent=1 // pred_region
      _
    $region41: #{bert_forward.1} parent=1 // pred_fallthru
      _
    // Predicated region
    $region42: #{bert_forward.1} parent=1 // pred_check
      _
    $region43: #{bert_forward.1} parent=1 // pred_check_branch
      %69 = sbr.rel (0) target = $region45
    $region44: #{bert_forward.1} parent=1 // pred_region
      %s71 = ssub.s32 8192, 8192
      %72 = vsyncadd [#allocation8], %s71
      %s73 = sshll.u32 [#allocation9], 4
      %s74 = int_to_ptr.vmem [resolvable:$true] %s73
      %79 = dma.hbm_to_vmem [thread:$0]  %s10, 8192, %s74, [#allocation8], 128, 128, 8
    $region45: #{bert_forward.1} parent=1 // pred_fallthru
      _
    // Predicated region
    $region46: #{bert_forward.1} parent=1 // pred_check
      _
    $region47: #{bert_forward.1} parent=1 // pred_check_branch
      %81 = sbr.rel (0) target = $region49
    $region48: #{bert_forward.1} parent=1 // pred_region
      _
    $region49: #{bert_forward.1} parent=1 // pred_fallthru
      _
    // Predicated region
    $region50: #{bert_forward.1} parent=1 // pred_check
      _
    $region51: #{bert_forward.1} parent=1 // pred_check_branch
      %83 = sbr.rel (0) target = $region53
    $region52: #{bert_forward.1} parent=1 // pred_region
      _
    $region53: #{bert_forward.1} parent=1 // pred_fallthru
      _
    // Predicated region
    $region54: #{bert_forward.1} parent=1 // pred_check
      _
    $region55: #{bert_forward.1} parent=1 // pred_check_branch
      %85 = sbr.rel (0) target = $region57
    $region56: #{bert_forward.1} parent=1 // pred_region
      _
    $region57: #{bert_forward.1} parent=1 // pred_fallthru
      _
    // Predicated region
    $region58: #{bert_forward.1} parent=1 // pred_check
      _
    $region59: #{bert_forward.1} parent=1 // pred_check_branch
      %87 = sbr.rel (0) target = $region61
    $region60: #{bert_forward.1} parent=1 // pred_region
      _
    $region61: #{bert_forward.1} parent=1 // pred_fallthru
      _
    // Predicated region
    $region62: #{bert_forward.1} parent=1 // pred_check
      _
    $region63: #{bert_forward.1} parent=1 // pred_check_branch
      %89 = sbr.rel (0) target = $region65
    $region64: #{bert_forward.1} parent=1 // pred_region
      _
    $region65: #{bert_forward.1} parent=1 // pred_fallthru
      _
    // Predicated region
    $region66: #{bert_forward.1} parent=1 // pred_check
      _
    $region67: #{bert_forward.1} parent=1 // pred_check_branch
      %91 = sbr.rel (0) target = $region69
    $region68: #{bert_forward.1} parent=1 // pred_region
      %92 = dma.done [#allocation5], 12288
    $region69: #{bert_forward.1} parent=1 // pred_fallthru
      _
    // Predicated region
    $region70: #{bert_forward.1} parent=1 // pred_check
      _
    $region71: #{bert_forward.1} parent=1 // pred_check_branch
      %94 = sbr.rel (0) target = $region73
    $region72: #{bert_forward.1} parent=1 // pred_region
      %95 = dma.done [#allocation8], 8192
    $region73: #{bert_forward.1} parent=1 // pred_fallthru
      _
    // Predicated region
    $region74: #{bert_forward.1} parent=1 // pred_check
      _
    $region75: #{bert_forward.1} parent=1 // pred_check_branch
      %97 = sbr.rel (0) target = $region77
    $region76: #{bert_forward.1} parent=1 // pred_region
      %98 = dma.done [#allocation8], 8192
    $region77: #{bert_forward.1} parent=1 // pred_fallthru
      _
    %v99 = vld [vmem:[%s1] sm:$0x1]
    %v100 = vsub.f32 1.0, %v99
    %v101 = vmul.f32 %v100, -1e+09
    %v102 = vld [vmem:[%s1 + $0x1] sm:$0x1]
    %v103 = vsub.f32 1.0, %v102
    %v104 = vmul.f32 %v103, -1e+09
    %v105 = vld [vmem:[%s0] sm:$0xff]
    %v106 = vld [vmem:[%s0 + $0x8] sm:$0xff]
    %v107 = vld [vmem:[%s2] sm:$0x1]
    %v108 = vld [vmem:[%s3] sm:$0x1]
    %109 = vadd.xlane.f32.xlu0 %v105
    %v110 = vpop.xlane.xlu0 %109
    %111 = vadd.xlane.f32.xlu0 %v106
    %v112 = vpop.xlane.xlu0 %111
    %v113 = vrcp.pop 128.0
    %v114 = vmul.f32 %v110, %v113
    %v115 = vmul.f32 %v112, %v113
    %v116 = vsub.f32 %v105, %v114
    %v117 = vsub.f32 %v106, %v115
    %v118 = vmul.f32 %v116, %v116
    %v119 = vmul.f32 %v117, %v117
    %120 = vadd.xlane.f32.xlu0 %v118
    %v121 = vpop.xlane.xlu0 %120
    %122 = vadd.xlane.f32.xlu0 %v119
    %v123 = vpop.xlane.xlu0 %122
    %v124 = vmul.f32 %v121, %v113
    %v125 = vmul.f32 %v123, %v113
    %v126 = vadd.f32 %v124, 1e-12
    %v127 = vadd.f32 %v125, 1e-12
    %v128 = vrsqrt.pop %v126
    %v129 = vrsqrt.pop %v127
    %v130 = vmul.f32 %v116, %v128
    %v131 = vmul.f32 %v117, %v129
    %v133 = vlaneseq
    %v134 = vshrl.u32 %v133, 7
    %v135 = vsub.s32 0, %v134
    %v136 = vrot.slane %v107, %v135
    %v138 = vmul.f32 %v130, %v136
    %v139 = vmul.f32 %v131, %v136
    %v141 = vlaneseq
    %v142 = vshrl.u32 %v141, 7
    %v143 = vsub.s32 0, %v142
    %v144 = vrot.slane %v108, %v143
    %v146 = vadd.f32 %v138, %v144
    %v147 = vadd.f32 %v139, %v144
    %v148 = vld [vmem:[#allocation4] sm:$0xff]
    %v149 = vld [vmem:[#allocation4 + $0x8] sm:$0xff]
    %v150 = vld [vmem:[#allocation4 + $0x10] sm:$0xff]
    %v151 = vld [vmem:[#allocation4 + $0x18] sm:$0xff]
    %v152 = vld [vmem:[#allocation4 + $0x20] sm:$0xff]
    %v153 = vld [vmem:[#allocation4 + $0x28] sm:$0xff]
    %v154 = vld [vmem:[#allocation4 + $0x30] sm:$0xff]
    %v155 = vld [vmem:[#allocation4 + $0x38] sm:$0xff]
    %v156 = vld [vmem:[#allocation4 + $0x40] sm:$0xff]
    %v157 = vld [vmem:[#allocation4 + $0x48] sm:$0xff]
    %v158 = vld [vmem:[#allocation4 + $0x50] sm:$0xff]
    %v159 = vld [vmem:[#allocation4 + $0x58] sm:$0xff]
    %v160 = vld [vmem:[#allocation4 + $0x60] sm:$0xff]
    %v161 = vld [vmem:[#allocation4 + $0x68] sm:$0xff]
    %v162 = vld [vmem:[#allocation4 + $0x70] sm:$0xff]
    %v163 = vld [vmem:[#allocation4 + $0x78] sm:$0xff]
    %v164 = vld [vmem:[#allocation4 + $0x80] sm:$0xff]
    %v165 = vld [vmem:[#allocation4 + $0x88] sm:$0xff]
    %v166 = vld [vmem:[#allocation4 + $0x90] sm:$0xff]
    %v167 = vld [vmem:[#allocation4 + $0x98] sm:$0xff]
    %v168 = vld [vmem:[#allocation4 + $0xa0] sm:$0xff]
    %v169 = vld [vmem:[#allocation4 + $0xa8] sm:$0xff]
    %v170 = vld [vmem:[#allocation4 + $0xb0] sm:$0xff]
    %v171 = vld [vmem:[#allocation4 + $0xb8] sm:$0xff]
    %v172 = vld [vmem:[#allocation4 + $0xc0] sm:$0xff]
    %v173 = vld [vmem:[#allocation4 + $0xc8] sm:$0xff]
    %v174 = vld [vmem:[#allocation4 + $0xd0] sm:$0xff]
    %v175 = vld [vmem:[#allocation4 + $0xd8] sm:$0xff]
    %v176 = vld [vmem:[#allocation4 + $0xe0] sm:$0xff]
    %v177 = vld [vmem:[#allocation4 + $0xe8] sm:$0xff]
    %v178 = vld [vmem:[#allocation4 + $0xf0] sm:$0xff]
    %v179 = vld [vmem:[#allocation4 + $0xf8] sm:$0xff]
    %v180 = vld [vmem:[#allocation4 + $0x100] sm:$0xff]
    %v181 = vld [vmem:[#allocation4 + $0x108] sm:$0xff]
    %v182 = vld [vmem:[#allocation4 + $0x110] sm:$0xff]
    %v183 = vld [vmem:[#allocation4 + $0x118] sm:$0xff]
    %v184 = vld [vmem:[#allocation4 + $0x120] sm:$0xff]
    %v185 = vld [vmem:[#allocation4 + $0x128] sm:$0xff]
    %v186 = vld [vmem:[#allocation4 + $0x130] sm:$0xff]
    %v187 = vld [vmem:[#allocation4 + $0x138] sm:$0xff]
    %v188 = vld [vmem:[#allocation4 + $0x140] sm:$0xff]
    %v189 = vld [vmem:[#allocation4 + $0x148] sm:$0xff]
    %v190 = vld [vmem:[#allocation4 + $0x150] sm:$0xff]
    %v191 = vld [vmem:[#allocation4 + $0x158] sm:$0xff]
    %v192 = vld [vmem:[#allocation4 + $0x160] sm:$0xff]
    %v193 = vld [vmem:[#allocation4 + $0x168] sm:$0xff]
    %v194 = vld [vmem:[#allocation4 + $0x170] sm:$0xff]
    %v195 = vld [vmem:[#allocation4 + $0x178] sm:$0xff]
    %v196 = vld [vmem:[%s5] sm:$0x7]
    %v198 = vlaneseq
    %v199 = vshrl.u32 %v198, 7
    %v200 = vsub.s32 0, %v199
    %v201 = vrot.slane %v196, %v200
    %v202 = vlaneseq
    %v203 = vshrl.u32 %v202, 7
    %v204 = vsub.s32 1, %v203
    %v205 = vrot.slane %v196, %v204
    %v206 = vlaneseq
    %v207 = vshrl.u32 %v206, 7
    %v208 = vsub.s32 2, %v207
    %v209 = vrot.slane %v196, %v208
    %213 = vmatprep.subr.mxu0 %v194
    %214 = vmatpush1.msra.mxu0 %v193
    %215 = vmatprep.subr.mxu0 %v191
    %216 = vmatpush1.msra.mxu0 %v190
    %217 = vmatprep.subr.mxu0 %v188
    %218 = vmatpush1.msra.mxu0 %v187
    %219 = vmatprep.subr.mxu0 %v185
    %220 = vmatpush1.msra.mxu0 %v184
    %221 = vmatprep.subr.mxu0 %v182
    %222 = vmatpush1.msra.mxu0 %v181
    %223 = vmatprep.subr.mxu0 %v179
    %224 = vmatpush1.msra.mxu0 %v178
    %225 = vmatprep.subr.mxu0 %v176
    %226 = vmatpush1.msra.mxu0 %v175
    %227 = vmatprep.subr.mxu0 %v173
    %228 = vmatpush1.msra.mxu0 %v172
    %229 = vmatprep.subr.mxu0 %v170
    %230 = vmatpush1.msra.mxu0 %v169
    %231 = vmatprep.subr.mxu0 %v167
    %232 = vmatpush1.msra.mxu0 %v166
    %233 = vmatprep.subr.mxu0 %v164
    %234 = vmatpush1.msra.mxu0 %v163
    %235 = vmatprep.subr.mxu0 %v161
    %236 = vmatpush1.msra.mxu0 %v160
    %237 = vmatprep.subr.mxu0 %v158
    %238 = vmatpush1.msra.mxu0 %v157
    %239 = vmatprep.subr.mxu0 %v155
    %240 = vmatpush1.msra.mxu0 %v154
    %241 = vmatprep.subr.mxu0 %v152
    %242 = vmatpush1.msra.mxu0 %v151
    %243 = vmatprep.subr.mxu0 %v149
    %244 = vmatpush1.msra.mxu0 %v148
    %245 = vmatprep.subr.mxu0 0.0
    %246 = vmatpush2.msra.mxu0 0.0
    %247 = vmatprep.subr.mxu0 0.0
    %248 = vmatpush2.msra.mxu0 0.0
    %249 = vmatprep.subr.mxu0 0.0
    %250 = vmatpush2.msra.mxu0 0.0
    %251 = vmatprep.subr.mxu0 0.0
    %252 = vmatpush2.msra.mxu0 0.0
    %253 = vmatprep.subr.mxu0 0.0
    %254 = vmatpush2.msra.mxu0 0.0
    %255 = vmatprep.subr.mxu0 0.0
    %256 = vmatpush2.msra.mxu0 0.0
    %257 = vmatprep.subr.mxu0 0.0
    %258 = vmatpush2.msra.mxu0 0.0
    %259 = vmatprep.subr.mxu0 0.0
    %260 = vmatpush2.msra.mxu0 0.0
    %261 = vmatprep.subr.mxu0 0.0
    %262 = vmatpush2.msra.mxu0 0.0
    %263 = vmatprep.subr.mxu0 0.0
    %264 = vmatpush2.msra.mxu0 0.0
    %265 = vmatprep.subr.mxu0 0.0
    %266 = vmatpush2.msra.mxu0 0.0
    %267 = vmatprep.subr.mxu0 0.0
    %268 = vmatpush2.msra.mxu0 0.0
    %269 = vmatprep.subr.mxu0 0.0
    %270 = vmatpush2.msra.mxu0 0.0
    %271 = vmatprep.subr.mxu0 0.0
    %272 = vmatpush2.msra.mxu0 0.0
    %273 = vmatprep.subr.mxu0 0.0
    %274 = vmatpush2.msra.mxu0 0.0
    %275 = vmatprep.subr.mxu0 0.0
    %276 = vmatpush2.msra.mxu0 0.0
    %277 = vmatprep.mubr.f32.mxu0 0.0
    %278 = vmatmul.mubr.f32.gmra.mxu0 %v146
    %v279 = vpop.f32.mrf.mxu0
    %v280 = vadd.f32 %v201, %v279
    %v281 = vpop.f32.mrf.mxu0
    %v282 = vadd.f32 %v205, %v281
    %283 = vmatprep.mubr.f32.mxu0 0.0
    %284 = vmatmul.mubr.f32.gmra.mxu0 %v147
    %v285 = vpop.f32.mrf.mxu0
    %v286 = vadd.f32 %v201, %v285
    %v287 = vpop.f32.mrf.mxu0
    %v288 = vadd.f32 %v205, %v287
    %289 = vdwg.mxu0
    %290 = vmatprep.subr.mxu0 0.0
    %291 = vmatpush1.msra.mxu0 %v195
    %292 = vmatprep.subr.mxu0 0.0
    %293 = vmatpush1.msra.mxu0 %v192
    %294 = vmatprep.subr.mxu0 0.0
    %295 = vmatpush1.msra.mxu0 %v189
    %296 = vmatprep.subr.mxu0 0.0
    %297 = vmatpush1.msra.mxu0 %v186
    %298 = vmatprep.subr.mxu0 0.0
    %299 = vmatpush1.msra.mxu0 %v183
    %300 = vmatprep.subr.mxu0 0.0
    %301 = vmatpush1.msra.mxu0 %v180
    %302 = vmatprep.subr.mxu0 0.0
    %303 = vmatpush1.msra.mxu0 %v177
    %304 = vmatprep.subr.mxu0 0.0
    %305 = vmatpush1.msra.mxu0 %v174
    %306 = vmatprep.subr.mxu0 0.0
    %307 = vmatpush1.msra.mxu0 %v171
    %308 = vmatprep.subr.mxu0 0.0
    %309 = vmatpush1.msra.mxu0 %v168
    %310 = vmatprep.subr.mxu0 0.0
    %311 = vmatpush1.msra.mxu0 %v165
    %312 = vmatprep.subr.mxu0 0.0
    %313 = vmatpush1.msra.mxu0 %v162
    %314 = vmatprep.subr.mxu0 0.0
    %315 = vmatpush1.msra.mxu0 %v159
    %316 = vmatprep.subr.mxu0 0.0
    %317 = vmatpush1.msra.mxu0 %v156
    %318 = vmatprep.subr.mxu0 0.0
    %319 = vmatpush1.msra.mxu0 %v153
    %320 = vmatprep.subr.mxu0 0.0
    %321 = vmatpush1.msra.mxu0 %v150
    %322 = vmatprep.subr.mxu0 0.0
    %323 = vmatpush2.msra.mxu0 0.0
    %324 = vmatprep.subr.mxu0 0.0
    %325 = vmatpush2.msra.mxu0 0.0
    %326 = vmatprep.subr.mxu0 0.0
    %327 = vmatpush2.msra.mxu0 0.0
    %328 = vmatprep.subr.mxu0 0.0
    %329 = vmatpush2.msra.mxu0 0.0
    %330 = vmatprep.subr.mxu0 0.0
    %331 = vmatpush2.msra.mxu0 0.0
    %332 = vmatprep.subr.mxu0 0.0
    %333 = vmatpush2.msra.mxu0 0.0
    %334 = vmatprep.subr.mxu0 0.0
    %335 = vmatpush2.msra.mxu0 0.0
    %336 = vmatprep.subr.mxu0 0.0
    %337 = vmatpush2.msra.mxu0 0.0
    %338 = vmatprep.subr.mxu0 0.0
    %339 = vmatpush2.msra.mxu0 0.0
    %340 = vmatprep.subr.mxu0 0.0
    %341 = vmatpush2.msra.mxu0 0.0
    %342 = vmatprep.subr.mxu0 0.0
    %343 = vmatpush2.msra.mxu0 0.0
    %344 = vmatprep.subr.mxu0 0.0
    %345 = vmatpush2.msra.mxu0 0.0
    %346 = vmatprep.subr.mxu0 0.0
    %347 = vmatpush2.msra.mxu0 0.0
    %348 = vmatprep.subr.mxu0 0.0
    %349 = vmatpush2.msra.mxu0 0.0
    %350 = vmatprep.subr.mxu0 0.0
    %351 = vmatpush2.msra.mxu0 0.0
    %352 = vmatprep.subr.mxu0 0.0
    %353 = vmatpush2.msra.mxu0 0.0
    %354 = vmatprep.mubr.f32.mxu0 0.0
    %355 = vmatmul.mubr.f32.gmra.mxu0 %v146
    %v356 = vpop.f32.mrf.mxu0
    %v357 = vadd.f32 %v209, %v356
    %v358 = vpop.f32.mrf.mxu0
    %359 = vmatprep.mubr.f32.mxu0 0.0
    %360 = vmatmul.mubr.f32.gmra.mxu0 %v147
    %v361 = vpop.f32.mrf.mxu0
    %v362 = vadd.f32 %v209, %v361
    %v363 = vpop.f32.mrf.mxu0
    %364 = vdwg.mxu0
    %365 = vst [vmem:[#allocation2] sm:$0xff] %v280
    %366 = vst [vmem:[#allocation2 + $0x8] sm:$0xff] %v282
    %367 = vst [vmem:[#allocation2 + $0x10] sm:$0xff] %v357
    %368 = vst [vmem:[#allocation2 + $0x18] sm:$0xff] %v286
    %369 = vst [vmem:[#allocation2 + $0x20] sm:$0xff] %v288
    %370 = vst [vmem:[#allocation2 + $0x28] sm:$0xff] %v362
    %v371 = vld [vmem:[#allocation2] sm:$0xff]
    %v372 = vld [vmem:[#allocation2 + $0x8] sm:$0xff]
    %v373 = vld [vmem:[#allocation2 + $0x10] sm:$0xff]
    %vm374 = vcmask 261120
    %v376 = vsel %vm374, %v371, 0
    %v379 = vsel %vm374, %v372, 0
    %381 = vmatprep.subr.mxu0 0.0
    %382 = vmatpush1.xpose.msra.mxu0 0.0
    %383 = vmatprep.subr.mxu0 0.0
    %384 = vmatpush1.xpose.msra.mxu0 0.0
    %385 = vmatprep.subr.mxu0 0.0
    %386 = vmatpush1.xpose.msra.mxu0 0.0
    %387 = vmatprep.subr.mxu0 0.0
    %388 = vmatpush1.xpose.msra.mxu0 0.0
    %389 = vmatprep.subr.mxu0 0.0
    %390 = vmatpush1.xpose.msra.mxu0 0.0
    %391 = vmatprep.subr.mxu0 0.0
    %392 = vmatpush1.xpose.msra.mxu0 0.0
    %393 = vmatprep.subr.mxu0 0.0
    %394 = vmatpush1.xpose.msra.mxu0 0.0
    %395 = vmatprep.subr.mxu0 0.0
    %396 = vmatpush1.xpose.msra.mxu0 0.0
    %397 = vmatprep.subr.mxu0 0.0
    %398 = vmatpush1.xpose.msra.mxu0 0.0
    %399 = vmatprep.subr.mxu0 0.0
    %400 = vmatpush1.xpose.msra.mxu0 0.0
    %401 = vmatprep.subr.mxu0 0.0
    %402 = vmatpush1.xpose.msra.mxu0 0.0
    %403 = vmatprep.subr.mxu0 0.0
    %404 = vmatpush1.xpose.msra.mxu0 0.0
    %405 = vmatprep.subr.mxu0 0.0
    %406 = vmatpush1.xpose.msra.mxu0 0.0
    %407 = vmatprep.subr.mxu0 0.0
    %408 = vmatpush1.xpose.msra.mxu0 0.0
    %409 = vmatprep.subr.mxu0 0.0
    %410 = vmatpush1.xpose.msra.mxu0 0.0
    %411 = vmatprep.subr.mxu0 0.0
    %412 = vmatpush1.xpose.msra.mxu0 %v379
    %413 = vmatprep.subr.mxu0 0.0
    %414 = vmatpush2.xpose.msra.mxu0 0.0
    %415 = vmatprep.subr.mxu0 0.0
    %416 = vmatpush2.xpose.msra.mxu0 0.0
    %417 = vmatprep.subr.mxu0 0.0
    %418 = vmatpush2.xpose.msra.mxu0 0.0
    %419 = vmatprep.subr.mxu0 0.0
    %420 = vmatpush2.xpose.msra.mxu0 0.0
    %421 = vmatprep.subr.mxu0 0.0
    %422 = vmatpush2.xpose.msra.mxu0 0.0
    %423 = vmatprep.subr.mxu0 0.0
    %424 = vmatpush2.xpose.msra.mxu0 0.0
    %425 = vmatprep.subr.mxu0 0.0
    %426 = vmatpush2.xpose.msra.mxu0 0.0
    %427 = vmatprep.subr.mxu0 0.0
    %428 = vmatpush2.xpose.msra.mxu0 0.0
    %429 = vmatprep.subr.mxu0 0.0
    %430 = vmatpush2.xpose.msra.mxu0 0.0
    %431 = vmatprep.subr.mxu0 0.0
    %432 = vmatpush2.xpose.msra.mxu0 0.0
    %433 = vmatprep.subr.mxu0 0.0
    %434 = vmatpush2.xpose.msra.mxu0 0.0
    %435 = vmatprep.subr.mxu0 0.0
    %436 = vmatpush2.xpose.msra.mxu0 0.0
    %437 = vmatprep.subr.mxu0 0.0
    %438 = vmatpush2.xpose.msra.mxu0 0.0
    %439 = vmatprep.subr.mxu0 0.0
    %440 = vmatpush2.xpose.msra.mxu0 0.0
    %441 = vmatprep.subr.mxu0 0.0
    %442 = vmatpush2.xpose.msra.mxu0 0.0
    %443 = vmatprep.subr.mxu0 0.0
    %444 = vmatpush2.xpose.msra.mxu0 0.0
    %445 = vmatprep.mubr.f32.mxu0 0.0
    %446 = vmatmul.mubr.f32.gmra.mxu0 %v376
    %v447 = vpop.f32.mrf.mxu0
    %v448 = vadd.f32 0.0, %v447
    %v449 = vpop.f32.mrf.mxu0
    %450 = vdwg.mxu0
    %v451 = vmul.f32 %v448, 0.17677669
    %v452 = vlaneseq
    %v453 = vshrl.u32 %v452, 7
    %v454 = vsub.s32 0, %v453
    %v455 = vrot.slane %v101, %v454
    %v456 = vadd.f32 %v451, %v455
    %vm457 = vcmask 64512
    %v458 = vsel %vm457, %v456, -inf
    %459 = vmax.xlane.f32.xlu0 %v458
    %v460 = vpop.xlane.xlu0 %459
    %v461 = vsub.f32 %v456, %v460
    %v462 = vmul.f32 %v461, 1.442695
    %v463 = vpow.pop %v462
    %v464 = vsel %vm457, %v463, 0.0
    %465 = vadd.xlane.f32.xlu0 %v464
    %v466 = vpop.xlane.xlu0 %465
    %v467 = vrcp.pop %v466
    %v468 = vmul.f32 %v463, %v467
    %v470 = vsel %vm457, %v468, 0
    %472 = vmatprep.subr.mxu0 0.0
    %473 = vmatpush1.msra.mxu0 0.0
    %474 = vmatprep.subr.mxu0 0.0
    %475 = vmatpush1.msra.mxu0 0.0
    %476 = vmatprep.subr.mxu0 0.0
    %477 = vmatpush1.msra.mxu0 0.0
    %478 = vmatprep.subr.mxu0 0.0
    %479 = vmatpush1.msra.mxu0 0.0
    %480 = vmatprep.subr.mxu0 0.0
    %481 = vmatpush1.msra.mxu0 0.0
    %482 = vmatprep.subr.mxu0 0.0
    %483 = vmatpush1.msra.mxu0 0.0
    %484 = vmatprep.subr.mxu0 0.0
    %485 = vmatpush1.msra.mxu0 0.0
    %486 = vmatprep.subr.mxu0 0.0
    %487 = vmatpush1.msra.mxu0 0.0
    %488 = vmatprep.subr.mxu0 0.0
    %489 = vmatpush1.msra.mxu0 0.0
    %490 = vmatprep.subr.mxu0 0.0
    %491 = vmatpush1.msra.mxu0 0.0
    %492 = vmatprep.subr.mxu0 0.0
    %493 = vmatpush1.msra.mxu0 0.0
    %494 = vmatprep.subr.mxu0 0.0
    %495 = vmatpush1.msra.mxu0 0.0
    %496 = vmatprep.subr.mxu0 0.0
    %497 = vmatpush1.msra.mxu0 0.0
    %498 = vmatprep.subr.mxu0 0.0
    %499 = vmatpush1.msra.mxu0 0.0
    %500 = vmatprep.subr.mxu0 0.0
    %501 = vmatpush1.msra.mxu0 0.0
    %502 = vmatprep.subr.mxu0 0.0
    %503 = vmatpush1.msra.mxu0 %v373
    %504 = vmatprep.subr.mxu0 0.0
    %505 = vmatpush2.msra.mxu0 0.0
    %506 = vmatprep.subr.mxu0 0.0
    %507 = vmatpush2.msra.mxu0 0.0
    %508 = vmatprep.subr.mxu0 0.0
    %509 = vmatpush2.msra.mxu0 0.0
    %510 = vmatprep.subr.mxu0 0.0
    %511 = vmatpush2.msra.mxu0 0.0
    %512 = vmatprep.subr.mxu0 0.0
    %513 = vmatpush2.msra.mxu0 0.0
    %514 = vmatprep.subr.mxu0 0.0
    %515 = vmatpush2.msra.mxu0 0.0
    %516 = vmatprep.subr.mxu0 0.0
    %517 = vmatpush2.msra.mxu0 0.0
    %518 = vmatprep.subr.mxu0 0.0
    %519 = vmatpush2.msra.mxu0 0.0
    %520 = vmatprep.subr.mxu0 0.0
    %521 = vmatpush2.msra.mxu0 0.0
    %522 = vmatprep.subr.mxu0 0.0
    %523 = vmatpush2.msra.mxu0 0.0
    %524 = vmatprep.subr.mxu0 0.0
    %525 = vmatpush2.msra.mxu0 0.0
    %526 = vmatprep.subr.mxu0 0.0
    %527 = vmatpush2.msra.mxu0 0.0
    %528 = vmatprep.subr.mxu0 0.0
    %529 = vmatpush2.msra.mxu0 0.0
    %530 = vmatprep.subr.mxu0 0.0
    %531 = vmatpush2.msra.mxu0 0.0
    %532 = vmatprep.subr.mxu0 0.0
    %533 = vmatpush2.msra.mxu0 0.0
    %534 = vmatprep.subr.mxu0 0.0
    %535 = vmatpush2.msra.mxu0 0.0
    %536 = vmatprep.mubr.f32.mxu0 0.0
    %537 = vmatmul.mubr.f32.gmra.mxu0 %v470
    %v538 = vpop.f32.mrf.mxu0
    %v539 = vadd.f32 0.0, %v538
    %v540 = vpop.f32.mrf.mxu0
    %541 = vdwg.mxu0
    %542 = vst.msk [vmem:[#allocation3] sm:$0xff] %vm374, %v539
    %v543 = vld [vmem:[#allocation2] sm:$0xff]
    %v544 = vld [vmem:[#allocation2 + $0x8] sm:$0xff]
    %v545 = vld [vmem:[#allocation2 + $0x10] sm:$0xff]
    %547 = vrot.lane.b32.xlu0 %v543, 96
    %v548 = vpop.permute.xlu0 %547
    %550 = vrot.lane.b32.xlu0 %v544, 96
    %v551 = vpop.permute.xlu0 %550
    %v552 = vsel %vm374, %v548, 0
    %v554 = vsel %vm374, %v551, 0
    %556 = vmatprep.subr.mxu0 0.0
    %557 = vmatpush1.xpose.msra.mxu0 0.0
    %558 = vmatprep.subr.mxu0 0.0
    %559 = vmatpush1.xpose.msra.mxu0 0.0
    %560 = vmatprep.subr.mxu0 0.0
    %561 = vmatpush1.xpose.msra.mxu0 0.0
    %562 = vmatprep.subr.mxu0 0.0
    %563 = vmatpush1.xpose.msra.mxu0 0.0
    %564 = vmatprep.subr.mxu0 0.0
    %565 = vmatpush1.xpose.msra.mxu0 0.0
    %566 = vmatprep.subr.mxu0 0.0
    %567 = vmatpush1.xpose.msra.mxu0 0.0
    %568 = vmatprep.subr.mxu0 0.0
    %569 = vmatpush1.xpose.msra.mxu0 0.0
    %570 = vmatprep.subr.mxu0 0.0
    %571 = vmatpush1.xpose.msra.mxu0 0.0
    %572 = vmatprep.subr.mxu0 0.0
    %573 = vmatpush1.xpose.msra.mxu0 0.0
    %574 = vmatprep.subr.mxu0 0.0
    %575 = vmatpush1.xpose.msra.mxu0 0.0
    %576 = vmatprep.subr.mxu0 0.0
    %577 = vmatpush1.xpose.msra.mxu0 0.0
    %578 = vmatprep.subr.mxu0 0.0
    %579 = vmatpush1.xpose.msra.mxu0 0.0
    %580 = vmatprep.subr.mxu0 0.0
    %581 = vmatpush1.xpose.msra.mxu0 0.0
    %582 = vmatprep.subr.mxu0 0.0
    %583 = vmatpush1.xpose.msra.mxu0 0.0
    %584 = vmatprep.subr.mxu0 0.0
    %585 = vmatpush1.xpose.msra.mxu0 0.0
    %586 = vmatprep.subr.mxu0 0.0
    %587 = vmatpush1.xpose.msra.mxu0 %v554
    %588 = vmatprep.subr.mxu0 0.0
    %589 = vmatpush2.xpose.msra.mxu0 0.0
    %590 = vmatprep.subr.mxu0 0.0
    %591 = vmatpush2.xpose.msra.mxu0 0.0
    %592 = vmatprep.subr.mxu0 0.0
    %593 = vmatpush2.xpose.msra.mxu0 0.0
    %594 = vmatprep.subr.mxu0 0.0
    %595 = vmatpush2.xpose.msra.mxu0 0.0
    %596 = vmatprep.subr.mxu0 0.0
    %597 = vmatpush2.xpose.msra.mxu0 0.0
    %598 = vmatprep.subr.mxu0 0.0
    %599 = vmatpush2.xpose.msra.mxu0 0.0
    %600 = vmatprep.subr.mxu0 0.0
    %601 = vmatpush2.xpose.msra.mxu0 0.0
    %602 = vmatprep.subr.mxu0 0.0
    %603 = vmatpush2.xpose.msra.mxu0 0.0
    %604 = vmatprep.subr.mxu0 0.0
    %605 = vmatpush2.xpose.msra.mxu0 0.0
    %606 = vmatprep.subr.mxu0 0.0
    %607 = vmatpush2.xpose.msra.mxu0 0.0
    %608 = vmatprep.subr.mxu0 0.0
    %609 = vmatpush2.xpose.msra.mxu0 0.0
    %610 = vmatprep.subr.mxu0 0.0
    %611 = vmatpush2.xpose.msra.mxu0 0.0
    %612 = vmatprep.subr.mxu0 0.0
    %613 = vmatpush2.xpose.msra.mxu0 0.0
    %614 = vmatprep.subr.mxu0 0.0
    %615 = vmatpush2.xpose.msra.mxu0 0.0
    %616 = vmatprep.subr.mxu0 0.0
    %617 = vmatpush2.xpose.msra.mxu0 0.0
    %618 = vmatprep.subr.mxu0 0.0
    %619 = vmatpush2.xpose.msra.mxu0 0.0
    %620 = vmatprep.mubr.f32.mxu0 0.0
    %621 = vmatmul.mubr.f32.gmra.mxu0 %v552
    %v622 = vpop.f32.mrf.mxu0
    %v623 = vadd.f32 0.0, %v622
    %v624 = vpop.f32.mrf.mxu0
    %625 = vdwg.mxu0
    %v626 = vmul.f32 %v623, 0.17677669
    %v627 = vadd.f32 %v626, %v455
    %v628 = vsel %vm457, %v627, -inf
    %629 = vmax.xlane.f32.xlu0 %v628
    %v630 = vpop.xlane.xlu0 %629
    %v631 = vsub.f32 %v627, %v630
    %v632 = vmul.f32 %v631, 1.442695
    %v633 = vpow.pop %v632
    %v634 = vsel %vm457, %v633, 0.0
    %635 = vadd.xlane.f32.xlu0 %v634
    %v636 = vpop.xlane.xlu0 %635
    %v637 = vrcp.pop %v636
    %v638 = vmul.f32 %v633, %v637
    %640 = vrot.lane.b32.xlu0 %v545, 96
    %v641 = vpop.permute.xlu0 %640
    %v644 = vsel %vm457, %v638, 0
    %646 = vmatprep.subr.mxu0 0.0
    %647 = vmatpush1.msra.mxu0 0.0
    %648 = vmatprep.subr.mxu0 0.0
    %649 = vmatpush1.msra.mxu0 0.0
    %650 = vmatprep.subr.mxu0 0.0
    %651 = vmatpush1.msra.mxu0 0.0
    %652 = vmatprep.subr.mxu0 0.0
    %653 = vmatpush1.msra.mxu0 0.0
    %654 = vmatprep.subr.mxu0 0.0
    %655 = vmatpush1.msra.mxu0 0.0
    %656 = vmatprep.subr.mxu0 0.0
    %657 = vmatpush1.msra.mxu0 0.0
    %658 = vmatprep.subr.mxu0 0.0
    %659 = vmatpush1.msra.mxu0 0.0
    %660 = vmatprep.subr.mxu0 0.0
    %661 = vmatpush1.msra.mxu0 0.0
    %662 = vmatprep.subr.mxu0 0.0
    %663 = vmatpush1.msra.mxu0 0.0
    %664 = vmatprep.subr.mxu0 0.0
    %665 = vmatpush1.msra.mxu0 0.0
    %666 = vmatprep.subr.mxu0 0.0
    %667 = vmatpush1.msra.mxu0 0.0
    %668 = vmatprep.subr.mxu0 0.0
    %669 = vmatpush1.msra.mxu0 0.0
    %670 = vmatprep.subr.mxu0 0.0
    %671 = vmatpush1.msra.mxu0 0.0
    %672 = vmatprep.subr.mxu0 0.0
    %673 = vmatpush1.msra.mxu0 0.0
    %674 = vmatprep.subr.mxu0 0.0
    %675 = vmatpush1.msra.mxu0 0.0
    %676 = vmatprep.subr.mxu0 0.0
    %677 = vmatpush1.msra.mxu0 %v641
    %678 = vmatprep.subr.mxu0 0.0
    %679 = vmatpush2.msra.mxu0 0.0
    %680 = vmatprep.subr.mxu0 0.0
    %681 = vmatpush2.msra.mxu0 0.0
    %682 = vmatprep.subr.mxu0 0.0
    %683 = vmatpush2.msra.mxu0 0.0
    %684 = vmatprep.subr.mxu0 0.0
    %685 = vmatpush2.msra.mxu0 0.0
    %686 = vmatprep.subr.mxu0 0.0
    %687 = vmatpush2.msra.mxu0 0.0
    %688 = vmatprep.subr.mxu0 0.0
    %689 = vmatpush2.msra.mxu0 0.0
    %690 = vmatprep.subr.mxu0 0.0
    %691 = vmatpush2.msra.mxu0 0.0
    %692 = vmatprep.subr.mxu0 0.0
    %693 = vmatpush2.msra.mxu0 0.0
    %694 = vmatprep.subr.mxu0 0.0
    %695 = vmatpush2.msra.mxu0 0.0
    %696 = vmatprep.subr.mxu0 0.0
    %697 = vmatpush2.msra.mxu0 0.0
    %698 = vmatprep.subr.mxu0 0.0
    %699 = vmatpush2.msra.mxu0 0.0
    %700 = vmatprep.subr.mxu0 0.0
    %701 = vmatpush2.msra.mxu0 0.0
    %702 = vmatprep.subr.mxu0 0.0
    %703 = vmatpush2.msra.mxu0 0.0
    %704 = vmatprep.subr.mxu0 0.0
    %705 = vmatpush2.msra.mxu0 0.0
    %706 = vmatprep.subr.mxu0 0.0
    %707 = vmatpush2.msra.mxu0 0.0
    %708 = vmatprep.subr.mxu0 0.0
    %709 = vmatpush2.msra.mxu0 0.0
    %710 = vmatprep.mubr.f32.mxu0 0.0
    %711 = vmatmul.mubr.f32.gmra.mxu0 %v644
    %v712 = vpop.f32.mrf.mxu0
    %v713 = vadd.f32 0.0, %v712
    %v714 = vpop.f32.mrf.mxu0
    %715 = vdwg.mxu0
    %717 = vrot.lane.b32.xlu0 %v713, 32
    %v718 = vpop.permute.xlu0 %717
    %vm720 = vcmask 523520
    %721 = vst.msk [vmem:[#allocation3] sm:$0xff] %vm720, %v718
    %v722 = vld [vmem:[#allocation2] sm:$0xff]
    %v723 = vld [vmem:[#allocation2 + $0x8] sm:$0xff]
    %v724 = vld [vmem:[#allocation2 + $0x10] sm:$0xff]
    %726 = vrot.lane.b32.xlu0 %v722, 64
    %v727 = vpop.permute.xlu0 %726
    %729 = vrot.lane.b32.xlu0 %v723, 64
    %v730 = vpop.permute.xlu0 %729
    %v731 = vsel %vm374, %v727, 0
    %v733 = vsel %vm374, %v730, 0
    %735 = vmatprep.subr.mxu0 0.0
    %736 = vmatpush1.xpose.msra.mxu0 0.0
    %737 = vmatprep.subr.mxu0 0.0
    %738 = vmatpush1.xpose.msra.mxu0 0.0
    %739 = vmatprep.subr.mxu0 0.0
    %740 = vmatpush1.xpose.msra.mxu0 0.0
    %741 = vmatprep.subr.mxu0 0.0
    %742 = vmatpush1.xpose.msra.mxu0 0.0
    %743 = vmatprep.subr.mxu0 0.0
    %744 = vmatpush1.xpose.msra.mxu0 0.0
    %745 = vmatprep.subr.mxu0 0.0
    %746 = vmatpush1.xpose.msra.mxu0 0.0
    %747 = vmatprep.subr.mxu0 0.0
    %748 = vmatpush1.xpose.msra.mxu0 0.0
    %749 = vmatprep.subr.mxu0 0.0
    %750 = vmatpush1.xpose.msra.mxu0 0.0
    %751 = vmatprep.subr.mxu0 0.0
    %752 = vmatpush1.xpose.msra.mxu0 0.0
    %753 = vmatprep.subr.mxu0 0.0
    %754 = vmatpush1.xpose.msra.mxu0 0.0
    %755 = vmatprep.subr.mxu0 0.0
    %756 = vmatpush1.xpose.msra.mxu0 0.0
    %757 = vmatprep.subr.mxu0 0.0
    %758 = vmatpush1.xpose.msra.mxu0 0.0
    %759 = vmatprep.subr.mxu0 0.0
    %760 = vmatpush1.xpose.msra.mxu0 0.0
    %761 = vmatprep.subr.mxu0 0.0
    %762 = vmatpush1.xpose.msra.mxu0 0.0
    %763 = vmatprep.subr.mxu0 0.0
    %764 = vmatpush1.xpose.msra.mxu0 0.0
    %765 = vmatprep.subr.mxu0 0.0
    %766 = vmatpush1.xpose.msra.mxu0 %v733
    %767 = vmatprep.subr.mxu0 0.0
    %768 = vmatpush2.xpose.msra.mxu0 0.0
    %769 = vmatprep.subr.mxu0 0.0
    %770 = vmatpush2.xpose.msra.mxu0 0.0
    %771 = vmatprep.subr.mxu0 0.0
    %772 = vmatpush2.xpose.msra.mxu0 0.0
    %773 = vmatprep.subr.mxu0 0.0
    %774 = vmatpush2.xpose.msra.mxu0 0.0
    %775 = vmatprep.subr.mxu0 0.0
    %776 = vmatpush2.xpose.msra.mxu0 0.0
    %777 = vmatprep.subr.mxu0 0.0
    %778 = vmatpush2.xpose.msra.mxu0 0.0
    %779 = vmatprep.subr.mxu0 0.0
    %780 = vmatpush2.xpose.msra.mxu0 0.0
    %781 = vmatprep.subr.mxu0 0.0
    %782 = vmatpush2.xpose.msra.mxu0 0.0
    %783 = vmatprep.subr.mxu0 0.0
    %784 = vmatpush2.xpose.msra.mxu0 0.0
    %785 = vmatprep.subr.mxu0 0.0
    %786 = vmatpush2.xpose.msra.mxu0 0.0
    %787 = vmatprep.subr.mxu0 0.0
    %788 = vmatpush2.xpose.msra.mxu0 0.0
    %789 = vmatprep.subr.mxu0 0.0
    %790 = vmatpush2.xpose.msra.mxu0 0.0
    %791 = vmatprep.subr.mxu0 0.0
    %792 = vmatpush2.xpose.msra.mxu0 0.0
    %793 = vmatprep.subr.mxu0 0.0
    %794 = vmatpush2.xpose.msra.mxu0 0.0
    %795 = vmatprep.subr.mxu0 0.0
    %796 = vmatpush2.xpose.msra.mxu0 0.0
    %797 = vmatprep.subr.mxu0 0.0
    %798 = vmatpush2.xpose.msra.mxu0 0.0
    %799 = vmatprep.mubr.f32.mxu0 0.0
    %800 = vmatmul.mubr.f32.gmra.mxu0 %v731
    %v801 = vpop.f32.mrf.mxu0
    %v802 = vadd.f32 0.0, %v801
    %v803 = vpop.f32.mrf.mxu0
    %804 = vdwg.mxu0
    %v805 = vmul.f32 %v802, 0.17677669
    %v806 = vadd.f32 %v805, %v455
    %v807 = vsel %vm457, %v806, -inf
    %808 = vmax.xlane.f32.xlu0 %v807
    %v809 = vpop.xlane.xlu0 %808
    %v810 = vsub.f32 %v806, %v809
    %v811 = vmul.f32 %v810, 1.442695
    %v812 = vpow.pop %v811
    %v813 = vsel %vm457, %v812, 0.0
    %814 = vadd.xlane.f32.xlu0 %v813
    %v815 = vpop.xlane.xlu0 %814
    %v816 = vrcp.pop %v815
    %v817 = vmul.f32 %v812, %v816
    %819 = vrot.lane.b32.xlu0 %v724, 64
    %v820 = vpop.permute.xlu0 %819
    %v823 = vsel %vm457, %v817, 0
    %825 = vmatprep.subr.mxu0 0.0
    %826 = vmatpush1.msra.mxu0 0.0
    %827 = vmatprep.subr.mxu0 0.0
    %828 = vmatpush1.msra.mxu0 0.0
    %829 = vmatprep.subr.mxu0 0.0
    %830 = vmatpush1.msra.mxu0 0.0
    %831 = vmatprep.subr.mxu0 0.0
    %832 = vmatpush1.msra.mxu0 0.0
    %833 = vmatprep.subr.mxu0 0.0
    %834 = vmatpush1.msra.mxu0 0.0
    %835 = vmatprep.subr.mxu0 0.0
    %836 = vmatpush1.msra.mxu0 0.0
    %837 = vmatprep.subr.mxu0 0.0
    %838 = vmatpush1.msra.mxu0 0.0
    %839 = vmatprep.subr.mxu0 0.0
    %840 = vmatpush1.msra.mxu0 0.0
    %841 = vmatprep.subr.mxu0 0.0
    %842 = vmatpush1.msra.mxu0 0.0
    %843 = vmatprep.subr.mxu0 0.0
    %844 = vmatpush1.msra.mxu0 0.0
    %845 = vmatprep.subr.mxu0 0.0
    %846 = vmatpush1.msra.mxu0 0.0
    %847 = vmatprep.subr.mxu0 0.0
    %848 = vmatpush1.msra.mxu0 0.0
    %849 = vmatprep.subr.mxu0 0.0
    %850 = vmatpush1.msra.mxu0 0.0
    %851 = vmatprep.subr.mxu0 0.0
    %852 = vmatpush1.msra.mxu0 0.0
    %853 = vmatprep.subr.mxu0 0.0
    %854 = vmatpush1.msra.mxu0 0.0
    %855 = vmatprep.subr.mxu0 0.0
    %856 = vmatpush1.msra.mxu0 %v820
    %857 = vmatprep.subr.mxu0 0.0
    %858 = vmatpush2.msra.mxu0 0.0
    %859 = vmatprep.subr.mxu0 0.0
    %860 = vmatpush2.msra.mxu0 0.0
    %861 = vmatprep.subr.mxu0 0.0
    %862 = vmatpush2.msra.mxu0 0.0
    %863 = vmatprep.subr.mxu0 0.0
    %864 = vmatpush2.msra.mxu0 0.0
    %865 = vmatprep.subr.mxu0 0.0
    %866 = vmatpush2.msra.mxu0 0.0
    %867 = vmatprep.subr.mxu0 0.0
    %868 = vmatpush2.msra.mxu0 0.0
    %869 = vmatprep.subr.mxu0 0.0
    %870 = vmatpush2.msra.mxu0 0.0
    %871 = vmatprep.subr.mxu0 0.0
    %872 = vmatpush2.msra.mxu0 0.0
    %873 = vmatprep.subr.mxu0 0.0
    %874 = vmatpush2.msra.mxu0 0.0
    %875 = vmatprep.subr.mxu0 0.0
    %876 = vmatpush2.msra.mxu0 0.0
    %877 = vmatprep.subr.mxu0 0.0
    %878 = vmatpush2.msra.mxu0 0.0
    %879 = vmatprep.subr.mxu0 0.0
    %880 = vmatpush2.msra.mxu0 0.0
    %881 = vmatprep.subr.mxu0 0.0
    %882 = vmatpush2.msra.mxu0 0.0
    %883 = vmatprep.subr.mxu0 0.0
    %884 = vmatpush2.msra.mxu0 0.0
    %885 = vmatprep.subr.mxu0 0.0
    %886 = vmatpush2.msra.mxu0 0.0
    %887 = vmatprep.subr.mxu0 0.0
    %888 = vmatpush2.msra.mxu0 0.0
    %889 = vmatprep.mubr.f32.mxu0 0.0
    %890 = vmatmul.mubr.f32.gmra.mxu0 %v823
    %v891 = vpop.f32.mrf.mxu0
    %v892 = vadd.f32 0.0, %v891
    %v893 = vpop.f32.mrf.mxu0
    %894 = vdwg.mxu0
    %896 = vrot.lane.b32.xlu0 %v892, 64
    %v897 = vpop.permute.xlu0 %896
    %vm899 = vcmask 785920
    %900 = vst.msk [vmem:[#allocation3] sm:$0xff] %vm899, %v897
    %v901 = vld [vmem:[#allocation2] sm:$0xff]
    %v902 = vld [vmem:[#allocation2 + $0x8] sm:$0xff]
    %v903 = vld [vmem:[#allocation2 + $0x10] sm:$0xff]
    %905 = vrot.lane.b32.xlu0 %v901, 32
    %v906 = vpop.permute.xlu0 %905
    %908 = vrot.lane.b32.xlu0 %v902, 32
    %v909 = vpop.permute.xlu0 %908
    %v910 = vsel %vm374, %v906, 0
    %v912 = vsel %vm374, %v909, 0
    %914 = vmatprep.subr.mxu0 0.0
    %915 = vmatpush1.xpose.msra.mxu0 0.0
    %916 = vmatprep.subr.mxu0 0.0
    %917 = vmatpush1.xpose.msra.mxu0 0.0
    %918 = vmatprep.subr.mxu0 0.0
    %919 = vmatpush1.xpose.msra.mxu0 0.0
    %920 = vmatprep.subr.mxu0 0.0
    %921 = vmatpush1.xpose.msra.mxu0 0.0
    %922 = vmatprep.subr.mxu0 0.0
    %923 = vmatpush1.xpose.msra.mxu0 0.0
    %924 = vmatprep.subr.mxu0 0.0
    %925 = vmatpush1.xpose.msra.mxu0 0.0
    %926 = vmatprep.subr.mxu0 0.0
    %927 = vmatpush1.xpose.msra.mxu0 0.0
    %928 = vmatprep.subr.mxu0 0.0
    %929 = vmatpush1.xpose.msra.mxu0 0.0
    %930 = vmatprep.subr.mxu0 0.0
    %931 = vmatpush1.xpose.msra.mxu0 0.0
    %932 = vmatprep.subr.mxu0 0.0
    %933 = vmatpush1.xpose.msra.mxu0 0.0
    %934 = vmatprep.subr.mxu0 0.0
    %935 = vmatpush1.xpose.msra.mxu0 0.0
    %936 = vmatprep.subr.mxu0 0.0
    %937 = vmatpush1.xpose.msra.mxu0 0.0
    %938 = vmatprep.subr.mxu0 0.0
    %939 = vmatpush1.xpose.msra.mxu0 0.0
    %940 = vmatprep.subr.mxu0 0.0
    %941 = vmatpush1.xpose.msra.mxu0 0.0
    %942 = vmatprep.subr.mxu0 0.0
    %943 = vmatpush1.xpose.msra.mxu0 0.0
    %944 = vmatprep.subr.mxu0 0.0
    %945 = vmatpush1.xpose.msra.mxu0 %v912
    %946 = vmatprep.subr.mxu0 0.0
    %947 = vmatpush2.xpose.msra.mxu0 0.0
    %948 = vmatprep.subr.mxu0 0.0
    %949 = vmatpush2.xpose.msra.mxu0 0.0
    %950 = vmatprep.subr.mxu0 0.0
    %951 = vmatpush2.xpose.msra.mxu0 0.0
    %952 = vmatprep.subr.mxu0 0.0
    %953 = vmatpush2.xpose.msra.mxu0 0.0
    %954 = vmatprep.subr.mxu0 0.0
    %955 = vmatpush2.xpose.msra.mxu0 0.0
    %956 = vmatprep.subr.mxu0 0.0
    %957 = vmatpush2.xpose.msra.mxu0 0.0
    %958 = vmatprep.subr.mxu0 0.0
    %959 = vmatpush2.xpose.msra.mxu0 0.0
    %960 = vmatprep.subr.mxu0 0.0
    %961 = vmatpush2.xpose.msra.mxu0 0.0
    %962 = vmatprep.subr.mxu0 0.0
    %963 = vmatpush2.xpose.msra.mxu0 0.0
    %964 = vmatprep.subr.mxu0 0.0
    %965 = vmatpush2.xpose.msra.mxu0 0.0
    %966 = vmatprep.subr.mxu0 0.0
    %967 = vmatpush2.xpose.msra.mxu0 0.0
    %968 = vmatprep.subr.mxu0 0.0
    %969 = vmatpush2.xpose.msra.mxu0 0.0
    %970 = vmatprep.subr.mxu0 0.0
    %971 = vmatpush2.xpose.msra.mxu0 0.0
    %972 = vmatprep.subr.mxu0 0.0
    %973 = vmatpush2.xpose.msra.mxu0 0.0
    %974 = vmatprep.subr.mxu0 0.0
    %975 = vmatpush2.xpose.msra.mxu0 0.0
    %976 = vmatprep.subr.mxu0 0.0
    %977 = vmatpush2.xpose.msra.mxu0 0.0
    %978 = vmatprep.mubr.f32.mxu0 0.0
    %979 = vmatmul.mubr.f32.gmra.mxu0 %v910
    %v980 = vpop.f32.mrf.mxu0
    %v981 = vadd.f32 0.0, %v980
    %v982 = vpop.f32.mrf.mxu0
    %983 = vdwg.mxu0
    %v984 = vmul.f32 %v981, 0.17677669
    %v985 = vadd.f32 %v984, %v455
    %v986 = vsel %vm457, %v985, -inf
    %987 = vmax.xlane.f32.xlu0 %v986
    %v988 = vpop.xlane.xlu0 %987
    %v989 = vsub.f32 %v985, %v988
    %v990 = vmul.f32 %v989, 1.442695
    %v991 = vpow.pop %v990
    %v992 = vsel %vm457, %v991, 0.0
    %993 = vadd.xlane.f32.xlu0 %v992
    %v994 = vpop.xlane.xlu0 %993
    %v995 = vrcp.pop %v994
    %v996 = vmul.f32 %v991, %v995
    %998 = vrot.lane.b32.xlu0 %v903, 32
    %v999 = vpop.permute.xlu0 %998
    %v1002 = vsel %vm457, %v996, 0
    %1004 = vmatprep.subr.mxu0 0.0
    %1005 = vmatpush1.msra.mxu0 0.0
    %1006 = vmatprep.subr.mxu0 0.0
    %1007 = vmatpush1.msra.mxu0 0.0
    %1008 = vmatprep.subr.mxu0 0.0
    %1009 = vmatpush1.msra.mxu0 0.0
    %1010 = vmatprep.subr.mxu0 0.0
    %1011 = vmatpush1.msra.mxu0 0.0
    %1012 = vmatprep.subr.mxu0 0.0
    %1013 = vmatpush1.msra.mxu0 0.0
    %1014 = vmatprep.subr.mxu0 0.0
    %1015 = vmatpush1.msra.mxu0 0.0
    %1016 = vmatprep.subr.mxu0 0.0
    %1017 = vmatpush1.msra.mxu0 0.0
    %1018 = vmatprep.subr.mxu0 0.0
    %1019 = vmatpush1.msra.mxu0 0.0
    %1020 = vmatprep.subr.mxu0 0.0
    %1021 = vmatpush1.msra.mxu0 0.0
    %1022 = vmatprep.subr.mxu0 0.0
    %1023 = vmatpush1.msra.mxu0 0.0
    %1024 = vmatprep.subr.mxu0 0.0
    %1025 = vmatpush1.msra.mxu0 0.0
    %1026 = vmatprep.subr.mxu0 0.0
    %1027 = vmatpush1.msra.mxu0 0.0
    %1028 = vmatprep.subr.mxu0 0.0
    %1029 = vmatpush1.msra.mxu0 0.0
    %1030 = vmatprep.subr.mxu0 0.0
    %1031 = vmatpush1.msra.mxu0 0.0
    %1032 = vmatprep.subr.mxu0 0.0
    %1033 = vmatpush1.msra.mxu0 0.0
    %1034 = vmatprep.subr.mxu0 0.0
    %1035 = vmatpush1.msra.mxu0 %v999
    %1036 = vmatprep.subr.mxu0 0.0
    %1037 = vmatpush2.msra.mxu0 0.0
    %1038 = vmatprep.subr.mxu0 0.0
    %1039 = vmatpush2.msra.mxu0 0.0
    %1040 = vmatprep.subr.mxu0 0.0
    %1041 = vmatpush2.msra.mxu0 0.0
    %1042 = vmatprep.subr.mxu0 0.0
    %1043 = vmatpush2.msra.mxu0 0.0
    %1044 = vmatprep.subr.mxu0 0.0
    %1045 = vmatpush2.msra.mxu0 0.0
    %1046 = vmatprep.subr.mxu0 0.0
    %1047 = vmatpush2.msra.mxu0 0.0
    %1048 = vmatprep.subr.mxu0 0.0
    %1049 = vmatpush2.msra.mxu0 0.0
    %1050 = vmatprep.subr.mxu0 0.0
    %1051 = vmatpush2.msra.mxu0 0.0
    %1052 = vmatprep.subr.mxu0 0.0
    %1053 = vmatpush2.msra.mxu0 0.0
    %1054 = vmatprep.subr.mxu0 0.0
    %1055 = vmatpush2.msra.mxu0 0.0
    %1056 = vmatprep.subr.mxu0 0.0
    %1057 = vmatpush2.msra.mxu0 0.0
    %1058 = vmatprep.subr.mxu0 0.0
    %1059 = vmatpush2.msra.mxu0 0.0
    %1060 = vmatprep.subr.mxu0 0.0
    %1061 = vmatpush2.msra.mxu0 0.0
    %1062 = vmatprep.subr.mxu0 0.0
    %1063 = vmatpush2.msra.mxu0 0.0
    %1064 = vmatprep.subr.mxu0 0.0
    %1065 = vmatpush2.msra.mxu0 0.0
    %1066 = vmatprep.subr.mxu0 0.0
    %1067 = vmatpush2.msra.mxu0 0.0
    %1068 = vmatprep.mubr.f32.mxu0 0.0
    %1069 = vmatmul.mubr.f32.gmra.mxu0 %v1002
    %v1070 = vpop.f32.mrf.mxu0
    %v1071 = vadd.f32 0.0, %v1070
    %v1072 = vpop.f32.mrf.mxu0
    %1073 = vdwg.mxu0
    %1075 = vrot.lane.b32.xlu0 %v1071, 96
    %v1076 = vpop.permute.xlu0 %1075
    %vm1078 = vcmask 1048320
    %1079 = vst.msk [vmem:[#allocation3] sm:$0xff] %vm1078, %v1076
    %v1080 = vld [vmem:[#allocation2 + $0x18] sm:$0xff]
    %v1081 = vld [vmem:[#allocation2 + $0x20] sm:$0xff]
    %v1082 = vld [vmem:[#allocation2 + $0x28] sm:$0xff]
    %v1084 = vsel %vm374, %v1080, 0
    %v1087 = vsel %vm374, %v1081, 0
    %1089 = vmatprep.subr.mxu0 0.0
    %1090 = vmatpush1.xpose.msra.mxu0 0.0
    %1091 = vmatprep.subr.mxu0 0.0
    %1092 = vmatpush1.xpose.msra.mxu0 0.0
    %1093 = vmatprep.subr.mxu0 0.0
    %1094 = vmatpush1.xpose.msra.mxu0 0.0
    %1095 = vmatprep.subr.mxu0 0.0
    %1096 = vmatpush1.xpose.msra.mxu0 0.0
    %1097 = vmatprep.subr.mxu0 0.0
    %1098 = vmatpush1.xpose.msra.mxu0 0.0
    %1099 = vmatprep.subr.mxu0 0.0
    %1100 = vmatpush1.xpose.msra.mxu0 0.0
    %1101 = vmatprep.subr.mxu0 0.0
    %1102 = vmatpush1.xpose.msra.mxu0 0.0
    %1103 = vmatprep.subr.mxu0 0.0
    %1104 = vmatpush1.xpose.msra.mxu0 0.0
    %1105 = vmatprep.subr.mxu0 0.0
    %1106 = vmatpush1.xpose.msra.mxu0 0.0
    %1107 = vmatprep.subr.mxu0 0.0
    %1108 = vmatpush1.xpose.msra.mxu0 0.0
    %1109 = vmatprep.subr.mxu0 0.0
    %1110 = vmatpush1.xpose.msra.mxu0 0.0
    %1111 = vmatprep.subr.mxu0 0.0
    %1112 = vmatpush1.xpose.msra.mxu0 0.0
    %1113 = vmatprep.subr.mxu0 0.0
    %1114 = vmatpush1.xpose.msra.mxu0 0.0
    %1115 = vmatprep.subr.mxu0 0.0
    %1116 = vmatpush1.xpose.msra.mxu0 0.0
    %1117 = vmatprep.subr.mxu0 0.0
    %1118 = vmatpush1.xpose.msra.mxu0 0.0
    %1119 = vmatprep.subr.mxu0 0.0
    %1120 = vmatpush1.xpose.msra.mxu0 %v1087
    %1121 = vmatprep.subr.mxu0 0.0
    %1122 = vmatpush2.xpose.msra.mxu0 0.0
    %1123 = vmatprep.subr.mxu0 0.0
    %1124 = vmatpush2.xpose.msra.mxu0 0.0
    %1125 = vmatprep.subr.mxu0 0.0
    %1126 = vmatpush2.xpose.msra.mxu0 0.0
    %1127 = vmatprep.subr.mxu0 0.0
    %1128 = vmatpush2.xpose.msra.mxu0 0.0
    %1129 = vmatprep.subr.mxu0 0.0
    %1130 = vmatpush2.xpose.msra.mxu0 0.0
    %1131 = vmatprep.subr.mxu0 0.0
    %1132 = vmatpush2.xpose.msra.mxu0 0.0
    %1133 = vmatprep.subr.mxu0 0.0
    %1134 = vmatpush2.xpose.msra.mxu0 0.0
    %1135 = vmatprep.subr.mxu0 0.0
    %1136 = vmatpush2.xpose.msra.mxu0 0.0
    %1137 = vmatprep.subr.mxu0 0.0
    %1138 = vmatpush2.xpose.msra.mxu0 0.0
    %1139 = vmatprep.subr.mxu0 0.0
    %1140 = vmatpush2.xpose.msra.mxu0 0.0
    %1141 = vmatprep.subr.mxu0 0.0
    %1142 = vmatpush2.xpose.msra.mxu0 0.0
    %1143 = vmatprep.subr.mxu0 0.0
    %1144 = vmatpush2.xpose.msra.mxu0 0.0
    %1145 = vmatprep.subr.mxu0 0.0
    %1146 = vmatpush2.xpose.msra.mxu0 0.0
    %1147 = vmatprep.subr.mxu0 0.0
    %1148 = vmatpush2.xpose.msra.mxu0 0.0
    %1149 = vmatprep.subr.mxu0 0.0
    %1150 = vmatpush2.xpose.msra.mxu0 0.0
    %1151 = vmatprep.subr.mxu0 0.0
    %1152 = vmatpush2.xpose.msra.mxu0 0.0
    %1153 = vmatprep.mubr.f32.mxu0 0.0
    %1154 = vmatmul.mubr.f32.gmra.mxu0 %v1084
    %v1155 = vpop.f32.mrf.mxu0
    %v1156 = vadd.f32 0.0, %v1155
    %v1157 = vpop.f32.mrf.mxu0
    %1158 = vdwg.mxu0
    %v1159 = vmul.f32 %v1156, 0.17677669
    %v1160 = vlaneseq
    %v1161 = vshrl.u32 %v1160, 7
    %v1162 = vsub.s32 0, %v1161
    %v1163 = vrot.slane %v104, %v1162
    %v1164 = vadd.f32 %v1159, %v1163
    %v1165 = vsel %vm457, %v1164, -inf
    %1166 = vmax.xlane.f32.xlu0 %v1165
    %v1167 = vpop.xlane.xlu0 %1166
    %v1168 = vsub.f32 %v1164, %v1167
    %v1169 = vmul.f32 %v1168, 1.442695
    %v1170 = vpow.pop %v1169
    %v1171 = vsel %vm457, %v1170, 0.0
    %1172 = vadd.xlane.f32.xlu0 %v1171
    %v1173 = vpop.xlane.xlu0 %1172
    %v1174 = vrcp.pop %v1173
    %v1175 = vmul.f32 %v1170, %v1174
    %v1177 = vsel %vm457, %v1175, 0
    %1179 = vmatprep.subr.mxu0 0.0
    %1180 = vmatpush1.msra.mxu0 0.0
    %1181 = vmatprep.subr.mxu0 0.0
    %1182 = vmatpush1.msra.mxu0 0.0
    %1183 = vmatprep.subr.mxu0 0.0
    %1184 = vmatpush1.msra.mxu0 0.0
    %1185 = vmatprep.subr.mxu0 0.0
    %1186 = vmatpush1.msra.mxu0 0.0
    %1187 = vmatprep.subr.mxu0 0.0
    %1188 = vmatpush1.msra.mxu0 0.0
    %1189 = vmatprep.subr.mxu0 0.0
    %1190 = vmatpush1.msra.mxu0 0.0
    %1191 = vmatprep.subr.mxu0 0.0
    %1192 = vmatpush1.msra.mxu0 0.0
    %1193 = vmatprep.subr.mxu0 0.0
    %1194 = vmatpush1.msra.mxu0 0.0
    %1195 = vmatprep.subr.mxu0 0.0
    %1196 = vmatpush1.msra.mxu0 0.0
    %1197 = vmatprep.subr.mxu0 0.0
    %1198 = vmatpush1.msra.mxu0 0.0
    %1199 = vmatprep.subr.mxu0 0.0
    %1200 = vmatpush1.msra.mxu0 0.0
    %1201 = vmatprep.subr.mxu0 0.0
    %1202 = vmatpush1.msra.mxu0 0.0
    %1203 = vmatprep.subr.mxu0 0.0
    %1204 = vmatpush1.msra.mxu0 0.0
    %1205 = vmatprep.subr.mxu0 0.0
    %1206 = vmatpush1.msra.mxu0 0.0
    %1207 = vmatprep.subr.mxu0 0.0
    %1208 = vmatpush1.msra.mxu0 0.0
    %1209 = vmatprep.subr.mxu0 0.0
    %1210 = vmatpush1.msra.mxu0 %v1082
    %1211 = vmatprep.subr.mxu0 0.0
    %1212 = vmatpush2.msra.mxu0 0.0
    %1213 = vmatprep.subr.mxu0 0.0
    %1214 = vmatpush2.msra.mxu0 0.0
    %1215 = vmatprep.subr.mxu0 0.0
    %1216 = vmatpush2.msra.mxu0 0.0
    %1217 = vmatprep.subr.mxu0 0.0
    %1218 = vmatpush2.msra.mxu0 0.0
    %1219 = vmatprep.subr.mxu0 0.0
    %1220 = vmatpush2.msra.mxu0 0.0
    %1221 = vmatprep.subr.mxu0 0.0
    %1222 = vmatpush2.msra.mxu0 0.0
    %1223 = vmatprep.subr.mxu0 0.0
    %1224 = vmatpush2.msra.mxu0 0.0
    %1225 = vmatprep.subr.mxu0 0.0
    %1226 = vmatpush2.msra.mxu0 0.0
    %1227 = vmatprep.subr.mxu0 0.0
    %1228 = vmatpush2.msra.mxu0 0.0
    %1229 = vmatprep.subr.mxu0 0.0
    %1230 = vmatpush2.msra.mxu0 0.0
    %1231 = vmatprep.subr.mxu0 0.0
    %1232 = vmatpush2.msra.mxu0 0.0
    %1233 = vmatprep.subr.mxu0 0.0
    %1234 = vmatpush2.msra.mxu0 0.0
    %1235 = vmatprep.subr.mxu0 0.0
    %1236 = vmatpush2.msra.mxu0 0.0
    %1237 = vmatprep.subr.mxu0 0.0
    %1238 = vmatpush2.msra.mxu0 0.0
    %1239 = vmatprep.subr.mxu0 0.0
    %1240 = vmatpush2.msra.mxu0 0.0
    %1241 = vmatprep.subr.mxu0 0.0
    %1242 = vmatpush2.msra.mxu0 0.0
    %1243 = vmatprep.mubr.f32.mxu0 0.0
    %1244 = vmatmul.mubr.f32.gmra.mxu0 %v1177
    %v1245 = vpop.f32.mrf.mxu0
    %v1246 = vadd.f32 0.0, %v1245
    %v1247 = vpop.f32.mrf.mxu0
    %1248 = vdwg.mxu0
    %1249 = vst.msk [vmem:[#allocation3 + $0x8] sm:$0xff] %vm374, %v1246
    %v1250 = vld [vmem:[#allocation2 + $0x18] sm:$0xff]
    %v1251 = vld [vmem:[#allocation2 + $0x20] sm:$0xff]
    %v1252 = vld [vmem:[#allocation2 + $0x28] sm:$0xff]
    %1254 = vrot.lane.b32.xlu0 %v1250, 96
    %v1255 = vpop.permute.xlu0 %1254
    %1257 = vrot.lane.b32.xlu0 %v1251, 96
    %v1258 = vpop.permute.xlu0 %1257
    %v1259 = vsel %vm374, %v1255, 0
    %v1261 = vsel %vm374, %v1258, 0
    %1263 = vmatprep.subr.mxu0 0.0
    %1264 = vmatpush1.xpose.msra.mxu0 0.0
    %1265 = vmatprep.subr.mxu0 0.0
    %1266 = vmatpush1.xpose.msra.mxu0 0.0
    %1267 = vmatprep.subr.mxu0 0.0
    %1268 = vmatpush1.xpose.msra.mxu0 0.0
    %1269 = vmatprep.subr.mxu0 0.0
    %1270 = vmatpush1.xpose.msra.mxu0 0.0
    %1271 = vmatprep.subr.mxu0 0.0
    %1272 = vmatpush1.xpose.msra.mxu0 0.0
    %1273 = vmatprep.subr.mxu0 0.0
    %1274 = vmatpush1.xpose.msra.mxu0 0.0
    %1275 = vmatprep.subr.mxu0 0.0
    %1276 = vmatpush1.xpose.msra.mxu0 0.0
    %1277 = vmatprep.subr.mxu0 0.0
    %1278 = vmatpush1.xpose.msra.mxu0 0.0
    %1279 = vmatprep.subr.mxu0 0.0
    %1280 = vmatpush1.xpose.msra.mxu0 0.0
    %1281 = vmatprep.subr.mxu0 0.0
    %1282 = vmatpush1.xpose.msra.mxu0 0.0
    %1283 = vmatprep.subr.mxu0 0.0
    %1284 = vmatpush1.xpose.msra.mxu0 0.0
    %1285 = vmatprep.subr.mxu0 0.0
    %1286 = vmatpush1.xpose.msra.mxu0 0.0
    %1287 = vmatprep.subr.mxu0 0.0
    %1288 = vmatpush1.xpose.msra.mxu0 0.0
    %1289 = vmatprep.subr.mxu0 0.0
    %1290 = vmatpush1.xpose.msra.mxu0 0.0
    %1291 = vmatprep.subr.mxu0 0.0
    %1292 = vmatpush1.xpose.msra.mxu0 0.0
    %1293 = vmatprep.subr.mxu0 0.0
    %1294 = vmatpush1.xpose.msra.mxu0 %v1261
    %1295 = vmatprep.subr.mxu0 0.0
    %1296 = vmatpush2.xpose.msra.mxu0 0.0
    %1297 = vmatprep.subr.mxu0 0.0
    %1298 = vmatpush2.xpose.msra.mxu0 0.0
    %1299 = vmatprep.subr.mxu0 0.0
    %1300 = vmatpush2.xpose.msra.mxu0 0.0
    %1301 = vmatprep.subr.mxu0 0.0
    %1302 = vmatpush2.xpose.msra.mxu0 0.0
    %1303 = vmatprep.subr.mxu0 0.0
    %1304 = vmatpush2.xpose.msra.mxu0 0.0
    %1305 = vmatprep.subr.mxu0 0.0
    %1306 = vmatpush2.xpose.msra.mxu0 0.0
    %1307 = vmatprep.subr.mxu0 0.0
    %1308 = vmatpush2.xpose.msra.mxu0 0.0
    %1309 = vmatprep.subr.mxu0 0.0
    %1310 = vmatpush2.xpose.msra.mxu0 0.0
    %1311 = vmatprep.subr.mxu0 0.0
    %1312 = vmatpush2.xpose.msra.mxu0 0.0
    %1313 = vmatprep.subr.mxu0 0.0
    %1314 = vmatpush2.xpose.msra.mxu0 0.0
    %1315 = vmatprep.subr.mxu0 0.0
    %1316 = vmatpush2.xpose.msra.mxu0 0.0
    %1317 = vmatprep.subr.mxu0 0.0
    %1318 = vmatpush2.xpose.msra.mxu0 0.0
    %1319 = vmatprep.subr.mxu0 0.0
    %1320 = vmatpush2.xpose.msra.mxu0 0.0
    %1321 = vmatprep.subr.mxu0 0.0
    %1322 = vmatpush2.xpose.msra.mxu0 0.0
    %1323 = vmatprep.subr.mxu0 0.0
    %1324 = vmatpush2.xpose.msra.mxu0 0.0
    %1325 = vmatprep.subr.mxu0 0.0
    %1326 = vmatpush2.xpose.msra.mxu0 0.0
    %1327 = vmatprep.mubr.f32.mxu0 0.0
    %1328 = vmatmul.mubr.f32.gmra.mxu0 %v1259
    %v1329 = vpop.f32.mrf.mxu0
    %v1330 = vadd.f32 0.0, %v1329
    %v1331 = vpop.f32.mrf.mxu0
    %1332 = vdwg.mxu0
    %v1333 = vmul.f32 %v1330, 0.17677669
    %v1334 = vadd.f32 %v1333, %v1163
    %v1335 = vsel %vm457, %v1334, -inf
    %1336 = vmax.xlane.f32.xlu0 %v1335
    %v1337 = vpop.xlane.xlu0 %1336
    %v1338 = vsub.f32 %v1334, %v1337
    %v1339 = vmul.f32 %v1338, 1.442695
    %v1340 = vpow.pop %v1339
    %v1341 = vsel %vm457, %v1340, 0.0
    %1342 = vadd.xlane.f32.xlu0 %v1341
    %v1343 = vpop.xlane.xlu0 %1342
    %v1344 = vrcp.pop %v1343
    %v1345 = vmul.f32 %v1340, %v1344
    %1347 = vrot.lane.b32.xlu0 %v1252, 96
    %v1348 = vpop.permute.xlu0 %1347
    %v1351 = vsel %vm457, %v1345, 0
    %1353 = vmatprep.subr.mxu0 0.0
    %1354 = vmatpush1.msra.mxu0 0.0
    %1355 = vmatprep.subr.mxu0 0.0
    %1356 = vmatpush1.msra.mxu0 0.0
    %1357 = vmatprep.subr.mxu0 0.0
    %1358 = vmatpush1.msra.mxu0 0.0
    %1359 = vmatprep.subr.mxu0 0.0
    %1360 = vmatpush1.msra.mxu0 0.0
    %1361 = vmatprep.subr.mxu0 0.0
    %1362 = vmatpush1.msra.mxu0 0.0
    %1363 = vmatprep.subr.mxu0 0.0
    %1364 = vmatpush1.msra.mxu0 0.0
    %1365 = vmatprep.subr.mxu0 0.0
    %1366 = vmatpush1.msra.mxu0 0.0
    %1367 = vmatprep.subr.mxu0 0.0
    %1368 = vmatpush1.msra.mxu0 0.0
    %1369 = vmatprep.subr.mxu0 0.0
    %1370 = vmatpush1.msra.mxu0 0.0
    %1371 = vmatprep.subr.mxu0 0.0
    %1372 = vmatpush1.msra.mxu0 0.0
    %1373 = vmatprep.subr.mxu0 0.0
    %1374 = vmatpush1.msra.mxu0 0.0
    %1375 = vmatprep.subr.mxu0 0.0
    %1376 = vmatpush1.msra.mxu0 0.0
    %1377 = vmatprep.subr.mxu0 0.0
    %1378 = vmatpush1.msra.mxu0 0.0
    %1379 = vmatprep.subr.mxu0 0.0
    %1380 = vmatpush1.msra.mxu0 0.0
    %1381 = vmatprep.subr.mxu0 0.0
    %1382 = vmatpush1.msra.mxu0 0.0
    %1383 = vmatprep.subr.mxu0 0.0
    %1384 = vmatpush1.msra.mxu0 %v1348
    %1385 = vmatprep.subr.mxu0 0.0
    %1386 = vmatpush2.msra.mxu0 0.0
    %1387 = vmatprep.subr.mxu0 0.0
    %1388 = vmatpush2.msra.mxu0 0.0
    %1389 = vmatprep.subr.mxu0 0.0
    %1390 = vmatpush2.msra.mxu0 0.0
    %1391 = vmatprep.subr.mxu0 0.0
    %1392 = vmatpush2.msra.mxu0 0.0
    %1393 = vmatprep.subr.mxu0 0.0
    %1394 = vmatpush2.msra.mxu0 0.0
    %1395 = vmatprep.subr.mxu0 0.0
    %1396 = vmatpush2.msra.mxu0 0.0
    %1397 = vmatprep.subr.mxu0 0.0
    %1398 = vmatpush2.msra.mxu0 0.0
    %1399 = vmatprep.subr.mxu0 0.0
    %1400 = vmatpush2.msra.mxu0 0.0
    %1401 = vmatprep.subr.mxu0 0.0
    %1402 = vmatpush2.msra.mxu0 0.0
    %1403 = vmatprep.subr.mxu0 0.0
    %1404 = vmatpush2.msra.mxu0 0.0
    %1405 = vmatprep.subr.mxu0 0.0
    %1406 = vmatpush2.msra.mxu0 0.0
    %1407 = vmatprep.subr.mxu0 0.0
    %1408 = vmatpush2.msra.mxu0 0.0
    %1409 = vmatprep.subr.mxu0 0.0
    %1410 = vmatpush2.msra.mxu0 0.0
    %1411 = vmatprep.subr.mxu0 0.0
    %1412 = vmatpush2.msra.mxu0 0.0
    %1413 = vmatprep.subr.mxu0 0.0
    %1414 = vmatpush2.msra.mxu0 0.0
    %1415 = vmatprep.subr.mxu0 0.0
    %1416 = vmatpush2.msra.mxu0 0.0
    %1417 = vmatprep.mubr.f32.mxu0 0.0
    %1418 = vmatmul.mubr.f32.gmra.mxu0 %v1351
    %v1419 = vpop.f32.mrf.mxu0
    %v1420 = vadd.f32 0.0, %v1419
    %v1421 = vpop.f32.mrf.mxu0
    %1422 = vdwg.mxu0
    %1424 = vrot.lane.b32.xlu0 %v1420, 32
    %v1425 = vpop.permute.xlu0 %1424
    %1427 = vst.msk [vmem:[#allocation3 + $0x8] sm:$0xff] %vm720, %v1425
    %v1428 = vld [vmem:[#allocation2 + $0x18] sm:$0xff]
    %v1429 = vld [vmem:[#allocation2 + $0x20] sm:$0xff]
    %v1430 = vld [vmem:[#allocation2 + $0x28] sm:$0xff]
    %1432 = vrot.lane.b32.xlu0 %v1428, 64
    %v1433 = vpop.permute.xlu0 %1432
    %1435 = vrot.lane.b32.xlu0 %v1429, 64
    %v1436 = vpop.permute.xlu0 %1435
    %v1437 = vsel %vm374, %v1433, 0
    %v1439 = vsel %vm374, %v1436, 0
    %1441 = vmatprep.subr.mxu0 0.0
    %1442 = vmatpush1.xpose.msra.mxu0 0.0
    %1443 = vmatprep.subr.mxu0 0.0
    %1444 = vmatpush1.xpose.msra.mxu0 0.0
    %1445 = vmatprep.subr.mxu0 0.0
    %1446 = vmatpush1.xpose.msra.mxu0 0.0
    %1447 = vmatprep.subr.mxu0 0.0
    %1448 = vmatpush1.xpose.msra.mxu0 0.0
    %1449 = vmatprep.subr.mxu0 0.0
    %1450 = vmatpush1.xpose.msra.mxu0 0.0
    %1451 = vmatprep.subr.mxu0 0.0
    %1452 = vmatpush1.xpose.msra.mxu0 0.0
    %1453 = vmatprep.subr.mxu0 0.0
    %1454 = vmatpush1.xpose.msra.mxu0 0.0
    %1455 = vmatprep.subr.mxu0 0.0
    %1456 = vmatpush1.xpose.msra.mxu0 0.0
    %1457 = vmatprep.subr.mxu0 0.0
    %1458 = vmatpush1.xpose.msra.mxu0 0.0
    %1459 = vmatprep.subr.mxu0 0.0
    %1460 = vmatpush1.xpose.msra.mxu0 0.0
    %1461 = vmatprep.subr.mxu0 0.0
    %1462 = vmatpush1.xpose.msra.mxu0 0.0
    %1463 = vmatprep.subr.mxu0 0.0
    %1464 = vmatpush1.xpose.msra.mxu0 0.0
    %1465 = vmatprep.subr.mxu0 0.0
    %1466 = vmatpush1.xpose.msra.mxu0 0.0
    %1467 = vmatprep.subr.mxu0 0.0
    %1468 = vmatpush1.xpose.msra.mxu0 0.0
    %1469 = vmatprep.subr.mxu0 0.0
    %1470 = vmatpush1.xpose.msra.mxu0 0.0
    %1471 = vmatprep.subr.mxu0 0.0
    %1472 = vmatpush1.xpose.msra.mxu0 %v1439
    %1473 = vmatprep.subr.mxu0 0.0
    %1474 = vmatpush2.xpose.msra.mxu0 0.0
    %1475 = vmatprep.subr.mxu0 0.0
    %1476 = vmatpush2.xpose.msra.mxu0 0.0
    %1477 = vmatprep.subr.mxu0 0.0
    %1478 = vmatpush2.xpose.msra.mxu0 0.0
    %1479 = vmatprep.subr.mxu0 0.0
    %1480 = vmatpush2.xpose.msra.mxu0 0.0
    %1481 = vmatprep.subr.mxu0 0.0
    %1482 = vmatpush2.xpose.msra.mxu0 0.0
    %1483 = vmatprep.subr.mxu0 0.0
    %1484 = vmatpush2.xpose.msra.mxu0 0.0
    %1485 = vmatprep.subr.mxu0 0.0
    %1486 = vmatpush2.xpose.msra.mxu0 0.0
    %1487 = vmatprep.subr.mxu0 0.0
    %1488 = vmatpush2.xpose.msra.mxu0 0.0
    %1489 = vmatprep.subr.mxu0 0.0
    %1490 = vmatpush2.xpose.msra.mxu0 0.0
    %1491 = vmatprep.subr.mxu0 0.0
    %1492 = vmatpush2.xpose.msra.mxu0 0.0
    %1493 = vmatprep.subr.mxu0 0.0
    %1494 = vmatpush2.xpose.msra.mxu0 0.0
    %1495 = vmatprep.subr.mxu0 0.0
    %1496 = vmatpush2.xpose.msra.mxu0 0.0
    %1497 = vmatprep.subr.mxu0 0.0
    %1498 = vmatpush2.xpose.msra.mxu0 0.0
    %1499 = vmatprep.subr.mxu0 0.0
    %1500 = vmatpush2.xpose.msra.mxu0 0.0
    %1501 = vmatprep.subr.mxu0 0.0
    %1502 = vmatpush2.xpose.msra.mxu0 0.0
    %1503 = vmatprep.subr.mxu0 0.0
    %1504 = vmatpush2.xpose.msra.mxu0 0.0
    %1505 = vmatprep.mubr.f32.mxu0 0.0
    %1506 = vmatmul.mubr.f32.gmra.mxu0 %v1437
    %v1507 = vpop.f32.mrf.mxu0
    %v1508 = vadd.f32 0.0, %v1507
    %v1509 = vpop.f32.mrf.mxu0
    %1510 = vdwg.mxu0
    %v1511 = vmul.f32 %v1508, 0.17677669
    %v1512 = vadd.f32 %v1511, %v1163
    %v1513 = vsel %vm457, %v1512, -inf
    %1514 = vmax.xlane.f32.xlu0 %v1513
    %v1515 = vpop.xlane.xlu0 %1514
    %v1516 = vsub.f32 %v1512, %v1515
    %v1517 = vmul.f32 %v1516, 1.442695
    %v1518 = vpow.pop %v1517
    %v1519 = vsel %vm457, %v1518, 0.0
    %1520 = vadd.xlane.f32.xlu0 %v1519
    %v1521 = vpop.xlane.xlu0 %1520
    %v1522 = vrcp.pop %v1521
    %v1523 = vmul.f32 %v1518, %v1522
    %1525 = vrot.lane.b32.xlu0 %v1430, 64
    %v1526 = vpop.permute.xlu0 %1525
    %v1529 = vsel %vm457, %v1523, 0
    %1531 = vmatprep.subr.mxu0 0.0
    %1532 = vmatpush1.msra.mxu0 0.0
    %1533 = vmatprep.subr.mxu0 0.0
    %1534 = vmatpush1.msra.mxu0 0.0
    %1535 = vmatprep.subr.mxu0 0.0
    %1536 = vmatpush1.msra.mxu0 0.0
    %1537 = vmatprep.subr.mxu0 0.0
    %1538 = vmatpush1.msra.mxu0 0.0
    %1539 = vmatprep.subr.mxu0 0.0
    %1540 = vmatpush1.msra.mxu0 0.0
    %1541 = vmatprep.subr.mxu0 0.0
    %1542 = vmatpush1.msra.mxu0 0.0
    %1543 = vmatprep.subr.mxu0 0.0
    %1544 = vmatpush1.msra.mxu0 0.0
    %1545 = vmatprep.subr.mxu0 0.0
    %1546 = vmatpush1.msra.mxu0 0.0
    %1547 = vmatprep.subr.mxu0 0.0
    %1548 = vmatpush1.msra.mxu0 0.0
    %1549 = vmatprep.subr.mxu0 0.0
    %1550 = vmatpush1.msra.mxu0 0.0
    %1551 = vmatprep.subr.mxu0 0.0
    %1552 = vmatpush1.msra.mxu0 0.0
    %1553 = vmatprep.subr.mxu0 0.0
    %1554 = vmatpush1.msra.mxu0 0.0
    %1555 = vmatprep.subr.mxu0 0.0
    %1556 = vmatpush1.msra.mxu0 0.0
    %1557 = vmatprep.subr.mxu0 0.0
    %1558 = vmatpush1.msra.mxu0 0.0
    %1559 = vmatprep.subr.mxu0 0.0
    %1560 = vmatpush1.msra.mxu0 0.0
    %1561 = vmatprep.subr.mxu0 0.0
    %1562 = vmatpush1.msra.mxu0 %v1526
    %1563 = vmatprep.subr.mxu0 0.0
    %1564 = vmatpush2.msra.mxu0 0.0
    %1565 = vmatprep.subr.mxu0 0.0
    %1566 = vmatpush2.msra.mxu0 0.0
    %1567 = vmatprep.subr.mxu0 0.0
    %1568 = vmatpush2.msra.mxu0 0.0
    %1569 = vmatprep.subr.mxu0 0.0
    %1570 = vmatpush2.msra.mxu0 0.0
    %1571 = vmatprep.subr.mxu0 0.0
    %1572 = vmatpush2.msra.mxu0 0.0
    %1573 = vmatprep.subr.mxu0 0.0
    %1574 = vmatpush2.msra.mxu0 0.0
    %1575 = vmatprep.subr.mxu0 0.0
    %1576 = vmatpush2.msra.mxu0 0.0
    %1577 = vmatprep.subr.mxu0 0.0
    %1578 = vmatpush2.msra.mxu0 0.0
    %1579 = vmatprep.subr.mxu0 0.0
    %1580 = vmatpush2.msra.mxu0 0.0
    %1581 = vmatprep.subr.mxu0 0.0
    %1582 = vmatpush2.msra.mxu0 0.0
    %1583 = vmatprep.subr.mxu0 0.0
    %1584 = vmatpush2.msra.mxu0 0.0
    %1585 = vmatprep.subr.mxu0 0.0
    %1586 = vmatpush2.msra.mxu0 0.0
    %1587 = vmatprep.subr.mxu0 0.0
    %1588 = vmatpush2.msra.mxu0 0.0
    %1589 = vmatprep.subr.mxu0 0.0
    %1590 = vmatpush2.msra.mxu0 0.0
    %1591 = vmatprep.subr.mxu0 0.0
    %1592 = vmatpush2.msra.mxu0 0.0
    %1593 = vmatprep.subr.mxu0 0.0
    %1594 = vmatpush2.msra.mxu0 0.0
    %1595 = vmatprep.mubr.f32.mxu0 0.0
    %1596 = vmatmul.mubr.f32.gmra.mxu0 %v1529
    %v1597 = vpop.f32.mrf.mxu0
    %v1598 = vadd.f32 0.0, %v1597
    %v1599 = vpop.f32.mrf.mxu0
    %1600 = vdwg.mxu0
    %1602 = vrot.lane.b32.xlu0 %v1598, 64
    %v1603 = vpop.permute.xlu0 %1602
    %1605 = vst.msk [vmem:[#allocation3 + $0x8] sm:$0xff] %vm899, %v1603
    %v1606 = vld [vmem:[#allocation2 + $0x18] sm:$0xff]
    %v1607 = vld [vmem:[#allocation2 + $0x20] sm:$0xff]
    %v1608 = vld [vmem:[#allocation2 + $0x28] sm:$0xff]
    %1610 = vrot.lane.b32.xlu0 %v1606, 32
    %v1611 = vpop.permute.xlu0 %1610
    %1613 = vrot.lane.b32.xlu0 %v1607, 32
    %v1614 = vpop.permute.xlu0 %1613
    %v1615 = vsel %vm374, %v1611, 0
    %v1617 = vsel %vm374, %v1614, 0
    %1619 = vmatprep.subr.mxu0 0.0
    %1620 = vmatpush1.xpose.msra.mxu0 0.0
    %1621 = vmatprep.subr.mxu0 0.0
    %1622 = vmatpush1.xpose.msra.mxu0 0.0
    %1623 = vmatprep.subr.mxu0 0.0
    %1624 = vmatpush1.xpose.msra.mxu0 0.0
    %1625 = vmatprep.subr.mxu0 0.0
    %1626 = vmatpush1.xpose.msra.mxu0 0.0
    %1627 = vmatprep.subr.mxu0 0.0
    %1628 = vmatpush1.xpose.msra.mxu0 0.0
    %1629 = vmatprep.subr.mxu0 0.0
    %1630 = vmatpush1.xpose.msra.mxu0 0.0
    %1631 = vmatprep.subr.mxu0 0.0
    %1632 = vmatpush1.xpose.msra.mxu0 0.0
    %1633 = vmatprep.subr.mxu0 0.0
    %1634 = vmatpush1.xpose.msra.mxu0 0.0
    %1635 = vmatprep.subr.mxu0 0.0
    %1636 = vmatpush1.xpose.msra.mxu0 0.0
    %1637 = vmatprep.subr.mxu0 0.0
    %1638 = vmatpush1.xpose.msra.mxu0 0.0
    %1639 = vmatprep.subr.mxu0 0.0
    %1640 = vmatpush1.xpose.msra.mxu0 0.0
    %1641 = vmatprep.subr.mxu0 0.0
    %1642 = vmatpush1.xpose.msra.mxu0 0.0
    %1643 = vmatprep.subr.mxu0 0.0
    %1644 = vmatpush1.xpose.msra.mxu0 0.0
    %1645 = vmatprep.subr.mxu0 0.0
    %1646 = vmatpush1.xpose.msra.mxu0 0.0
    %1647 = vmatprep.subr.mxu0 0.0
    %1648 = vmatpush1.xpose.msra.mxu0 0.0
    %1649 = vmatprep.subr.mxu0 0.0
    %1650 = vmatpush1.xpose.msra.mxu0 %v1617
    %1651 = vmatprep.subr.mxu0 0.0
    %1652 = vmatpush2.xpose.msra.mxu0 0.0
    %1653 = vmatprep.subr.mxu0 0.0
    %1654 = vmatpush2.xpose.msra.mxu0 0.0
    %1655 = vmatprep.subr.mxu0 0.0
    %1656 = vmatpush2.xpose.msra.mxu0 0.0
    %1657 = vmatprep.subr.mxu0 0.0
    %1658 = vmatpush2.xpose.msra.mxu0 0.0
    %1659 = vmatprep.subr.mxu0 0.0
    %1660 = vmatpush2.xpose.msra.mxu0 0.0
    %1661 = vmatprep.subr.mxu0 0.0
    %1662 = vmatpush2.xpose.msra.mxu0 0.0
    %1663 = vmatprep.subr.mxu0 0.0
    %1664 = vmatpush2.xpose.msra.mxu0 0.0
    %1665 = vmatprep.subr.mxu0 0.0
    %1666 = vmatpush2.xpose.msra.mxu0 0.0
    %1667 = vmatprep.subr.mxu0 0.0
    %1668 = vmatpush2.xpose.msra.mxu0 0.0
    %1669 = vmatprep.subr.mxu0 0.0
    %1670 = vmatpush2.xpose.msra.mxu0 0.0
    %1671 = vmatprep.subr.mxu0 0.0
    %1672 = vmatpush2.xpose.msra.mxu0 0.0
    %1673 = vmatprep.subr.mxu0 0.0
    %1674 = vmatpush2.xpose.msra.mxu0 0.0
    %1675 = vmatprep.subr.mxu0 0.0
    %1676 = vmatpush2.xpose.msra.mxu0 0.0
    %1677 = vmatprep.subr.mxu0 0.0
    %1678 = vmatpush2.xpose.msra.mxu0 0.0
    %1679 = vmatprep.subr.mxu0 0.0
    %1680 = vmatpush2.xpose.msra.mxu0 0.0
    %1681 = vmatprep.subr.mxu0 0.0
    %1682 = vmatpush2.xpose.msra.mxu0 0.0
    %1683 = vmatprep.mubr.f32.mxu0 0.0
    %1684 = vmatmul.mubr.f32.gmra.mxu0 %v1615
    %v1685 = vpop.f32.mrf.mxu0
    %v1686 = vadd.f32 0.0, %v1685
    %v1687 = vpop.f32.mrf.mxu0
    %1688 = vdwg.mxu0
    %v1689 = vmul.f32 %v1686, 0.17677669
    %v1690 = vadd.f32 %v1689, %v1163
    %v1691 = vsel %vm457, %v1690, -inf
    %1692 = vmax.xlane.f32.xlu0 %v1691
    %v1693 = vpop.xlane.xlu0 %1692
    %v1694 = vsub.f32 %v1690, %v1693
    %v1695 = vmul.f32 %v1694, 1.442695
    %v1696 = vpow.pop %v1695
    %v1697 = vsel %vm457, %v1696, 0.0
    %1698 = vadd.xlane.f32.xlu0 %v1697
    %v1699 = vpop.xlane.xlu0 %1698
    %v1700 = vrcp.pop %v1699
    %v1701 = vmul.f32 %v1696, %v1700
    %1703 = vrot.lane.b32.xlu0 %v1608, 32
    %v1704 = vpop.permute.xlu0 %1703
    %v1707 = vsel %vm457, %v1701, 0
    %1709 = vmatprep.subr.mxu0 0.0
    %1710 = vmatpush1.msra.mxu0 0.0
    %1711 = vmatprep.subr.mxu0 0.0
    %1712 = vmatpush1.msra.mxu0 0.0
    %1713 = vmatprep.subr.mxu0 0.0
    %1714 = vmatpush1.msra.mxu0 0.0
    %1715 = vmatprep.subr.mxu0 0.0
    %1716 = vmatpush1.msra.mxu0 0.0
    %1717 = vmatprep.subr.mxu0 0.0
    %1718 = vmatpush1.msra.mxu0 0.0
    %1719 = vmatprep.subr.mxu0 0.0
    %1720 = vmatpush1.msra.mxu0 0.0
    %1721 = vmatprep.subr.mxu0 0.0
    %1722 = vmatpush1.msra.mxu0 0.0
    %1723 = vmatprep.subr.mxu0 0.0
    %1724 = vmatpush1.msra.mxu0 0.0
    %1725 = vmatprep.subr.mxu0 0.0
    %1726 = vmatpush1.msra.mxu0 0.0
    %1727 = vmatprep.subr.mxu0 0.0
    %1728 = vmatpush1.msra.mxu0 0.0
    %1729 = vmatprep.subr.mxu0 0.0
    %1730 = vmatpush1.msra.mxu0 0.0
    %1731 = vmatprep.subr.mxu0 0.0
    %1732 = vmatpush1.msra.mxu0 0.0
    %1733 = vmatprep.subr.mxu0 0.0
    %1734 = vmatpush1.msra.mxu0 0.0
    %1735 = vmatprep.subr.mxu0 0.0
    %1736 = vmatpush1.msra.mxu0 0.0
    %1737 = vmatprep.subr.mxu0 0.0
    %1738 = vmatpush1.msra.mxu0 0.0
    %1739 = vmatprep.subr.mxu0 0.0
    %1740 = vmatpush1.msra.mxu0 %v1704
    %1741 = vmatprep.subr.mxu0 0.0
    %1742 = vmatpush2.msra.mxu0 0.0
    %1743 = vmatprep.subr.mxu0 0.0
    %1744 = vmatpush2.msra.mxu0 0.0
    %1745 = vmatprep.subr.mxu0 0.0
    %1746 = vmatpush2.msra.mxu0 0.0
    %1747 = vmatprep.subr.mxu0 0.0
    %1748 = vmatpush2.msra.mxu0 0.0
    %1749 = vmatprep.subr.mxu0 0.0
    %1750 = vmatpush2.msra.mxu0 0.0
    %1751 = vmatprep.subr.mxu0 0.0
    %1752 = vmatpush2.msra.mxu0 0.0
    %1753 = vmatprep.subr.mxu0 0.0
    %1754 = vmatpush2.msra.mxu0 0.0
    %1755 = vmatprep.subr.mxu0 0.0
    %1756 = vmatpush2.msra.mxu0 0.0
    %1757 = vmatprep.subr.mxu0 0.0
    %1758 = vmatpush2.msra.mxu0 0.0
    %1759 = vmatprep.subr.mxu0 0.0
    %1760 = vmatpush2.msra.mxu0 0.0
    %1761 = vmatprep.subr.mxu0 0.0
    %1762 = vmatpush2.msra.mxu0 0.0
    %1763 = vmatprep.subr.mxu0 0.0
    %1764 = vmatpush2.msra.mxu0 0.0
    %1765 = vmatprep.subr.mxu0 0.0
    %1766 = vmatpush2.msra.mxu0 0.0
    %1767 = vmatprep.subr.mxu0 0.0
    %1768 = vmatpush2.msra.mxu0 0.0
    %1769 = vmatprep.subr.mxu0 0.0
    %1770 = vmatpush2.msra.mxu0 0.0
    %1771 = vmatprep.subr.mxu0 0.0
    %1772 = vmatpush2.msra.mxu0 0.0
    %1773 = vmatprep.mubr.f32.mxu0 0.0
    %1774 = vmatmul.mubr.f32.gmra.mxu0 %v1707
    %v1775 = vpop.f32.mrf.mxu0
    %v1776 = vadd.f32 0.0, %v1775
    %v1777 = vpop.f32.mrf.mxu0
    %1778 = vdwg.mxu0
    %1780 = vrot.lane.b32.xlu0 %v1776, 96
    %v1781 = vpop.permute.xlu0 %1780
    %1783 = vst.msk [vmem:[#allocation3 + $0x8] sm:$0xff] %vm1078, %v1781
    %v1784 = vld [vmem:[#allocation3] sm:$0xff]
    %v1785 = vld [vmem:[#allocation3 + $0x8] sm:$0xff]
    %v1786 = vld [vmem:[%s6] sm:$0xff]
    %v1787 = vld [vmem:[%s6 + $0x8] sm:$0xff]
    %v1788 = vld [vmem:[%s6 + $0x10] sm:$0xff]
    %v1789 = vld [vmem:[%s6 + $0x18] sm:$0xff]
    %v1790 = vld [vmem:[%s6 + $0x20] sm:$0xff]
    %v1791 = vld [vmem:[%s6 + $0x28] sm:$0xff]
    %v1792 = vld [vmem:[%s6 + $0x30] sm:$0xff]
    %v1793 = vld [vmem:[%s6 + $0x38] sm:$0xff]
    %v1794 = vld [vmem:[%s6 + $0x40] sm:$0xff]
    %v1795 = vld [vmem:[%s6 + $0x48] sm:$0xff]
    %v1796 = vld [vmem:[%s6 + $0x50] sm:$0xff]
    %v1797 = vld [vmem:[%s6 + $0x58] sm:$0xff]
    %v1798 = vld [vmem:[%s6 + $0x60] sm:$0xff]
    %v1799 = vld [vmem:[%s6 + $0x68] sm:$0xff]
    %v1800 = vld [vmem:[%s6 + $0x70] sm:$0xff]
    %v1801 = vld [vmem:[%s6 + $0x78] sm:$0xff]
    %v1802 = vld [vmem:[%s7] sm:$0x1]
    %v1804 = vlaneseq
    %v1805 = vshrl.u32 %v1804, 7
    %v1806 = vsub.s32 0, %v1805
    %v1807 = vrot.slane %v1802, %v1806
    %1809 = vmatprep.subr.mxu0 0.0
    %1810 = vmatpush1.msra.mxu0 %v1801
    %1811 = vmatprep.subr.mxu0 0.0
    %1812 = vmatpush1.msra.mxu0 %v1800
    %1813 = vmatprep.subr.mxu0 0.0
    %1814 = vmatpush1.msra.mxu0 %v1799
    %1815 = vmatprep.subr.mxu0 0.0
    %1816 = vmatpush1.msra.mxu0 %v1798
    %1817 = vmatprep.subr.mxu0 0.0
    %1818 = vmatpush1.msra.mxu0 %v1797
    %1819 = vmatprep.subr.mxu0 0.0
    %1820 = vmatpush1.msra.mxu0 %v1796
    %1821 = vmatprep.subr.mxu0 0.0
    %1822 = vmatpush1.msra.mxu0 %v1795
    %1823 = vmatprep.subr.mxu0 0.0
    %1824 = vmatpush1.msra.mxu0 %v1794
    %1825 = vmatprep.subr.mxu0 0.0
    %1826 = vmatpush1.msra.mxu0 %v1793
    %1827 = vmatprep.subr.mxu0 0.0
    %1828 = vmatpush1.msra.mxu0 %v1792
    %1829 = vmatprep.subr.mxu0 0.0
    %1830 = vmatpush1.msra.mxu0 %v1791
    %1831 = vmatprep.subr.mxu0 0.0
    %1832 = vmatpush1.msra.mxu0 %v1790
    %1833 = vmatprep.subr.mxu0 0.0
    %1834 = vmatpush1.msra.mxu0 %v1789
    %1835 = vmatprep.subr.mxu0 0.0
    %1836 = vmatpush1.msra.mxu0 %v1788
    %1837 = vmatprep.subr.mxu0 0.0
    %1838 = vmatpush1.msra.mxu0 %v1787
    %1839 = vmatprep.subr.mxu0 0.0
    %1840 = vmatpush1.msra.mxu0 %v1786
    %1841 = vmatprep.subr.mxu0 0.0
    %1842 = vmatpush2.msra.mxu0 0.0
    %1843 = vmatprep.subr.mxu0 0.0
    %1844 = vmatpush2.msra.mxu0 0.0
    %1845 = vmatprep.subr.mxu0 0.0
    %1846 = vmatpush2.msra.mxu0 0.0
    %1847 = vmatprep.subr.mxu0 0.0
    %1848 = vmatpush2.msra.mxu0 0.0
    %1849 = vmatprep.subr.mxu0 0.0
    %1850 = vmatpush2.msra.mxu0 0.0
    %1851 = vmatprep.subr.mxu0 0.0
    %1852 = vmatpush2.msra.mxu0 0.0
    %1853 = vmatprep.subr.mxu0 0.0
    %1854 = vmatpush2.msra.mxu0 0.0
    %1855 = vmatprep.subr.mxu0 0.0
    %1856 = vmatpush2.msra.mxu0 0.0
    %1857 = vmatprep.subr.mxu0 0.0
    %1858 = vmatpush2.msra.mxu0 0.0
    %1859 = vmatprep.subr.mxu0 0.0
    %1860 = vmatpush2.msra.mxu0 0.0
    %1861 = vmatprep.subr.mxu0 0.0
    %1862 = vmatpush2.msra.mxu0 0.0
    %1863 = vmatprep.subr.mxu0 0.0
    %1864 = vmatpush2.msra.mxu0 0.0
    %1865 = vmatprep.subr.mxu0 0.0
    %1866 = vmatpush2.msra.mxu0 0.0
    %1867 = vmatprep.subr.mxu0 0.0
    %1868 = vmatpush2.msra.mxu0 0.0
    %1869 = vmatprep.subr.mxu0 0.0
    %1870 = vmatpush2.msra.mxu0 0.0
    %1871 = vmatprep.subr.mxu0 0.0
    %1872 = vmatpush2.msra.mxu0 0.0
    %1873 = vmatprep.mubr.f32.mxu0 0.0
    %1874 = vmatmul.mubr.f32.gmra.mxu0 %v1784
    %v1875 = vpop.f32.mrf.mxu0
    %v1876 = vadd.f32 %v1807, %v1875
    %v1877 = vpop.f32.mrf.mxu0
    %1878 = vmatprep.mubr.f32.mxu0 0.0
    %1879 = vmatmul.mubr.f32.gmra.mxu0 %v1785
    %v1880 = vpop.f32.mrf.mxu0
    %v1881 = vadd.f32 %v1807, %v1880
    %v1882 = vpop.f32.mrf.mxu0
    %1883 = vdwg.mxu0
    %v1884 = vadd.f32 %v1876, %v146
    %v1885 = vadd.f32 %v1881, %v147
    %v1886 = vld [vmem:[%s12] sm:$0x1]
    %v1887 = vld [vmem:[%s13] sm:$0x1]
    %1888 = vadd.xlane.f32.xlu0 %v1884
    %v1889 = vpop.xlane.xlu0 %1888
    %1890 = vadd.xlane.f32.xlu0 %v1885
    %v1891 = vpop.xlane.xlu0 %1890
    %v1892 = vmul.f32 %v1889, %v113
    %v1893 = vmul.f32 %v1891, %v113
    %v1894 = vsub.f32 %v1884, %v1892
    %v1895 = vsub.f32 %v1885, %v1893
    %v1896 = vmul.f32 %v1894, %v1894
    %v1897 = vmul.f32 %v1895, %v1895
    %1898 = vadd.xlane.f32.xlu0 %v1896
    %v1899 = vpop.xlane.xlu0 %1898
    %1900 = vadd.xlane.f32.xlu0 %v1897
    %v1901 = vpop.xlane.xlu0 %1900
    %v1902 = vmul.f32 %v1899, %v113
    %v1903 = vmul.f32 %v1901, %v113
    %v1904 = vadd.f32 %v1902, 1e-12
    %v1905 = vadd.f32 %v1903, 1e-12
    %v1906 = vrsqrt.pop %v1904
    %v1907 = vrsqrt.pop %v1905
    %v1908 = vmul.f32 %v1894, %v1906
    %v1909 = vmul.f32 %v1895, %v1907
    %v1911 = vlaneseq
    %v1912 = vshrl.u32 %v1911, 7
    %v1913 = vsub.s32 0, %v1912
    %v1914 = vrot.slane %v1886, %v1913
    %v1916 = vmul.f32 %v1908, %v1914
    %v1917 = vmul.f32 %v1909, %v1914
    %v1919 = vlaneseq
    %v1920 = vshrl.u32 %v1919, 7
    %v1921 = vsub.s32 0, %v1920
    %v1922 = vrot.slane %v1887, %v1921
    %v1924 = vadd.f32 %v1916, %v1922
    %v1925 = vadd.f32 %v1917, %v1922
    %v1926 = vld [vmem:[#allocation7] sm:$0xff]
    %v1927 = vld [vmem:[#allocation7 + $0x8] sm:$0xff]
    %v1928 = vld [vmem:[#allocation7 + $0x10] sm:$0xff]
    %v1929 = vld [vmem:[#allocation7 + $0x18] sm:$0xff]
    %v1930 = vld [vmem:[#allocation7 + $0x20] sm:$0xff]
    %v1931 = vld [vmem:[#allocation7 + $0x28] sm:$0xff]
    %v1932 = vld [vmem:[#allocation7 + $0x30] sm:$0xff]
    %v1933 = vld [vmem:[#allocation7 + $0x38] sm:$0xff]
    %v1934 = vld [vmem:[#allocation7 + $0x40] sm:$0xff]
    %v1935 = vld [vmem:[#allocation7 + $0x48] sm:$0xff]
    %v1936 = vld [vmem:[#allocation7 + $0x50] sm:$0xff]
    %v1937 = vld [vmem:[#allocation7 + $0x58] sm:$0xff]
    %v1938 = vld [vmem:[#allocation7 + $0x60] sm:$0xff]
    %v1939 = vld [vmem:[#allocation7 + $0x68] sm:$0xff]
    %v1940 = vld [vmem:[#allocation7 + $0x70] sm:$0xff]
    %v1941 = vld [vmem:[#allocation7 + $0x78] sm:$0xff]
    %v1942 = vld [vmem:[#allocation7 + $0x80] sm:$0xff]
    %v1943 = vld [vmem:[#allocation7 + $0x88] sm:$0xff]
    %v1944 = vld [vmem:[#allocation7 + $0x90] sm:$0xff]
    %v1945 = vld [vmem:[#allocation7 + $0x98] sm:$0xff]
    %v1946 = vld [vmem:[#allocation7 + $0xa0] sm:$0xff]
    %v1947 = vld [vmem:[#allocation7 + $0xa8] sm:$0xff]
    %v1948 = vld [vmem:[#allocation7 + $0xb0] sm:$0xff]
    %v1949 = vld [vmem:[#allocation7 + $0xb8] sm:$0xff]
    %v1950 = vld [vmem:[#allocation7 + $0xc0] sm:$0xff]
    %v1951 = vld [vmem:[#allocation7 + $0xc8] sm:$0xff]
    %v1952 = vld [vmem:[#allocation7 + $0xd0] sm:$0xff]
    %v1953 = vld [vmem:[#allocation7 + $0xd8] sm:$0xff]
    %v1954 = vld [vmem:[#allocation7 + $0xe0] sm:$0xff]
    %v1955 = vld [vmem:[#allocation7 + $0xe8] sm:$0xff]
    %v1956 = vld [vmem:[#allocation7 + $0xf0] sm:$0xff]
    %v1957 = vld [vmem:[#allocation7 + $0xf8] sm:$0xff]
    %v1958 = vld [vmem:[%s9] sm:$0x3]
    %v1960 = vlaneseq
    %v1961 = vshrl.u32 %v1960, 7
    %v1962 = vsub.s32 0, %v1961
    %v1963 = vrot.slane %v1958, %v1962
    %v1964 = vlaneseq
    %v1965 = vshrl.u32 %v1964, 7
    %v1966 = vsub.s32 1, %v1965
    %v1967 = vrot.slane %v1958, %v1966
    %1970 = vmatprep.subr.mxu0 %v1957
    %1971 = vmatpush1.msra.mxu0 %v1956
    %1972 = vmatprep.subr.mxu0 %v1955
    %1973 = vmatpush1.msra.mxu0 %v1954
    %1974 = vmatprep.subr.mxu0 %v1953
    %1975 = vmatpush1.msra.mxu0 %v1952
    %1976 = vmatprep.subr.mxu0 %v1951
    %1977 = vmatpush1.msra.mxu0 %v1950
    %1978 = vmatprep.subr.mxu0 %v1949
    %1979 = vmatpush1.msra.mxu0 %v1948
    %1980 = vmatprep.subr.mxu0 %v1947
    %1981 = vmatpush1.msra.mxu0 %v1946
    %1982 = vmatprep.subr.mxu0 %v1945
    %1983 = vmatpush1.msra.mxu0 %v1944
    %1984 = vmatprep.subr.mxu0 %v1943
    %1985 = vmatpush1.msra.mxu0 %v1942
    %1986 = vmatprep.subr.mxu0 %v1941
    %1987 = vmatpush1.msra.mxu0 %v1940
    %1988 = vmatprep.subr.mxu0 %v1939
    %1989 = vmatpush1.msra.mxu0 %v1938
    %1990 = vmatprep.subr.mxu0 %v1937
    %1991 = vmatpush1.msra.mxu0 %v1936
    %1992 = vmatprep.subr.mxu0 %v1935
    %1993 = vmatpush1.msra.mxu0 %v1934
    %1994 = vmatprep.subr.mxu0 %v1933
    %1995 = vmatpush1.msra.mxu0 %v1932
    %1996 = vmatprep.subr.mxu0 %v1931
    %1997 = vmatpush1.msra.mxu0 %v1930
    %1998 = vmatprep.subr.mxu0 %v1929
    %1999 = vmatpush1.msra.mxu0 %v1928
    %2000 = vmatprep.subr.mxu0 %v1927
    %2001 = vmatpush1.msra.mxu0 %v1926
    %2002 = vmatprep.subr.mxu0 0.0
    %2003 = vmatpush2.msra.mxu0 0.0
    %2004 = vmatprep.subr.mxu0 0.0
    %2005 = vmatpush2.msra.mxu0 0.0
    %2006 = vmatprep.subr.mxu0 0.0
    %2007 = vmatpush2.msra.mxu0 0.0
    %2008 = vmatprep.subr.mxu0 0.0
    %2009 = vmatpush2.msra.mxu0 0.0
    %2010 = vmatprep.subr.mxu0 0.0
    %2011 = vmatpush2.msra.mxu0 0.0
    %2012 = vmatprep.subr.mxu0 0.0
    %2013 = vmatpush2.msra.mxu0 0.0
    %2014 = vmatprep.subr.mxu0 0.0
    %2015 = vmatpush2.msra.mxu0 0.0
    %2016 = vmatprep.subr.mxu0 0.0
    %2017 = vmatpush2.msra.mxu0 0.0
    %2018 = vmatprep.subr.mxu0 0.0
    %2019 = vmatpush2.msra.mxu0 0.0
    %2020 = vmatprep.subr.mxu0 0.0
    %2021 = vmatpush2.msra.mxu0 0.0
    %2022 = vmatprep.subr.mxu0 0.0
    %2023 = vmatpush2.msra.mxu0 0.0
    %2024 = vmatprep.subr.mxu0 0.0
    %2025 = vmatpush2.msra.mxu0 0.0
    %2026 = vmatprep.subr.mxu0 0.0
    %2027 = vmatpush2.msra.mxu0 0.0
    %2028 = vmatprep.subr.mxu0 0.0
    %2029 = vmatpush2.msra.mxu0 0.0
    %2030 = vmatprep.subr.mxu0 0.0
    %2031 = vmatpush2.msra.mxu0 0.0
    %2032 = vmatprep.subr.mxu0 0.0
    %2033 = vmatpush2.msra.mxu0 0.0
    %2034 = vmatprep.mubr.f32.mxu0 0.0
    %2035 = vmatmul.mubr.f32.gmra.mxu0 %v1924
    %v2036 = vpop.f32.mrf.mxu0
    %v2037 = vadd.f32 %v1963, %v2036
    %v2038 = vpop.f32.mrf.mxu0
    %v2039 = vadd.f32 %v1967, %v2038
    %2040 = vmatprep.mubr.f32.mxu0 0.0
    %2041 = vmatmul.mubr.f32.gmra.mxu0 %v1925
    %v2042 = vpop.f32.mrf.mxu0
    %v2043 = vadd.f32 %v1963, %v2042
    %v2044 = vpop.f32.mrf.mxu0
    %v2045 = vadd.f32 %v1967, %v2044
    %2046 = vdwg.mxu0
    %v2047 = vmul.f32 %v2037, %v2037
    %v2048 = vmul.f32 %v2039, %v2039
    %v2049 = vmul.f32 %v2043, %v2043
    %v2050 = vmul.f32 %v2045, %v2045
    %v2051 = vmul.f32 %v2037, %v2047
    %v2052 = vmul.f32 %v2039, %v2048
    %v2053 = vmul.f32 %v2043, %v2049
    %v2054 = vmul.f32 %v2045, %v2050
    %v2055 = vmul.f32 %v2051, 0.044715
    %v2056 = vmul.f32 %v2052, 0.044715
    %v2057 = vmul.f32 %v2053, 0.044715
    %v2058 = vmul.f32 %v2054, 0.044715
    %v2059 = vadd.f32 %v2037, %v2055
    %v2060 = vadd.f32 %v2039, %v2056
    %v2061 = vadd.f32 %v2043, %v2057
    %v2062 = vadd.f32 %v2045, %v2058
    %v2063 = vmul.f32 %v2059, 0.7978846
    %v2064 = vmul.f32 %v2060, 0.7978846
    %v2065 = vmul.f32 %v2061, 0.7978846
    %v2066 = vmul.f32 %v2062, 0.7978846
    %v2067 = vtanh.pop %v2063
    %v2068 = vtanh.pop %v2064
    %v2069 = vtanh.pop %v2065
    %v2070 = vtanh.pop %v2066
    %v2071 = vadd.f32 %v2067, 1.0
    %v2072 = vadd.f32 %v2068, 1.0
    %v2073 = vadd.f32 %v2069, 1.0
    %v2074 = vadd.f32 %v2070, 1.0
    %v2075 = vmul.f32 %v2071, 0.5
    %v2076 = vmul.f32 %v2072, 0.5
    %v2077 = vmul.f32 %v2073, 0.5
    %v2078 = vmul.f32 %v2074, 0.5
    %v2079 = vmul.f32 %v2037, %v2075
    %v2080 = vmul.f32 %v2039, %v2076
    %v2081 = vmul.f32 %v2043, %v2077
    %v2082 = vmul.f32 %v2045, %v2078
    %v2083 = vld [vmem:[#allocation9] sm:$0xff]
    %v2084 = vld [vmem:[#allocation9 + $0x8] sm:$0xff]
    %v2085 = vld [vmem:[#allocation9 + $0x10] sm:$0xff]
    %v2086 = vld [vmem:[#allocation9 + $0x18] sm:$0xff]
    %v2087 = vld [vmem:[#allocation9 + $0x20] sm:$0xff]
    %v2088 = vld [vmem:[#allocation9 + $0x28] sm:$0xff]
    %v2089 = vld [vmem:[#allocation9 + $0x30] sm:$0xff]
    %v2090 = vld [vmem:[#allocation9 + $0x38] sm:$0xff]
    %v2091 = vld [vmem:[#allocation9 + $0x40] sm:$0xff]
    %v2092 = vld [vmem:[#allocation9 + $0x48] sm:$0xff]
    %v2093 = vld [vmem:[#allocation9 + $0x50] sm:$0xff]
    %v2094 = vld [vmem:[#allocation9 + $0x58] sm:$0xff]
    %v2095 = vld [vmem:[#allocation9 + $0x60] sm:$0xff]
    %v2096 = vld [vmem:[#allocation9 + $0x68] sm:$0xff]
    %v2097 = vld [vmem:[#allocation9 + $0x70] sm:$0xff]
    %v2098 = vld [vmem:[#allocation9 + $0x78] sm:$0xff]
    %v2099 = vld [vmem:[#allocation9 + $0x80] sm:$0xff]
    %v2100 = vld [vmem:[#allocation9 + $0x88] sm:$0xff]
    %v2101 = vld [vmem:[#allocation9 + $0x90] sm:$0xff]
    %v2102 = vld [vmem:[#allocation9 + $0x98] sm:$0xff]
    %v2103 = vld [vmem:[#allocation9 + $0xa0] sm:$0xff]
    %v2104 = vld [vmem:[#allocation9 + $0xa8] sm:$0xff]
    %v2105 = vld [vmem:[#allocation9 + $0xb0] sm:$0xff]
    %v2106 = vld [vmem:[#allocation9 + $0xb8] sm:$0xff]
    %v2107 = vld [vmem:[#allocation9 + $0xc0] sm:$0xff]
    %v2108 = vld [vmem:[#allocation9 + $0xc8] sm:$0xff]
    %v2109 = vld [vmem:[#allocation9 + $0xd0] sm:$0xff]
    %v2110 = vld [vmem:[#allocation9 + $0xd8] sm:$0xff]
    %v2111 = vld [vmem:[#allocation9 + $0xe0] sm:$0xff]
    %v2112 = vld [vmem:[#allocation9 + $0xe8] sm:$0xff]
    %v2113 = vld [vmem:[#allocation9 + $0xf0] sm:$0xff]
    %v2114 = vld [vmem:[#allocation9 + $0xf8] sm:$0xff]
    %v2115 = vld [vmem:[%s11] sm:$0x1]
    %v2117 = vlaneseq
    %v2118 = vshrl.u32 %v2117, 7
    %v2119 = vsub.s32 0, %v2118
    %v2120 = vrot.slane %v2115, %v2119
    %2122 = vmatprep.subr.mxu0 0.0
    %2123 = vmatpush1.msra.mxu0 %v2098
    %2124 = vmatprep.subr.mxu0 0.0
    %2125 = vmatpush1.msra.mxu0 %v2097
    %2126 = vmatprep.subr.mxu0 0.0
    %2127 = vmatpush1.msra.mxu0 %v2096
    %2128 = vmatprep.subr.mxu0 0.0
    %2129 = vmatpush1.msra.mxu0 %v2095
    %2130 = vmatprep.subr.mxu0 0.0
    %2131 = vmatpush1.msra.mxu0 %v2094
    %2132 = vmatprep.subr.mxu0 0.0
    %2133 = vmatpush1.msra.mxu0 %v2093
    %2134 = vmatprep.subr.mxu0 0.0
    %2135 = vmatpush1.msra.mxu0 %v2092
    %2136 = vmatprep.subr.mxu0 0.0
    %2137 = vmatpush1.msra.mxu0 %v2091
    %2138 = vmatprep.subr.mxu0 0.0
    %2139 = vmatpush1.msra.mxu0 %v2090
    %2140 = vmatprep.subr.mxu0 0.0
    %2141 = vmatpush1.msra.mxu0 %v2089
    %2142 = vmatprep.subr.mxu0 0.0
    %2143 = vmatpush1.msra.mxu0 %v2088
    %2144 = vmatprep.subr.mxu0 0.0
    %2145 = vmatpush1.msra.mxu0 %v2087
    %2146 = vmatprep.subr.mxu0 0.0
    %2147 = vmatpush1.msra.mxu0 %v2086
    %2148 = vmatprep.subr.mxu0 0.0
    %2149 = vmatpush1.msra.mxu0 %v2085
    %2150 = vmatprep.subr.mxu0 0.0
    %2151 = vmatpush1.msra.mxu0 %v2084
    %2152 = vmatprep.subr.mxu0 0.0
    %2153 = vmatpush1.msra.mxu0 %v2083
    %2154 = vmatprep.subr.mxu0 0.0
    %2155 = vmatpush2.msra.mxu0 %v2114
    %2156 = vmatprep.subr.mxu0 0.0
    %2157 = vmatpush2.msra.mxu0 %v2113
    %2158 = vmatprep.subr.mxu0 0.0
    %2159 = vmatpush2.msra.mxu0 %v2112
    %2160 = vmatprep.subr.mxu0 0.0
    %2161 = vmatpush2.msra.mxu0 %v2111
    %2162 = vmatprep.subr.mxu0 0.0
    %2163 = vmatpush2.msra.mxu0 %v2110
    %2164 = vmatprep.subr.mxu0 0.0
    %2165 = vmatpush2.msra.mxu0 %v2109
    %2166 = vmatprep.subr.mxu0 0.0
    %2167 = vmatpush2.msra.mxu0 %v2108
    %2168 = vmatprep.subr.mxu0 0.0
    %2169 = vmatpush2.msra.mxu0 %v2107
    %2170 = vmatprep.subr.mxu0 0.0
    %2171 = vmatpush2.msra.mxu0 %v2106
    %2172 = vmatprep.subr.mxu0 0.0
    %2173 = vmatpush2.msra.mxu0 %v2105
    %2174 = vmatprep.subr.mxu0 0.0
    %2175 = vmatpush2.msra.mxu0 %v2104
    %2176 = vmatprep.subr.mxu0 0.0
    %2177 = vmatpush2.msra.mxu0 %v2103
    %2178 = vmatprep.subr.mxu0 0.0
    %2179 = vmatpush2.msra.mxu0 %v2102
    %2180 = vmatprep.subr.mxu0 0.0
    %2181 = vmatpush2.msra.mxu0 %v2101
    %2182 = vmatprep.subr.mxu0 0.0
    %2183 = vmatpush2.msra.mxu0 %v2100
    %2184 = vmatprep.subr.mxu0 0.0
    %2185 = vmatpush2.msra.mxu0 %v2099
    %2186 = vmatprep.mubr.f32.mxu0 %v2080
    %2187 = vmatmul.mubr.f32.gmra.mxu0 %v2079
    %v2188 = vpop.f32.mrf.mxu0
    %v2189 = vadd.f32 %v2120, %v2188
    %v2190 = vpop.f32.mrf.mxu0
    %2191 = vmatprep.mubr.f32.mxu0 %v2082
    %2192 = vmatmul.mubr.f32.gmra.mxu0 %v2081
    %v2193 = vpop.f32.mrf.mxu0
    %v2194 = vadd.f32 %v2120, %v2193
    %v2195 = vpop.f32.mrf.mxu0
    %2196 = vdwg.mxu0
    %v2197 = vadd.f32 %v2189, %v1924
    %v2198 = vadd.f32 %v2194, %v1925
    %v2199 = vld [vmem:[%s14] sm:$0x1]
    %v2200 = vld [vmem:[%s15] sm:$0x1]
    %2201 = vadd.xlane.f32.xlu0 %v2197
    %v2202 = vpop.xlane.xlu0 %2201
    %2203 = vadd.xlane.f32.xlu0 %v2198
    %v2204 = vpop.xlane.xlu0 %2203
    %v2205 = vmul.f32 %v2202, %v113
    %v2206 = vmul.f32 %v2204, %v113
    %v2207 = vsub.f32 %v2197, %v2205
    %v2208 = vsub.f32 %v2198, %v2206
    %v2209 = vmul.f32 %v2207, %v2207
    %v2210 = vmul.f32 %v2208, %v2208
    %2211 = vadd.xlane.f32.xlu0 %v2209
    %v2212 = vpop.xlane.xlu0 %2211
    %2213 = vadd.xlane.f32.xlu0 %v2210
    %v2214 = vpop.xlane.xlu0 %2213
    %v2215 = vmul.f32 %v2212, %v113
    %v2216 = vmul.f32 %v2214, %v113
    %v2217 = vadd.f32 %v2215, 1e-12
    %v2218 = vadd.f32 %v2216, 1e-12
    %v2219 = vrsqrt.pop %v2217
    %v2220 = vrsqrt.pop %v2218
    %v2221 = vmul.f32 %v2207, %v2219
    %v2222 = vmul.f32 %v2208, %v2220
    %v2224 = vlaneseq
    %v2225 = vshrl.u32 %v2224, 7
    %v2226 = vsub.s32 0, %v2225
    %v2227 = vrot.slane %v2199, %v2226
    %v2229 = vmul.f32 %v2221, %v2227
    %v2230 = vmul.f32 %v2222, %v2227
    %v2232 = vlaneseq
    %v2233 = vshrl.u32 %v2232, 7
    %v2234 = vsub.s32 0, %v2233
    %v2235 = vrot.slane %v2200, %v2234
    %v2237 = vadd.f32 %v2229, %v2235
    %v2238 = vadd.f32 %v2230, %v2235
    %s2239 = scalar_lea.vmem [#allocation4], 384
    %v2240 = vld [vmem:[%s2239] sm:$0xff]
    %v2241 = vld [vmem:[%s2239 + $0x8] sm:$0xff]
    %v2242 = vld [vmem:[%s2239 + $0x10] sm:$0xff]
    %v2243 = vld [vmem:[%s2239 + $0x18] sm:$0xff]
    %v2244 = vld [vmem:[%s2239 + $0x20] sm:$0xff]
    %v2245 = vld [vmem:[%s2239 + $0x28] sm:$0xff]
    %v2246 = vld [vmem:[%s2239 + $0x30] sm:$0xff]
    %v2247 = vld [vmem:[%s2239 + $0x38] sm:$0xff]
    %v2248 = vld [vmem:[%s2239 + $0x40] sm:$0xff]
    %v2249 = vld [vmem:[%s2239 + $0x48] sm:$0xff]
    %v2250 = vld [vmem:[%s2239 + $0x50] sm:$0xff]
    %v2251 = vld [vmem:[%s2239 + $0x58] sm:$0xff]
    %v2252 = vld [vmem:[%s2239 + $0x60] sm:$0xff]
    %v2253 = vld [vmem:[%s2239 + $0x68] sm:$0xff]
    %v2254 = vld [vmem:[%s2239 + $0x70] sm:$0xff]
    %v2255 = vld [vmem:[%s2239 + $0x78] sm:$0xff]
    %v2256 = vld [vmem:[%s2239 + $0x80] sm:$0xff]
    %v2257 = vld [vmem:[%s2239 + $0x88] sm:$0xff]
    %v2258 = vld [vmem:[%s2239 + $0x90] sm:$0xff]
    %v2259 = vld [vmem:[%s2239 + $0x98] sm:$0xff]
    %v2260 = vld [vmem:[%s2239 + $0xa0] sm:$0xff]
    %v2261 = vld [vmem:[%s2239 + $0xa8] sm:$0xff]
    %v2262 = vld [vmem:[%s2239 + $0xb0] sm:$0xff]
    %v2263 = vld [vmem:[%s2239 + $0xb8] sm:$0xff]
    %v2264 = vld [vmem:[%s2239 + $0xc0] sm:$0xff]
    %v2265 = vld [vmem:[%s2239 + $0xc8] sm:$0xff]
    %v2266 = vld [vmem:[%s2239 + $0xd0] sm:$0xff]
    %v2267 = vld [vmem:[%s2239 + $0xd8] sm:$0xff]
    %v2268 = vld [vmem:[%s2239 + $0xe0] sm:$0xff]
    %v2269 = vld [vmem:[%s2239 + $0xe8] sm:$0xff]
    %v2270 = vld [vmem:[%s2239 + $0xf0] sm:$0xff]
    %v2271 = vld [vmem:[%s2239 + $0xf8] sm:$0xff]
    %v2272 = vld [vmem:[%s2239 + $0x100] sm:$0xff]
    %v2273 = vld [vmem:[%s2239 + $0x108] sm:$0xff]
    %v2274 = vld [vmem:[%s2239 + $0x110] sm:$0xff]
    %v2275 = vld [vmem:[%s2239 + $0x118] sm:$0xff]
    %v2276 = vld [vmem:[%s2239 + $0x120] sm:$0xff]
    %v2277 = vld [vmem:[%s2239 + $0x128] sm:$0xff]
    %v2278 = vld [vmem:[%s2239 + $0x130] sm:$0xff]
    %v2279 = vld [vmem:[%s2239 + $0x138] sm:$0xff]
    %v2280 = vld [vmem:[%s2239 + $0x140] sm:$0xff]
    %v2281 = vld [vmem:[%s2239 + $0x148] sm:$0xff]
    %v2282 = vld [vmem:[%s2239 + $0x150] sm:$0xff]
    %v2283 = vld [vmem:[%s2239 + $0x158] sm:$0xff]
    %v2284 = vld [vmem:[%s2239 + $0x160] sm:$0xff]
    %v2285 = vld [vmem:[%s2239 + $0x168] sm:$0xff]
    %v2286 = vld [vmem:[%s2239 + $0x170] sm:$0xff]
    %v2287 = vld [vmem:[%s2239 + $0x178] sm:$0xff]
    %s2288 = scalar_lea.vmem %s5, 3
    %v2289 = vld [vmem:[%s2288] sm:$0x7]
    %v2291 = vlaneseq
    %v2292 = vshrl.u32 %v2291, 7
    %v2293 = vsub.s32 0, %v2292
    %v2294 = vrot.slane %v2289, %v2293
    %v2295 = vlaneseq
    %v2296 = vshrl.u32 %v2295, 7
    %v2297 = vsub.s32 1, %v2296
    %v2298 = vrot.slane %v2289, %v2297
    %v2299 = vlaneseq
    %v2300 = vshrl.u32 %v2299, 7
    %v2301 = vsub.s32 2, %v2300
    %v2302 = vrot.slane %v2289, %v2301
    %2306 = vmatprep.subr.mxu0 %v2286
    %2307 = vmatpush1.msra.mxu0 %v2285
    %2308 = vmatprep.subr.mxu0 %v2283
    %2309 = vmatpush1.msra.mxu0 %v2282
    %2310 = vmatprep.subr.mxu0 %v2280
    %2311 = vmatpush1.msra.mxu0 %v2279
    %2312 = vmatprep.subr.mxu0 %v2277
    %2313 = vmatpush1.msra.mxu0 %v2276
    %2314 = vmatprep.subr.mxu0 %v2274
    %2315 = vmatpush1.msra.mxu0 %v2273
    %2316 = vmatprep.subr.mxu0 %v2271
    %2317 = vmatpush1.msra.mxu0 %v2270
    %2318 = vmatprep.subr.mxu0 %v2268
    %2319 = vmatpush1.msra.mxu0 %v2267
    %2320 = vmatprep.subr.mxu0 %v2265
    %2321 = vmatpush1.msra.mxu0 %v2264
    %2322 = vmatprep.subr.mxu0 %v2262
    %2323 = vmatpush1.msra.mxu0 %v2261
    %2324 = vmatprep.subr.mxu0 %v2259
    %2325 = vmatpush1.msra.mxu0 %v2258
    %2326 = vmatprep.subr.mxu0 %v2256
    %2327 = vmatpush1.msra.mxu0 %v2255
    %2328 = vmatprep.subr.mxu0 %v2253
    %2329 = vmatpush1.msra.mxu0 %v2252
    %2330 = vmatprep.subr.mxu0 %v2250
    %2331 = vmatpush1.msra.mxu0 %v2249
    %2332 = vmatprep.subr.mxu0 %v2247
    %2333 = vmatpush1.msra.mxu0 %v2246
    %2334 = vmatprep.subr.mxu0 %v2244
    %2335 = vmatpush1.msra.mxu0 %v2243
    %2336 = vmatprep.subr.mxu0 %v2241
    %2337 = vmatpush1.msra.mxu0 %v2240
    %2338 = vmatprep.subr.mxu0 0.0
    %2339 = vmatpush2.msra.mxu0 0.0
    %2340 = vmatprep.subr.mxu0 0.0
    %2341 = vmatpush2.msra.mxu0 0.0
    %2342 = vmatprep.subr.mxu0 0.0
    %2343 = vmatpush2.msra.mxu0 0.0
    %2344 = vmatprep.subr.mxu0 0.0
    %2345 = vmatpush2.msra.mxu0 0.0
    %2346 = vmatprep.subr.mxu0 0.0
    %2347 = vmatpush2.msra.mxu0 0.0
    %2348 = vmatprep.subr.mxu0 0.0
    %2349 = vmatpush2.msra.mxu0 0.0
    %2350 = vmatprep.subr.mxu0 0.0
    %2351 = vmatpush2.msra.mxu0 0.0
    %2352 = vmatprep.subr.mxu0 0.0
    %2353 = vmatpush2.msra.mxu0 0.0
    %2354 = vmatprep.subr.mxu0 0.0
    %2355 = vmatpush2.msra.mxu0 0.0
    %2356 = vmatprep.subr.mxu0 0.0
    %2357 = vmatpush2.msra.mxu0 0.0
    %2358 = vmatprep.subr.mxu0 0.0
    %2359 = vmatpush2.msra.mxu0 0.0
    %2360 = vmatprep.subr.mxu0 0.0
    %2361 = vmatpush2.msra.mxu0 0.0
    %2362 = vmatprep.subr.mxu0 0.0
    %2363 = vmatpush2.msra.mxu0 0.0
    %2364 = vmatprep.subr.mxu0 0.0
    %2365 = vmatpush2.msra.mxu0 0.0
    %2366 = vmatprep.subr.mxu0 0.0
    %2367 = vmatpush2.msra.mxu0 0.0
    %2368 = vmatprep.subr.mxu0 0.0
    %2369 = vmatpush2.msra.mxu0 0.0
    %2370 = vmatprep.mubr.f32.mxu0 0.0
    %2371 = vmatmul.mubr.f32.gmra.mxu0 %v2237
    %v2372 = vpop.f32.mrf.mxu0
    %v2373 = vadd.f32 %v2294, %v2372
    %v2374 = vpop.f32.mrf.mxu0
    %v2375 = vadd.f32 %v2298, %v2374
    %2376 = vmatprep.mubr.f32.mxu0 0.0
    %2377 = vmatmul.mubr.f32.gmra.mxu0 %v2238
    %v2378 = vpop.f32.mrf.mxu0
    %v2379 = vadd.f32 %v2294, %v2378
    %v2380 = vpop.f32.mrf.mxu0
    %v2381 = vadd.f32 %v2298, %v2380
    %2382 = vdwg.mxu0
    %2383 = vmatprep.subr.mxu0 0.0
    %2384 = vmatpush1.msra.mxu0 %v2287
    %2385 = vmatprep.subr.mxu0 0.0
    %2386 = vmatpush1.msra.mxu0 %v2284
    %2387 = vmatprep.subr.mxu0 0.0
    %2388 = vmatpush1.msra.mxu0 %v2281
    %2389 = vmatprep.subr.mxu0 0.0
    %2390 = vmatpush1.msra.mxu0 %v2278
    %2391 = vmatprep.subr.mxu0 0.0
    %2392 = vmatpush1.msra.mxu0 %v2275
    %2393 = vmatprep.subr.mxu0 0.0
    %2394 = vmatpush1.msra.mxu0 %v2272
    %2395 = vmatprep.subr.mxu0 0.0
    %2396 = vmatpush1.msra.mxu0 %v2269
    %2397 = vmatprep.subr.mxu0 0.0
    %2398 = vmatpush1.msra.mxu0 %v2266
    %2399 = vmatprep.subr.mxu0 0.0
    %2400 = vmatpush1.msra.mxu0 %v2263
    %2401 = vmatprep.subr.mxu0 0.0
    %2402 = vmatpush1.msra.mxu0 %v2260
    %2403 = vmatprep.subr.mxu0 0.0
    %2404 = vmatpush1.msra.mxu0 %v2257
    %2405 = vmatprep.subr.mxu0 0.0
    %2406 = vmatpush1.msra.mxu0 %v2254
    %2407 = vmatprep.subr.mxu0 0.0
    %2408 = vmatpush1.msra.mxu0 %v2251
    %2409 = vmatprep.subr.mxu0 0.0
    %2410 = vmatpush1.msra.mxu0 %v2248
    %2411 = vmatprep.subr.mxu0 0.0
    %2412 = vmatpush1.msra.mxu0 %v2245
    %2413 = vmatprep.subr.mxu0 0.0
    %2414 = vmatpush1.msra.mxu0 %v2242
    %2415 = vmatprep.subr.mxu0 0.0
    %2416 = vmatpush2.msra.mxu0 0.0
    %2417 = vmatprep.subr.mxu0 0.0
    %2418 = vmatpush2.msra.mxu0 0.0
    %2419 = vmatprep.subr.mxu0 0.0
    %2420 = vmatpush2.msra.mxu0 0.0
    %2421 = vmatprep.subr.mxu0 0.0
    %2422 = vmatpush2.msra.mxu0 0.0
    %2423 = vmatprep.subr.mxu0 0.0
    %2424 = vmatpush2.msra.mxu0 0.0
    %2425 = vmatprep.subr.mxu0 0.0
    %2426 = vmatpush2.msra.mxu0 0.0
    %2427 = vmatprep.subr.mxu0 0.0
    %2428 = vmatpush2.msra.mxu0 0.0
    %2429 = vmatprep.subr.mxu0 0.0
    %2430 = vmatpush2.msra.mxu0 0.0
    %2431 = vmatprep.subr.mxu0 0.0
    %2432 = vmatpush2.msra.mxu0 0.0
    %2433 = vmatprep.subr.mxu0 0.0
    %2434 = vmatpush2.msra.mxu0 0.0
    %2435 = vmatprep.subr.mxu0 0.0
    %2436 = vmatpush2.msra.mxu0 0.0
    %2437 = vmatprep.subr.mxu0 0.0
    %2438 = vmatpush2.msra.mxu0 0.0
    %2439 = vmatprep.subr.mxu0 0.0
    %2440 = vmatpush2.msra.mxu0 0.0
    %2441 = vmatprep.subr.mxu0 0.0
    %2442 = vmatpush2.msra.mxu0 0.0
    %2443 = vmatprep.subr.mxu0 0.0
    %2444 = vmatpush2.msra.mxu0 0.0
    %2445 = vmatprep.subr.mxu0 0.0
    %2446 = vmatpush2.msra.mxu0 0.0
    %2447 = vmatprep.mubr.f32.mxu0 0.0
    %2448 = vmatmul.mubr.f32.gmra.mxu0 %v2237
    %v2449 = vpop.f32.mrf.mxu0
    %v2450 = vadd.f32 %v2302, %v2449
    %v2451 = vpop.f32.mrf.mxu0
    %2452 = vmatprep.mubr.f32.mxu0 0.0
    %2453 = vmatmul.mubr.f32.gmra.mxu0 %v2238
    %v2454 = vpop.f32.mrf.mxu0
    %v2455 = vadd.f32 %v2302, %v2454
    %v2456 = vpop.f32.mrf.mxu0
    %2457 = vdwg.mxu0
    %2458 = vst [vmem:[#allocation2] sm:$0xff] %v2373
    %2459 = vst [vmem:[#allocation2 + $0x8] sm:$0xff] %v2375
    %2460 = vst [vmem:[#allocation2 + $0x10] sm:$0xff] %v2450
    %2461 = vst [vmem:[#allocation2 + $0x18] sm:$0xff] %v2379
    %2462 = vst [vmem:[#allocation2 + $0x20] sm:$0xff] %v2381
    %2463 = vst [vmem:[#allocation2 + $0x28] sm:$0xff] %v2455
    %v2464 = vld [vmem:[#allocation2] sm:$0xff]
    %v2465 = vld [vmem:[#allocation2 + $0x8] sm:$0xff]
    %v2466 = vld [vmem:[#allocation2 + $0x10] sm:$0xff]
    %v2468 = vsel %vm374, %v2464, 0
    %v2471 = vsel %vm374, %v2465, 0
    %2473 = vmatprep.subr.mxu0 0.0
    %2474 = vmatpush1.xpose.msra.mxu0 0.0
    %2475 = vmatprep.subr.mxu0 0.0
    %2476 = vmatpush1.xpose.msra.mxu0 0.0
    %2477 = vmatprep.subr.mxu0 0.0
    %2478 = vmatpush1.xpose.msra.mxu0 0.0
    %2479 = vmatprep.subr.mxu0 0.0
    %2480 = vmatpush1.xpose.msra.mxu0 0.0
    %2481 = vmatprep.subr.mxu0 0.0
    %2482 = vmatpush1.xpose.msra.mxu0 0.0
    %2483 = vmatprep.subr.mxu0 0.0
    %2484 = vmatpush1.xpose.msra.mxu0 0.0
    %2485 = vmatprep.subr.mxu0 0.0
    %2486 = vmatpush1.xpose.msra.mxu0 0.0
    %2487 = vmatprep.subr.mxu0 0.0
    %2488 = vmatpush1.xpose.msra.mxu0 0.0
    %2489 = vmatprep.subr.mxu0 0.0
    %2490 = vmatpush1.xpose.msra.mxu0 0.0
    %2491 = vmatprep.subr.mxu0 0.0
    %2492 = vmatpush1.xpose.msra.mxu0 0.0
    %2493 = vmatprep.subr.mxu0 0.0
    %2494 = vmatpush1.xpose.msra.mxu0 0.0
    %2495 = vmatprep.subr.mxu0 0.0
    %2496 = vmatpush1.xpose.msra.mxu0 0.0
    %2497 = vmatprep.subr.mxu0 0.0
    %2498 = vmatpush1.xpose.msra.mxu0 0.0
    %2499 = vmatprep.subr.mxu0 0.0
    %2500 = vmatpush1.xpose.msra.mxu0 0.0
    %2501 = vmatprep.subr.mxu0 0.0
    %2502 = vmatpush1.xpose.msra.mxu0 0.0
    %2503 = vmatprep.subr.mxu0 0.0
    %2504 = vmatpush1.xpose.msra.mxu0 %v2471
    %2505 = vmatprep.subr.mxu0 0.0
    %2506 = vmatpush2.xpose.msra.mxu0 0.0
    %2507 = vmatprep.subr.mxu0 0.0
    %2508 = vmatpush2.xpose.msra.mxu0 0.0
    %2509 = vmatprep.subr.mxu0 0.0
    %2510 = vmatpush2.xpose.msra.mxu0 0.0
    %2511 = vmatprep.subr.mxu0 0.0
    %2512 = vmatpush2.xpose.msra.mxu0 0.0
    %2513 = vmatprep.subr.mxu0 0.0
    %2514 = vmatpush2.xpose.msra.mxu0 0.0
    %2515 = vmatprep.subr.mxu0 0.0
    %2516 = vmatpush2.xpose.msra.mxu0 0.0
    %2517 = vmatprep.subr.mxu0 0.0
    %2518 = vmatpush2.xpose.msra.mxu0 0.0
    %2519 = vmatprep.subr.mxu0 0.0
    %2520 = vmatpush2.xpose.msra.mxu0 0.0
    %2521 = vmatprep.subr.mxu0 0.0
    %2522 = vmatpush2.xpose.msra.mxu0 0.0
    %2523 = vmatprep.subr.mxu0 0.0
    %2524 = vmatpush2.xpose.msra.mxu0 0.0
    %2525 = vmatprep.subr.mxu0 0.0
    %2526 = vmatpush2.xpose.msra.mxu0 0.0
    %2527 = vmatprep.subr.mxu0 0.0
    %2528 = vmatpush2.xpose.msra.mxu0 0.0
    %2529 = vmatprep.subr.mxu0 0.0
    %2530 = vmatpush2.xpose.msra.mxu0 0.0
    %2531 = vmatprep.subr.mxu0 0.0
    %2532 = vmatpush2.xpose.msra.mxu0 0.0
    %2533 = vmatprep.subr.mxu0 0.0
    %2534 = vmatpush2.xpose.msra.mxu0 0.0
    %2535 = vmatprep.subr.mxu0 0.0
    %2536 = vmatpush2.xpose.msra.mxu0 0.0
    %2537 = vmatprep.mubr.f32.mxu0 0.0
    %2538 = vmatmul.mubr.f32.gmra.mxu0 %v2468
    %v2539 = vpop.f32.mrf.mxu0
    %v2540 = vadd.f32 0.0, %v2539
    %v2541 = vpop.f32.mrf.mxu0
    %2542 = vdwg.mxu0
    %v2543 = vmul.f32 %v2540, 0.17677669
    %v2544 = vadd.f32 %v2543, %v455
    %v2545 = vsel %vm457, %v2544, -inf
    %2546 = vmax.xlane.f32.xlu0 %v2545
    %v2547 = vpop.xlane.xlu0 %2546
    %v2548 = vsub.f32 %v2544, %v2547
    %v2549 = vmul.f32 %v2548, 1.442695
    %v2550 = vpow.pop %v2549
    %v2551 = vsel %vm457, %v2550, 0.0
    %2552 = vadd.xlane.f32.xlu0 %v2551
    %v2553 = vpop.xlane.xlu0 %2552
    %v2554 = vrcp.pop %v2553
    %v2555 = vmul.f32 %v2550, %v2554
    %v2557 = vsel %vm457, %v2555, 0
    %2559 = vmatprep.subr.mxu0 0.0
    %2560 = vmatpush1.msra.mxu0 0.0
    %2561 = vmatprep.subr.mxu0 0.0
    %2562 = vmatpush1.msra.mxu0 0.0
    %2563 = vmatprep.subr.mxu0 0.0
    %2564 = vmatpush1.msra.mxu0 0.0
    %2565 = vmatprep.subr.mxu0 0.0
    %2566 = vmatpush1.msra.mxu0 0.0
    %2567 = vmatprep.subr.mxu0 0.0
    %2568 = vmatpush1.msra.mxu0 0.0
    %2569 = vmatprep.subr.mxu0 0.0
    %2570 = vmatpush1.msra.mxu0 0.0
    %2571 = vmatprep.subr.mxu0 0.0
    %2572 = vmatpush1.msra.mxu0 0.0
    %2573 = vmatprep.subr.mxu0 0.0
    %2574 = vmatpush1.msra.mxu0 0.0
    %2575 = vmatprep.subr.mxu0 0.0
    %2576 = vmatpush1.msra.mxu0 0.0
    %2577 = vmatprep.subr.mxu0 0.0
    %2578 = vmatpush1.msra.mxu0 0.0
    %2579 = vmatprep.subr.mxu0 0.0
    %2580 = vmatpush1.msra.mxu0 0.0
    %2581 = vmatprep.subr.mxu0 0.0
    %2582 = vmatpush1.msra.mxu0 0.0
    %2583 = vmatprep.subr.mxu0 0.0
    %2584 = vmatpush1.msra.mxu0 0.0
    %2585 = vmatprep.subr.mxu0 0.0
    %2586 = vmatpush1.msra.mxu0 0.0
    %2587 = vmatprep.subr.mxu0 0.0
    %2588 = vmatpush1.msra.mxu0 0.0
    %2589 = vmatprep.subr.mxu0 0.0
    %2590 = vmatpush1.msra.mxu0 %v2466
    %2591 = vmatprep.subr.mxu0 0.0
    %2592 = vmatpush2.msra.mxu0 0.0
    %2593 = vmatprep.subr.mxu0 0.0
    %2594 = vmatpush2.msra.mxu0 0.0
    %2595 = vmatprep.subr.mxu0 0.0
    %2596 = vmatpush2.msra.mxu0 0.0
    %2597 = vmatprep.subr.mxu0 0.0
    %2598 = vmatpush2.msra.mxu0 0.0
    %2599 = vmatprep.subr.mxu0 0.0
    %2600 = vmatpush2.msra.mxu0 0.0
    %2601 = vmatprep.subr.mxu0 0.0
    %2602 = vmatpush2.msra.mxu0 0.0
    %2603 = vmatprep.subr.mxu0 0.0
    %2604 = vmatpush2.msra.mxu0 0.0
    %2605 = vmatprep.subr.mxu0 0.0
    %2606 = vmatpush2.msra.mxu0 0.0
    %2607 = vmatprep.subr.mxu0 0.0
    %2608 = vmatpush2.msra.mxu0 0.0
    %2609 = vmatprep.subr.mxu0 0.0
    %2610 = vmatpush2.msra.mxu0 0.0
    %2611 = vmatprep.subr.mxu0 0.0
    %2612 = vmatpush2.msra.mxu0 0.0
    %2613 = vmatprep.subr.mxu0 0.0
    %2614 = vmatpush2.msra.mxu0 0.0
    %2615 = vmatprep.subr.mxu0 0.0
    %2616 = vmatpush2.msra.mxu0 0.0
    %2617 = vmatprep.subr.mxu0 0.0
    %2618 = vmatpush2.msra.mxu0 0.0
    %2619 = vmatprep.subr.mxu0 0.0
    %2620 = vmatpush2.msra.mxu0 0.0
    %2621 = vmatprep.subr.mxu0 0.0
    %2622 = vmatpush2.msra.mxu0 0.0
    %2623 = vmatprep.mubr.f32.mxu0 0.0
    %2624 = vmatmul.mubr.f32.gmra.mxu0 %v2557
    %v2625 = vpop.f32.mrf.mxu0
    %v2626 = vadd.f32 0.0, %v2625
    %v2627 = vpop.f32.mrf.mxu0
    %2628 = vdwg.mxu0
    %2629 = vst.msk [vmem:[#allocation3] sm:$0xff] %vm374, %v2626
    %v2630 = vld [vmem:[#allocation2] sm:$0xff]
    %v2631 = vld [vmem:[#allocation2 + $0x8] sm:$0xff]
    %v2632 = vld [vmem:[#allocation2 + $0x10] sm:$0xff]
    %2634 = vrot.lane.b32.xlu0 %v2630, 96
    %v2635 = vpop.permute.xlu0 %2634
    %2637 = vrot.lane.b32.xlu0 %v2631, 96
    %v2638 = vpop.permute.xlu0 %2637
    %v2639 = vsel %vm374, %v2635, 0
    %v2641 = vsel %vm374, %v2638, 0
    %2643 = vmatprep.subr.mxu0 0.0
    %2644 = vmatpush1.xpose.msra.mxu0 0.0
    %2645 = vmatprep.subr.mxu0 0.0
    %2646 = vmatpush1.xpose.msra.mxu0 0.0
    %2647 = vmatprep.subr.mxu0 0.0
    %2648 = vmatpush1.xpose.msra.mxu0 0.0
    %2649 = vmatprep.subr.mxu0 0.0
    %2650 = vmatpush1.xpose.msra.mxu0 0.0
    %2651 = vmatprep.subr.mxu0 0.0
    %2652 = vmatpush1.xpose.msra.mxu0 0.0
    %2653 = vmatprep.subr.mxu0 0.0
    %2654 = vmatpush1.xpose.msra.mxu0 0.0
    %2655 = vmatprep.subr.mxu0 0.0
    %2656 = vmatpush1.xpose.msra.mxu0 0.0
    %2657 = vmatprep.subr.mxu0 0.0
    %2658 = vmatpush1.xpose.msra.mxu0 0.0
    %2659 = vmatprep.subr.mxu0 0.0
    %2660 = vmatpush1.xpose.msra.mxu0 0.0
    %2661 = vmatprep.subr.mxu0 0.0
    %2662 = vmatpush1.xpose.msra.mxu0 0.0
    %2663 = vmatprep.subr.mxu0 0.0
    %2664 = vmatpush1.xpose.msra.mxu0 0.0
    %2665 = vmatprep.subr.mxu0 0.0
    %2666 = vmatpush1.xpose.msra.mxu0 0.0
    %2667 = vmatprep.subr.mxu0 0.0
    %2668 = vmatpush1.xpose.msra.mxu0 0.0
    %2669 = vmatprep.subr.mxu0 0.0
    %2670 = vmatpush1.xpose.msra.mxu0 0.0
    %2671 = vmatprep.subr.mxu0 0.0
    %2672 = vmatpush1.xpose.msra.mxu0 0.0
    %2673 = vmatprep.subr.mxu0 0.0
    %2674 = vmatpush1.xpose.msra.mxu0 %v2641
    %2675 = vmatprep.subr.mxu0 0.0
    %2676 = vmatpush2.xpose.msra.mxu0 0.0
    %2677 = vmatprep.subr.mxu0 0.0
    %2678 = vmatpush2.xpose.msra.mxu0 0.0
    %2679 = vmatprep.subr.mxu0 0.0
    %2680 = vmatpush2.xpose.msra.mxu0 0.0
    %2681 = vmatprep.subr.mxu0 0.0
    %2682 = vmatpush2.xpose.msra.mxu0 0.0
    %2683 = vmatprep.subr.mxu0 0.0
    %2684 = vmatpush2.xpose.msra.mxu0 0.0
    %2685 = vmatprep.subr.mxu0 0.0
    %2686 = vmatpush2.xpose.msra.mxu0 0.0
    %2687 = vmatprep.subr.mxu0 0.0
    %2688 = vmatpush2.xpose.msra.mxu0 0.0
    %2689 = vmatprep.subr.mxu0 0.0
    %2690 = vmatpush2.xpose.msra.mxu0 0.0
    %2691 = vmatprep.subr.mxu0 0.0
    %2692 = vmatpush2.xpose.msra.mxu0 0.0
    %2693 = vmatprep.subr.mxu0 0.0
    %2694 = vmatpush2.xpose.msra.mxu0 0.0
    %2695 = vmatprep.subr.mxu0 0.0
    %2696 = vmatpush2.xpose.msra.mxu0 0.0
    %2697 = vmatprep.subr.mxu0 0.0
    %2698 = vmatpush2.xpose.msra.mxu0 0.0
    %2699 = vmatprep.subr.mxu0 0.0
    %2700 = vmatpush2.xpose.msra.mxu0 0.0
    %2701 = vmatprep.subr.mxu0 0.0
    %2702 = vmatpush2.xpose.msra.mxu0 0.0
    %2703 = vmatprep.subr.mxu0 0.0
    %2704 = vmatpush2.xpose.msra.mxu0 0.0
    %2705 = vmatprep.subr.mxu0 0.0
    %2706 = vmatpush2.xpose.msra.mxu0 0.0
    %2707 = vmatprep.mubr.f32.mxu0 0.0
    %2708 = vmatmul.mubr.f32.gmra.mxu0 %v2639
    %v2709 = vpop.f32.mrf.mxu0
    %v2710 = vadd.f32 0.0, %v2709
    %v2711 = vpop.f32.mrf.mxu0
    %2712 = vdwg.mxu0
    %v2713 = vmul.f32 %v2710, 0.17677669
    %v2714 = vadd.f32 %v2713, %v455
    %v2715 = vsel %vm457, %v2714, -inf
    %2716 = vmax.xlane.f32.xlu0 %v2715
    %v2717 = vpop.xlane.xlu0 %2716
    %v2718 = vsub.f32 %v2714, %v2717
    %v2719 = vmul.f32 %v2718, 1.442695
    %v2720 = vpow.pop %v2719
    %v2721 = vsel %vm457, %v2720, 0.0
    %2722 = vadd.xlane.f32.xlu0 %v2721
    %v2723 = vpop.xlane.xlu0 %2722
    %v2724 = vrcp.pop %v2723
    %v2725 = vmul.f32 %v2720, %v2724
    %2727 = vrot.lane.b32.xlu0 %v2632, 96
    %v2728 = vpop.permute.xlu0 %2727
    %v2731 = vsel %vm457, %v2725, 0
    %2733 = vmatprep.subr.mxu0 0.0
    %2734 = vmatpush1.msra.mxu0 0.0
    %2735 = vmatprep.subr.mxu0 0.0
    %2736 = vmatpush1.msra.mxu0 0.0
    %2737 = vmatprep.subr.mxu0 0.0
    %2738 = vmatpush1.msra.mxu0 0.0
    %2739 = vmatprep.subr.mxu0 0.0
    %2740 = vmatpush1.msra.mxu0 0.0
    %2741 = vmatprep.subr.mxu0 0.0
    %2742 = vmatpush1.msra.mxu0 0.0
    %2743 = vmatprep.subr.mxu0 0.0
    %2744 = vmatpush1.msra.mxu0 0.0
    %2745 = vmatprep.subr.mxu0 0.0
    %2746 = vmatpush1.msra.mxu0 0.0
    %2747 = vmatprep.subr.mxu0 0.0
    %2748 = vmatpush1.msra.mxu0 0.0
    %2749 = vmatprep.subr.mxu0 0.0
    %2750 = vmatpush1.msra.mxu0 0.0
    %2751 = vmatprep.subr.mxu0 0.0
    %2752 = vmatpush1.msra.mxu0 0.0
    %2753 = vmatprep.subr.mxu0 0.0
    %2754 = vmatpush1.msra.mxu0 0.0
    %2755 = vmatprep.subr.mxu0 0.0
    %2756 = vmatpush1.msra.mxu0 0.0
    %2757 = vmatprep.subr.mxu0 0.0
    %2758 = vmatpush1.msra.mxu0 0.0
    %2759 = vmatprep.subr.mxu0 0.0
    %2760 = vmatpush1.msra.mxu0 0.0
    %2761 = vmatprep.subr.mxu0 0.0
    %2762 = vmatpush1.msra.mxu0 0.0
    %2763 = vmatprep.subr.mxu0 0.0
    %2764 = vmatpush1.msra.mxu0 %v2728
    %2765 = vmatprep.subr.mxu0 0.0
    %2766 = vmatpush2.msra.mxu0 0.0
    %2767 = vmatprep.subr.mxu0 0.0
    %2768 = vmatpush2.msra.mxu0 0.0
    %2769 = vmatprep.subr.mxu0 0.0
    %2770 = vmatpush2.msra.mxu0 0.0
    %2771 = vmatprep.subr.mxu0 0.0
    %2772 = vmatpush2.msra.mxu0 0.0
    %2773 = vmatprep.subr.mxu0 0.0
    %2774 = vmatpush2.msra.mxu0 0.0
    %2775 = vmatprep.subr.mxu0 0.0
    %2776 = vmatpush2.msra.mxu0 0.0
    %2777 = vmatprep.subr.mxu0 0.0
    %2778 = vmatpush2.msra.mxu0 0.0
    %2779 = vmatprep.subr.mxu0 0.0
    %2780 = vmatpush2.msra.mxu0 0.0
    %2781 = vmatprep.subr.mxu0 0.0
    %2782 = vmatpush2.msra.mxu0 0.0
    %2783 = vmatprep.subr.mxu0 0.0
    %2784 = vmatpush2.msra.mxu0 0.0
    %2785 = vmatprep.subr.mxu0 0.0
    %2786 = vmatpush2.msra.mxu0 0.0
    %2787 = vmatprep.subr.mxu0 0.0
    %2788 = vmatpush2.msra.mxu0 0.0
    %2789 = vmatprep.subr.mxu0 0.0
    %2790 = vmatpush2.msra.mxu0 0.0
    %2791 = vmatprep.subr.mxu0 0.0
    %2792 = vmatpush2.msra.mxu0 0.0
    %2793 = vmatprep.subr.mxu0 0.0
    %2794 = vmatpush2.msra.mxu0 0.0
    %2795 = vmatprep.subr.mxu0 0.0
    %2796 = vmatpush2.msra.mxu0 0.0
    %2797 = vmatprep.mubr.f32.mxu0 0.0
    %2798 = vmatmul.mubr.f32.gmra.mxu0 %v2731
    %v2799 = vpop.f32.mrf.mxu0
    %v2800 = vadd.f32 0.0, %v2799
    %v2801 = vpop.f32.mrf.mxu0
    %2802 = vdwg.mxu0
    %2804 = vrot.lane.b32.xlu0 %v2800, 32
    %v2805 = vpop.permute.xlu0 %2804
    %2807 = vst.msk [vmem:[#allocation3] sm:$0xff] %vm720, %v2805
    %v2808 = vld [vmem:[#allocation2] sm:$0xff]
    %v2809 = vld [vmem:[#allocation2 + $0x8] sm:$0xff]
    %v2810 = vld [vmem:[#allocation2 + $0x10] sm:$0xff]
    %2812 = vrot.lane.b32.xlu0 %v2808, 64
    %v2813 = vpop.permute.xlu0 %2812
    %2815 = vrot.lane.b32.xlu0 %v2809, 64
    %v2816 = vpop.permute.xlu0 %2815
    %v2817 = vsel %vm374, %v2813, 0
    %v2819 = vsel %vm374, %v2816, 0
    %2821 = vmatprep.subr.mxu0 0.0
    %2822 = vmatpush1.xpose.msra.mxu0 0.0
    %2823 = vmatprep.subr.mxu0 0.0
    %2824 = vmatpush1.xpose.msra.mxu0 0.0
    %2825 = vmatprep.subr.mxu0 0.0
    %2826 = vmatpush1.xpose.msra.mxu0 0.0
    %2827 = vmatprep.subr.mxu0 0.0
    %2828 = vmatpush1.xpose.msra.mxu0 0.0
    %2829 = vmatprep.subr.mxu0 0.0
    %2830 = vmatpush1.xpose.msra.mxu0 0.0
    %2831 = vmatprep.subr.mxu0 0.0
    %2832 = vmatpush1.xpose.msra.mxu0 0.0
    %2833 = vmatprep.subr.mxu0 0.0
    %2834 = vmatpush1.xpose.msra.mxu0 0.0
    %2835 = vmatprep.subr.mxu0 0.0
    %2836 = vmatpush1.xpose.msra.mxu0 0.0
    %2837 = vmatprep.subr.mxu0 0.0
    %2838 = vmatpush1.xpose.msra.mxu0 0.0
    %2839 = vmatprep.subr.mxu0 0.0
    %2840 = vmatpush1.xpose.msra.mxu0 0.0
    %2841 = vmatprep.subr.mxu0 0.0
    %2842 = vmatpush1.xpose.msra.mxu0 0.0
    %2843 = vmatprep.subr.mxu0 0.0
    %2844 = vmatpush1.xpose.msra.mxu0 0.0
    %2845 = vmatprep.subr.mxu0 0.0
    %2846 = vmatpush1.xpose.msra.mxu0 0.0
    %2847 = vmatprep.subr.mxu0 0.0
    %2848 = vmatpush1.xpose.msra.mxu0 0.0
    %2849 = vmatprep.subr.mxu0 0.0
    %2850 = vmatpush1.xpose.msra.mxu0 0.0
    %2851 = vmatprep.subr.mxu0 0.0
    %2852 = vmatpush1.xpose.msra.mxu0 %v2819
    %2853 = vmatprep.subr.mxu0 0.0
    %2854 = vmatpush2.xpose.msra.mxu0 0.0
    %2855 = vmatprep.subr.mxu0 0.0
    %2856 = vmatpush2.xpose.msra.mxu0 0.0
    %2857 = vmatprep.subr.mxu0 0.0
    %2858 = vmatpush2.xpose.msra.mxu0 0.0
    %2859 = vmatprep.subr.mxu0 0.0
    %2860 = vmatpush2.xpose.msra.mxu0 0.0
    %2861 = vmatprep.subr.mxu0 0.0
    %2862 = vmatpush2.xpose.msra.mxu0 0.0
    %2863 = vmatprep.subr.mxu0 0.0
    %2864 = vmatpush2.xpose.msra.mxu0 0.0
    %2865 = vmatprep.subr.mxu0 0.0
    %2866 = vmatpush2.xpose.msra.mxu0 0.0
    %2867 = vmatprep.subr.mxu0 0.0
    %2868 = vmatpush2.xpose.msra.mxu0 0.0
    %2869 = vmatprep.subr.mxu0 0.0
    %2870 = vmatpush2.xpose.msra.mxu0 0.0
    %2871 = vmatprep.subr.mxu0 0.0
    %2872 = vmatpush2.xpose.msra.mxu0 0.0
    %2873 = vmatprep.subr.mxu0 0.0
    %2874 = vmatpush2.xpose.msra.mxu0 0.0
    %2875 = vmatprep.subr.mxu0 0.0
    %2876 = vmatpush2.xpose.msra.mxu0 0.0
    %2877 = vmatprep.subr.mxu0 0.0
    %2878 = vmatpush2.xpose.msra.mxu0 0.0
    %2879 = vmatprep.subr.mxu0 0.0
    %2880 = vmatpush2.xpose.msra.mxu0 0.0
    %2881 = vmatprep.subr.mxu0 0.0
    %2882 = vmatpush2.xpose.msra.mxu0 0.0
    %2883 = vmatprep.subr.mxu0 0.0
    %2884 = vmatpush2.xpose.msra.mxu0 0.0
    %2885 = vmatprep.mubr.f32.mxu0 0.0
    %2886 = vmatmul.mubr.f32.gmra.mxu0 %v2817
    %v2887 = vpop.f32.mrf.mxu0
    %v2888 = vadd.f32 0.0, %v2887
    %v2889 = vpop.f32.mrf.mxu0
    %2890 = vdwg.mxu0
    %v2891 = vmul.f32 %v2888, 0.17677669
    %v2892 = vadd.f32 %v2891, %v455
    %v2893 = vsel %vm457, %v2892, -inf
    %2894 = vmax.xlane.f32.xlu0 %v2893
    %v2895 = vpop.xlane.xlu0 %2894
    %v2896 = vsub.f32 %v2892, %v2895
    %v2897 = vmul.f32 %v2896, 1.442695
    %v2898 = vpow.pop %v2897
    %v2899 = vsel %vm457, %v2898, 0.0
    %2900 = vadd.xlane.f32.xlu0 %v2899
    %v2901 = vpop.xlane.xlu0 %2900
    %v2902 = vrcp.pop %v2901
    %v2903 = vmul.f32 %v2898, %v2902
    %2905 = vrot.lane.b32.xlu0 %v2810, 64
    %v2906 = vpop.permute.xlu0 %2905
    %v2909 = vsel %vm457, %v2903, 0
    %2911 = vmatprep.subr.mxu0 0.0
    %2912 = vmatpush1.msra.mxu0 0.0
    %2913 = vmatprep.subr.mxu0 0.0
    %2914 = vmatpush1.msra.mxu0 0.0
    %2915 = vmatprep.subr.mxu0 0.0
    %2916 = vmatpush1.msra.mxu0 0.0
    %2917 = vmatprep.subr.mxu0 0.0
    %2918 = vmatpush1.msra.mxu0 0.0
    %2919 = vmatprep.subr.mxu0 0.0
    %2920 = vmatpush1.msra.mxu0 0.0
    %2921 = vmatprep.subr.mxu0 0.0
    %2922 = vmatpush1.msra.mxu0 0.0
    %2923 = vmatprep.subr.mxu0 0.0
    %2924 = vmatpush1.msra.mxu0 0.0
    %2925 = vmatprep.subr.mxu0 0.0
    %2926 = vmatpush1.msra.mxu0 0.0
    %2927 = vmatprep.subr.mxu0 0.0
    %2928 = vmatpush1.msra.mxu0 0.0
    %2929 = vmatprep.subr.mxu0 0.0
    %2930 = vmatpush1.msra.mxu0 0.0
    %2931 = vmatprep.subr.mxu0 0.0
    %2932 = vmatpush1.msra.mxu0 0.0
    %2933 = vmatprep.subr.mxu0 0.0
    %2934 = vmatpush1.msra.mxu0 0.0
    %2935 = vmatprep.subr.mxu0 0.0
    %2936 = vmatpush1.msra.mxu0 0.0
    %2937 = vmatprep.subr.mxu0 0.0
    %2938 = vmatpush1.msra.mxu0 0.0
    %2939 = vmatprep.subr.mxu0 0.0
    %2940 = vmatpush1.msra.mxu0 0.0
    %2941 = vmatprep.subr.mxu0 0.0
    %2942 = vmatpush1.msra.mxu0 %v2906
    %2943 = vmatprep.subr.mxu0 0.0
    %2944 = vmatpush2.msra.mxu0 0.0
    %2945 = vmatprep.subr.mxu0 0.0
    %2946 = vmatpush2.msra.mxu0 0.0
    %2947 = vmatprep.subr.mxu0 0.0
    %2948 = vmatpush2.msra.mxu0 0.0
    %2949 = vmatprep.subr.mxu0 0.0
    %2950 = vmatpush2.msra.mxu0 0.0
    %2951 = vmatprep.subr.mxu0 0.0
    %2952 = vmatpush2.msra.mxu0 0.0
    %2953 = vmatprep.subr.mxu0 0.0
    %2954 = vmatpush2.msra.mxu0 0.0
    %2955 = vmatprep.subr.mxu0 0.0
    %2956 = vmatpush2.msra.mxu0 0.0
    %2957 = vmatprep.subr.mxu0 0.0
    %2958 = vmatpush2.msra.mxu0 0.0
    %2959 = vmatprep.subr.mxu0 0.0
    %2960 = vmatpush2.msra.mxu0 0.0
    %2961 = vmatprep.subr.mxu0 0.0
    %2962 = vmatpush2.msra.mxu0 0.0
    %2963 = vmatprep.subr.mxu0 0.0
    %2964 = vmatpush2.msra.mxu0 0.0
    %2965 = vmatprep.subr.mxu0 0.0
    %2966 = vmatpush2.msra.mxu0 0.0
    %2967 = vmatprep.subr.mxu0 0.0
    %2968 = vmatpush2.msra.mxu0 0.0
    %2969 = vmatprep.subr.mxu0 0.0
    %2970 = vmatpush2.msra.mxu0 0.0
    %2971 = vmatprep.subr.mxu0 0.0
    %2972 = vmatpush2.msra.mxu0 0.0
    %2973 = vmatprep.subr.mxu0 0.0
    %2974 = vmatpush2.msra.mxu0 0.0
    %2975 = vmatprep.mubr.f32.mxu0 0.0
    %2976 = vmatmul.mubr.f32.gmra.mxu0 %v2909
    %v2977 = vpop.f32.mrf.mxu0
    %v2978 = vadd.f32 0.0, %v2977
    %v2979 = vpop.f32.mrf.mxu0
    %2980 = vdwg.mxu0
    %2982 = vrot.lane.b32.xlu0 %v2978, 64
    %v2983 = vpop.permute.xlu0 %2982
    %2985 = vst.msk [vmem:[#allocation3] sm:$0xff] %vm899, %v2983
    %v2986 = vld [vmem:[#allocation2] sm:$0xff]
    %v2987 = vld [vmem:[#allocation2 + $0x8] sm:$0xff]
    %v2988 = vld [vmem:[#allocation2 + $0x10] sm:$0xff]
    %2990 = vrot.lane.b32.xlu0 %v2986, 32
    %v2991 = vpop.permute.xlu0 %2990
    %2993 = vrot.lane.b32.xlu0 %v2987, 32
    %v2994 = vpop.permute.xlu0 %2993
    %v2995 = vsel %vm374, %v2991, 0
    %v2997 = vsel %vm374, %v2994, 0
    %2999 = vmatprep.subr.mxu0 0.0
    %3000 = vmatpush1.xpose.msra.mxu0 0.0
    %3001 = vmatprep.subr.mxu0 0.0
    %3002 = vmatpush1.xpose.msra.mxu0 0.0
    %3003 = vmatprep.subr.mxu0 0.0
    %3004 = vmatpush1.xpose.msra.mxu0 0.0
    %3005 = vmatprep.subr.mxu0 0.0
    %3006 = vmatpush1.xpose.msra.mxu0 0.0
    %3007 = vmatprep.subr.mxu0 0.0
    %3008 = vmatpush1.xpose.msra.mxu0 0.0
    %3009 = vmatprep.subr.mxu0 0.0
    %3010 = vmatpush1.xpose.msra.mxu0 0.0
    %3011 = vmatprep.subr.mxu0 0.0
    %3012 = vmatpush1.xpose.msra.mxu0 0.0
    %3013 = vmatprep.subr.mxu0 0.0
    %3014 = vmatpush1.xpose.msra.mxu0 0.0
    %3015 = vmatprep.subr.mxu0 0.0
    %3016 = vmatpush1.xpose.msra.mxu0 0.0
    %3017 = vmatprep.subr.mxu0 0.0
    %3018 = vmatpush1.xpose.msra.mxu0 0.0
    %3019 = vmatprep.subr.mxu0 0.0
    %3020 = vmatpush1.xpose.msra.mxu0 0.0
    %3021 = vmatprep.subr.mxu0 0.0
    %3022 = vmatpush1.xpose.msra.mxu0 0.0
    %3023 = vmatprep.subr.mxu0 0.0
    %3024 = vmatpush1.xpose.msra.mxu0 0.0
    %3025 = vmatprep.subr.mxu0 0.0
    %3026 = vmatpush1.xpose.msra.mxu0 0.0
    %3027 = vmatprep.subr.mxu0 0.0
    %3028 = vmatpush1.xpose.msra.mxu0 0.0
    %3029 = vmatprep.subr.mxu0 0.0
    %3030 = vmatpush1.xpose.msra.mxu0 %v2997
    %3031 = vmatprep.subr.mxu0 0.0
    %3032 = vmatpush2.xpose.msra.mxu0 0.0
    %3033 = vmatprep.subr.mxu0 0.0
    %3034 = vmatpush2.xpose.msra.mxu0 0.0
    %3035 = vmatprep.subr.mxu0 0.0
    %3036 = vmatpush2.xpose.msra.mxu0 0.0
    %3037 = vmatprep.subr.mxu0 0.0
    %3038 = vmatpush2.xpose.msra.mxu0 0.0
    %3039 = vmatprep.subr.mxu0 0.0
    %3040 = vmatpush2.xpose.msra.mxu0 0.0
    %3041 = vmatprep.subr.mxu0 0.0
    %3042 = vmatpush2.xpose.msra.mxu0 0.0
    %3043 = vmatprep.subr.mxu0 0.0
    %3044 = vmatpush2.xpose.msra.mxu0 0.0
    %3045 = vmatprep.subr.mxu0 0.0
    %3046 = vmatpush2.xpose.msra.mxu0 0.0
    %3047 = vmatprep.subr.mxu0 0.0
    %3048 = vmatpush2.xpose.msra.mxu0 0.0
    %3049 = vmatprep.subr.mxu0 0.0
    %3050 = vmatpush2.xpose.msra.mxu0 0.0
    %3051 = vmatprep.subr.mxu0 0.0
    %3052 = vmatpush2.xpose.msra.mxu0 0.0
    %3053 = vmatprep.subr.mxu0 0.0
    %3054 = vmatpush2.xpose.msra.mxu0 0.0
    %3055 = vmatprep.subr.mxu0 0.0
    %3056 = vmatpush2.xpose.msra.mxu0 0.0
    %3057 = vmatprep.subr.mxu0 0.0
    %3058 = vmatpush2.xpose.msra.mxu0 0.0
    %3059 = vmatprep.subr.mxu0 0.0
    %3060 = vmatpush2.xpose.msra.mxu0 0.0
    %3061 = vmatprep.subr.mxu0 0.0
    %3062 = vmatpush2.xpose.msra.mxu0 0.0
    %3063 = vmatprep.mubr.f32.mxu0 0.0
    %3064 = vmatmul.mubr.f32.gmra.mxu0 %v2995
    %v3065 = vpop.f32.mrf.mxu0
    %v3066 = vadd.f32 0.0, %v3065
    %v3067 = vpop.f32.mrf.mxu0
    %3068 = vdwg.mxu0
    %v3069 = vmul.f32 %v3066, 0.17677669
    %v3070 = vadd.f32 %v3069, %v455
    %v3071 = vsel %vm457, %v3070, -inf
    %3072 = vmax.xlane.f32.xlu0 %v3071
    %v3073 = vpop.xlane.xlu0 %3072
    %v3074 = vsub.f32 %v3070, %v3073
    %v3075 = vmul.f32 %v3074, 1.442695
    %v3076 = vpow.pop %v3075
    %v3077 = vsel %vm457, %v3076, 0.0
    %3078 = vadd.xlane.f32.xlu0 %v3077
    %v3079 = vpop.xlane.xlu0 %3078
    %v3080 = vrcp.pop %v3079
    %v3081 = vmul.f32 %v3076, %v3080
    %3083 = vrot.lane.b32.xlu0 %v2988, 32
    %v3084 = vpop.permute.xlu0 %3083
    %v3087 = vsel %vm457, %v3081, 0
    %3089 = vmatprep.subr.mxu0 0.0
    %3090 = vmatpush1.msra.mxu0 0.0
    %3091 = vmatprep.subr.mxu0 0.0
    %3092 = vmatpush1.msra.mxu0 0.0
    %3093 = vmatprep.subr.mxu0 0.0
    %3094 = vmatpush1.msra.mxu0 0.0
    %3095 = vmatprep.subr.mxu0 0.0
    %3096 = vmatpush1.msra.mxu0 0.0
    %3097 = vmatprep.subr.mxu0 0.0
    %3098 = vmatpush1.msra.mxu0 0.0
    %3099 = vmatprep.subr.mxu0 0.0
    %3100 = vmatpush1.msra.mxu0 0.0
    %3101 = vmatprep.subr.mxu0 0.0
    %3102 = vmatpush1.msra.mxu0 0.0
    %3103 = vmatprep.subr.mxu0 0.0
    %3104 = vmatpush1.msra.mxu0 0.0
    %3105 = vmatprep.subr.mxu0 0.0
    %3106 = vmatpush1.msra.mxu0 0.0
    %3107 = vmatprep.subr.mxu0 0.0
    %3108 = vmatpush1.msra.mxu0 0.0
    %3109 = vmatprep.subr.mxu0 0.0
    %3110 = vmatpush1.msra.mxu0 0.0
    %3111 = vmatprep.subr.mxu0 0.0
    %3112 = vmatpush1.msra.mxu0 0.0
    %3113 = vmatprep.subr.mxu0 0.0
    %3114 = vmatpush1.msra.mxu0 0.0
    %3115 = vmatprep.subr.mxu0 0.0
    %3116 = vmatpush1.msra.mxu0 0.0
    %3117 = vmatprep.subr.mxu0 0.0
    %3118 = vmatpush1.msra.mxu0 0.0
    %3119 = vmatprep.subr.mxu0 0.0
    %3120 = vmatpush1.msra.mxu0 %v3084
    %3121 = vmatprep.subr.mxu0 0.0
    %3122 = vmatpush2.msra.mxu0 0.0
    %3123 = vmatprep.subr.mxu0 0.0
    %3124 = vmatpush2.msra.mxu0 0.0
    %3125 = vmatprep.subr.mxu0 0.0
    %3126 = vmatpush2.msra.mxu0 0.0
    %3127 = vmatprep.subr.mxu0 0.0
    %3128 = vmatpush2.msra.mxu0 0.0
    %3129 = vmatprep.subr.mxu0 0.0
    %3130 = vmatpush2.msra.mxu0 0.0
    %3131 = vmatprep.subr.mxu0 0.0
    %3132 = vmatpush2.msra.mxu0 0.0
    %3133 = vmatprep.subr.mxu0 0.0
    %3134 = vmatpush2.msra.mxu0 0.0
    %3135 = vmatprep.subr.mxu0 0.0
    %3136 = vmatpush2.msra.mxu0 0.0
    %3137 = vmatprep.subr.mxu0 0.0
    %3138 = vmatpush2.msra.mxu0 0.0
    %3139 = vmatprep.subr.mxu0 0.0
    %3140 = vmatpush2.msra.mxu0 0.0
    %3141 = vmatprep.subr.mxu0 0.0
    %3142 = vmatpush2.msra.mxu0 0.0
    %3143 = vmatprep.subr.mxu0 0.0
    %3144 = vmatpush2.msra.mxu0 0.0
    %3145 = vmatprep.subr.mxu0 0.0
    %3146 = vmatpush2.msra.mxu0 0.0
    %3147 = vmatprep.subr.mxu0 0.0
    %3148 = vmatpush2.msra.mxu0 0.0
    %3149 = vmatprep.subr.mxu0 0.0
    %3150 = vmatpush2.msra.mxu0 0.0
    %3151 = vmatprep.subr.mxu0 0.0
    %3152 = vmatpush2.msra.mxu0 0.0
    %3153 = vmatprep.mubr.f32.mxu0 0.0
    %3154 = vmatmul.mubr.f32.gmra.mxu0 %v3087
    %v3155 = vpop.f32.mrf.mxu0
    %v3156 = vadd.f32 0.0, %v3155
    %v3157 = vpop.f32.mrf.mxu0
    %3158 = vdwg.mxu0
    %3160 = vrot.lane.b32.xlu0 %v3156, 96
    %v3161 = vpop.permute.xlu0 %3160
    %3163 = vst.msk [vmem:[#allocation3] sm:$0xff] %vm1078, %v3161
    %v3164 = vld [vmem:[#allocation2 + $0x18] sm:$0xff]
    %v3165 = vld [vmem:[#allocation2 + $0x20] sm:$0xff]
    %v3166 = vld [vmem:[#allocation2 + $0x28] sm:$0xff]
    %v3168 = vsel %vm374, %v3164, 0
    %v3171 = vsel %vm374, %v3165, 0
    %3173 = vmatprep.subr.mxu0 0.0
    %3174 = vmatpush1.xpose.msra.mxu0 0.0
    %3175 = vmatprep.subr.mxu0 0.0
    %3176 = vmatpush1.xpose.msra.mxu0 0.0
    %3177 = vmatprep.subr.mxu0 0.0
    %3178 = vmatpush1.xpose.msra.mxu0 0.0
    %3179 = vmatprep.subr.mxu0 0.0
    %3180 = vmatpush1.xpose.msra.mxu0 0.0
    %3181 = vmatprep.subr.mxu0 0.0
    %3182 = vmatpush1.xpose.msra.mxu0 0.0
    %3183 = vmatprep.subr.mxu0 0.0
    %3184 = vmatpush1.xpose.msra.mxu0 0.0
    %3185 = vmatprep.subr.mxu0 0.0
    %3186 = vmatpush1.xpose.msra.mxu0 0.0
    %3187 = vmatprep.subr.mxu0 0.0
    %3188 = vmatpush1.xpose.msra.mxu0 0.0
    %3189 = vmatprep.subr.mxu0 0.0
    %3190 = vmatpush1.xpose.msra.mxu0 0.0
    %3191 = vmatprep.subr.mxu0 0.0
    %3192 = vmatpush1.xpose.msra.mxu0 0.0
    %3193 = vmatprep.subr.mxu0 0.0
    %3194 = vmatpush1.xpose.msra.mxu0 0.0
    %3195 = vmatprep.subr.mxu0 0.0
    %3196 = vmatpush1.xpose.msra.mxu0 0.0
    %3197 = vmatprep.subr.mxu0 0.0
    %3198 = vmatpush1.xpose.msra.mxu0 0.0
    %3199 = vmatprep.subr.mxu0 0.0
    %3200 = vmatpush1.xpose.msra.mxu0 0.0
    %3201 = vmatprep.subr.mxu0 0.0
    %3202 = vmatpush1.xpose.msra.mxu0 0.0
    %3203 = vmatprep.subr.mxu0 0.0
    %3204 = vmatpush1.xpose.msra.mxu0 %v3171
    %3205 = vmatprep.subr.mxu0 0.0
    %3206 = vmatpush2.xpose.msra.mxu0 0.0
    %3207 = vmatprep.subr.mxu0 0.0
    %3208 = vmatpush2.xpose.msra.mxu0 0.0
    %3209 = vmatprep.subr.mxu0 0.0
    %3210 = vmatpush2.xpose.msra.mxu0 0.0
    %3211 = vmatprep.subr.mxu0 0.0
    %3212 = vmatpush2.xpose.msra.mxu0 0.0
    %3213 = vmatprep.subr.mxu0 0.0
    %3214 = vmatpush2.xpose.msra.mxu0 0.0
    %3215 = vmatprep.subr.mxu0 0.0
    %3216 = vmatpush2.xpose.msra.mxu0 0.0
    %3217 = vmatprep.subr.mxu0 0.0
    %3218 = vmatpush2.xpose.msra.mxu0 0.0
    %3219 = vmatprep.subr.mxu0 0.0
    %3220 = vmatpush2.xpose.msra.mxu0 0.0
    %3221 = vmatprep.subr.mxu0 0.0
    %3222 = vmatpush2.xpose.msra.mxu0 0.0
    %3223 = vmatprep.subr.mxu0 0.0
    %3224 = vmatpush2.xpose.msra.mxu0 0.0
    %3225 = vmatprep.subr.mxu0 0.0
    %3226 = vmatpush2.xpose.msra.mxu0 0.0
    %3227 = vmatprep.subr.mxu0 0.0
    %3228 = vmatpush2.xpose.msra.mxu0 0.0
    %3229 = vmatprep.subr.mxu0 0.0
    %3230 = vmatpush2.xpose.msra.mxu0 0.0
    %3231 = vmatprep.subr.mxu0 0.0
    %3232 = vmatpush2.xpose.msra.mxu0 0.0
    %3233 = vmatprep.subr.mxu0 0.0
    %3234 = vmatpush2.xpose.msra.mxu0 0.0
    %3235 = vmatprep.subr.mxu0 0.0
    %3236 = vmatpush2.xpose.msra.mxu0 0.0
    %3237 = vmatprep.mubr.f32.mxu0 0.0
    %3238 = vmatmul.mubr.f32.gmra.mxu0 %v3168
    %v3239 = vpop.f32.mrf.mxu0
    %v3240 = vadd.f32 0.0, %v3239
    %v3241 = vpop.f32.mrf.mxu0
    %3242 = vdwg.mxu0
    %v3243 = vmul.f32 %v3240, 0.17677669
    %v3244 = vadd.f32 %v3243, %v1163
    %v3245 = vsel %vm457, %v3244, -inf
    %3246 = vmax.xlane.f32.xlu0 %v3245
    %v3247 = vpop.xlane.xlu0 %3246
    %v3248 = vsub.f32 %v3244, %v3247
    %v3249 = vmul.f32 %v3248, 1.442695
    %v3250 = vpow.pop %v3249
    %v3251 = vsel %vm457, %v3250, 0.0
    %3252 = vadd.xlane.f32.xlu0 %v3251
    %v3253 = vpop.xlane.xlu0 %3252
    %v3254 = vrcp.pop %v3253
    %v3255 = vmul.f32 %v3250, %v3254
    %v3257 = vsel %vm457, %v3255, 0
    %3259 = vmatprep.subr.mxu0 0.0
    %3260 = vmatpush1.msra.mxu0 0.0
    %3261 = vmatprep.subr.mxu0 0.0
    %3262 = vmatpush1.msra.mxu0 0.0
    %3263 = vmatprep.subr.mxu0 0.0
    %3264 = vmatpush1.msra.mxu0 0.0
    %3265 = vmatprep.subr.mxu0 0.0
    %3266 = vmatpush1.msra.mxu0 0.0
    %3267 = vmatprep.subr.mxu0 0.0
    %3268 = vmatpush1.msra.mxu0 0.0
    %3269 = vmatprep.subr.mxu0 0.0
    %3270 = vmatpush1.msra.mxu0 0.0
    %3271 = vmatprep.subr.mxu0 0.0
    %3272 = vmatpush1.msra.mxu0 0.0
    %3273 = vmatprep.subr.mxu0 0.0
    %3274 = vmatpush1.msra.mxu0 0.0
    %3275 = vmatprep.subr.mxu0 0.0
    %3276 = vmatpush1.msra.mxu0 0.0
    %3277 = vmatprep.subr.mxu0 0.0
    %3278 = vmatpush1.msra.mxu0 0.0
    %3279 = vmatprep.subr.mxu0 0.0
    %3280 = vmatpush1.msra.mxu0 0.0
    %3281 = vmatprep.subr.mxu0 0.0
    %3282 = vmatpush1.msra.mxu0 0.0
    %3283 = vmatprep.subr.mxu0 0.0
    %3284 = vmatpush1.msra.mxu0 0.0
    %3285 = vmatprep.subr.mxu0 0.0
    %3286 = vmatpush1.msra.mxu0 0.0
    %3287 = vmatprep.subr.mxu0 0.0
    %3288 = vmatpush1.msra.mxu0 0.0
    %3289 = vmatprep.subr.mxu0 0.0
    %3290 = vmatpush1.msra.mxu0 %v3166
    %3291 = vmatprep.subr.mxu0 0.0
    %3292 = vmatpush2.msra.mxu0 0.0
    %3293 = vmatprep.subr.mxu0 0.0
    %3294 = vmatpush2.msra.mxu0 0.0
    %3295 = vmatprep.subr.mxu0 0.0
    %3296 = vmatpush2.msra.mxu0 0.0
    %3297 = vmatprep.subr.mxu0 0.0
    %3298 = vmatpush2.msra.mxu0 0.0
    %3299 = vmatprep.subr.mxu0 0.0
    %3300 = vmatpush2.msra.mxu0 0.0
    %3301 = vmatprep.subr.mxu0 0.0
    %3302 = vmatpush2.msra.mxu0 0.0
    %3303 = vmatprep.subr.mxu0 0.0
    %3304 = vmatpush2.msra.mxu0 0.0
    %3305 = vmatprep.subr.mxu0 0.0
    %3306 = vmatpush2.msra.mxu0 0.0
    %3307 = vmatprep.subr.mxu0 0.0
    %3308 = vmatpush2.msra.mxu0 0.0
    %3309 = vmatprep.subr.mxu0 0.0
    %3310 = vmatpush2.msra.mxu0 0.0
    %3311 = vmatprep.subr.mxu0 0.0
    %3312 = vmatpush2.msra.mxu0 0.0
    %3313 = vmatprep.subr.mxu0 0.0
    %3314 = vmatpush2.msra.mxu0 0.0
    %3315 = vmatprep.subr.mxu0 0.0
    %3316 = vmatpush2.msra.mxu0 0.0
    %3317 = vmatprep.subr.mxu0 0.0
    %3318 = vmatpush2.msra.mxu0 0.0
    %3319 = vmatprep.subr.mxu0 0.0
    %3320 = vmatpush2.msra.mxu0 0.0
    %3321 = vmatprep.subr.mxu0 0.0
    %3322 = vmatpush2.msra.mxu0 0.0
    %3323 = vmatprep.mubr.f32.mxu0 0.0
    %3324 = vmatmul.mubr.f32.gmra.mxu0 %v3257
    %v3325 = vpop.f32.mrf.mxu0
    %v3326 = vadd.f32 0.0, %v3325
    %v3327 = vpop.f32.mrf.mxu0
    %3328 = vdwg.mxu0
    %3329 = vst.msk [vmem:[#allocation3 + $0x8] sm:$0xff] %vm374, %v3326
    %v3330 = vld [vmem:[#allocation2 + $0x18] sm:$0xff]
    %v3331 = vld [vmem:[#allocation2 + $0x20] sm:$0xff]
    %v3332 = vld [vmem:[#allocation2 + $0x28] sm:$0xff]
    %3334 = vrot.lane.b32.xlu0 %v3330, 96
    %v3335 = vpop.permute.xlu0 %3334
    %3337 = vrot.lane.b32.xlu0 %v3331, 96
    %v3338 = vpop.permute.xlu0 %3337
    %v3339 = vsel %vm374, %v3335, 0
    %v3341 = vsel %vm374, %v3338, 0
    %3343 = vmatprep.subr.mxu0 0.0
    %3344 = vmatpush1.xpose.msra.mxu0 0.0
    %3345 = vmatprep.subr.mxu0 0.0
    %3346 = vmatpush1.xpose.msra.mxu0 0.0
    %3347 = vmatprep.subr.mxu0 0.0
    %3348 = vmatpush1.xpose.msra.mxu0 0.0
    %3349 = vmatprep.subr.mxu0 0.0
    %3350 = vmatpush1.xpose.msra.mxu0 0.0
    %3351 = vmatprep.subr.mxu0 0.0
    %3352 = vmatpush1.xpose.msra.mxu0 0.0
    %3353 = vmatprep.subr.mxu0 0.0
    %3354 = vmatpush1.xpose.msra.mxu0 0.0
    %3355 = vmatprep.subr.mxu0 0.0
    %3356 = vmatpush1.xpose.msra.mxu0 0.0
    %3357 = vmatprep.subr.mxu0 0.0
    %3358 = vmatpush1.xpose.msra.mxu0 0.0
    %3359 = vmatprep.subr.mxu0 0.0
    %3360 = vmatpush1.xpose.msra.mxu0 0.0
    %3361 = vmatprep.subr.mxu0 0.0
    %3362 = vmatpush1.xpose.msra.mxu0 0.0
    %3363 = vmatprep.subr.mxu0 0.0
    %3364 = vmatpush1.xpose.msra.mxu0 0.0
    %3365 = vmatprep.subr.mxu0 0.0
    %3366 = vmatpush1.xpose.msra.mxu0 0.0
    %3367 = vmatprep.subr.mxu0 0.0
    %3368 = vmatpush1.xpose.msra.mxu0 0.0
    %3369 = vmatprep.subr.mxu0 0.0
    %3370 = vmatpush1.xpose.msra.mxu0 0.0
    %3371 = vmatprep.subr.mxu0 0.0
    %3372 = vmatpush1.xpose.msra.mxu0 0.0
    %3373 = vmatprep.subr.mxu0 0.0
    %3374 = vmatpush1.xpose.msra.mxu0 %v3341
    %3375 = vmatprep.subr.mxu0 0.0
    %3376 = vmatpush2.xpose.msra.mxu0 0.0
    %3377 = vmatprep.subr.mxu0 0.0
    %3378 = vmatpush2.xpose.msra.mxu0 0.0
    %3379 = vmatprep.subr.mxu0 0.0
    %3380 = vmatpush2.xpose.msra.mxu0 0.0
    %3381 = vmatprep.subr.mxu0 0.0
    %3382 = vmatpush2.xpose.msra.mxu0 0.0
    %3383 = vmatprep.subr.mxu0 0.0
    %3384 = vmatpush2.xpose.msra.mxu0 0.0
    %3385 = vmatprep.subr.mxu0 0.0
    %3386 = vmatpush2.xpose.msra.mxu0 0.0
    %3387 = vmatprep.subr.mxu0 0.0
    %3388 = vmatpush2.xpose.msra.mxu0 0.0
    %3389 = vmatprep.subr.mxu0 0.0
    %3390 = vmatpush2.xpose.msra.mxu0 0.0
    %3391 = vmatprep.subr.mxu0 0.0
    %3392 = vmatpush2.xpose.msra.mxu0 0.0
    %3393 = vmatprep.subr.mxu0 0.0
    %3394 = vmatpush2.xpose.msra.mxu0 0.0
    %3395 = vmatprep.subr.mxu0 0.0
    %3396 = vmatpush2.xpose.msra.mxu0 0.0
    %3397 = vmatprep.subr.mxu0 0.0
    %3398 = vmatpush2.xpose.msra.mxu0 0.0
    %3399 = vmatprep.subr.mxu0 0.0
    %3400 = vmatpush2.xpose.msra.mxu0 0.0
    %3401 = vmatprep.subr.mxu0 0.0
    %3402 = vmatpush2.xpose.msra.mxu0 0.0
    %3403 = vmatprep.subr.mxu0 0.0
    %3404 = vmatpush2.xpose.msra.mxu0 0.0
    %3405 = vmatprep.subr.mxu0 0.0
    %3406 = vmatpush2.xpose.msra.mxu0 0.0
    %3407 = vmatprep.mubr.f32.mxu0 0.0
    %3408 = vmatmul.mubr.f32.gmra.mxu0 %v3339
    %v3409 = vpop.f32.mrf.mxu0
    %v3410 = vadd.f32 0.0, %v3409
    %v3411 = vpop.f32.mrf.mxu0
    %3412 = vdwg.mxu0
    %v3413 = vmul.f32 %v3410, 0.17677669
    %v3414 = vadd.f32 %v3413, %v1163
    %v3415 = vsel %vm457, %v3414, -inf
    %3416 = vmax.xlane.f32.xlu0 %v3415
    %v3417 = vpop.xlane.xlu0 %3416
    %v3418 = vsub.f32 %v3414, %v3417
    %v3419 = vmul.f32 %v3418, 1.442695
    %v3420 = vpow.pop %v3419
    %v3421 = vsel %vm457, %v3420, 0.0
    %3422 = vadd.xlane.f32.xlu0 %v3421
    %v3423 = vpop.xlane.xlu0 %3422
    %v3424 = vrcp.pop %v3423
    %v3425 = vmul.f32 %v3420, %v3424
    %3427 = vrot.lane.b32.xlu0 %v3332, 96
    %v3428 = vpop.permute.xlu0 %3427
    %v3431 = vsel %vm457, %v3425, 0
    %3433 = vmatprep.subr.mxu0 0.0
    %3434 = vmatpush1.msra.mxu0 0.0
    %3435 = vmatprep.subr.mxu0 0.0
    %3436 = vmatpush1.msra.mxu0 0.0
    %3437 = vmatprep.subr.mxu0 0.0
    %3438 = vmatpush1.msra.mxu0 0.0
    %3439 = vmatprep.subr.mxu0 0.0
    %3440 = vmatpush1.msra.mxu0 0.0
    %3441 = vmatprep.subr.mxu0 0.0
    %3442 = vmatpush1.msra.mxu0 0.0
    %3443 = vmatprep.subr.mxu0 0.0
    %3444 = vmatpush1.msra.mxu0 0.0
    %3445 = vmatprep.subr.mxu0 0.0
    %3446 = vmatpush1.msra.mxu0 0.0
    %3447 = vmatprep.subr.mxu0 0.0
    %3448 = vmatpush1.msra.mxu0 0.0
    %3449 = vmatprep.subr.mxu0 0.0
    %3450 = vmatpush1.msra.mxu0 0.0
    %3451 = vmatprep.subr.mxu0 0.0
    %3452 = vmatpush1.msra.mxu0 0.0
    %3453 = vmatprep.subr.mxu0 0.0
    %3454 = vmatpush1.msra.mxu0 0.0
    %3455 = vmatprep.subr.mxu0 0.0
    %3456 = vmatpush1.msra.mxu0 0.0
    %3457 = vmatprep.subr.mxu0 0.0
    %3458 = vmatpush1.msra.mxu0 0.0
    %3459 = vmatprep.subr.mxu0 0.0
    %3460 = vmatpush1.msra.mxu0 0.0
    %3461 = vmatprep.subr.mxu0 0.0
    %3462 = vmatpush1.msra.mxu0 0.0
    %3463 = vmatprep.subr.mxu0 0.0
    %3464 = vmatpush1.msra.mxu0 %v3428
    %3465 = vmatprep.subr.mxu0 0.0
    %3466 = vmatpush2.msra.mxu0 0.0
    %3467 = vmatprep.subr.mxu0 0.0
    %3468 = vmatpush2.msra.mxu0 0.0
    %3469 = vmatprep.subr.mxu0 0.0
    %3470 = vmatpush2.msra.mxu0 0.0
    %3471 = vmatprep.subr.mxu0 0.0
    %3472 = vmatpush2.msra.mxu0 0.0
    %3473 = vmatprep.subr.mxu0 0.0
    %3474 = vmatpush2.msra.mxu0 0.0
    %3475 = vmatprep.subr.mxu0 0.0
    %3476 = vmatpush2.msra.mxu0 0.0
    %3477 = vmatprep.subr.mxu0 0.0
    %3478 = vmatpush2.msra.mxu0 0.0
    %3479 = vmatprep.subr.mxu0 0.0
    %3480 = vmatpush2.msra.mxu0 0.0
    %3481 = vmatprep.subr.mxu0 0.0
    %3482 = vmatpush2.msra.mxu0 0.0
    %3483 = vmatprep.subr.mxu0 0.0
    %3484 = vmatpush2.msra.mxu0 0.0
    %3485 = vmatprep.subr.mxu0 0.0
    %3486 = vmatpush2.msra.mxu0 0.0
    %3487 = vmatprep.subr.mxu0 0.0
    %3488 = vmatpush2.msra.mxu0 0.0
    %3489 = vmatprep.subr.mxu0 0.0
    %3490 = vmatpush2.msra.mxu0 0.0
    %3491 = vmatprep.subr.mxu0 0.0
    %3492 = vmatpush2.msra.mxu0 0.0
    %3493 = vmatprep.subr.mxu0 0.0
    %3494 = vmatpush2.msra.mxu0 0.0
    %3495 = vmatprep.subr.mxu0 0.0
    %3496 = vmatpush2.msra.mxu0 0.0
    %3497 = vmatprep.mubr.f32.mxu0 0.0
    %3498 = vmatmul.mubr.f32.gmra.mxu0 %v3431
    %v3499 = vpop.f32.mrf.mxu0
    %v3500 = vadd.f32 0.0, %v3499
    %v3501 = vpop.f32.mrf.mxu0
    %3502 = vdwg.mxu0
    %3504 = vrot.lane.b32.xlu0 %v3500, 32
    %v3505 = vpop.permute.xlu0 %3504
    %3507 = vst.msk [vmem:[#allocation3 + $0x8] sm:$0xff] %vm720, %v3505
    %v3508 = vld [vmem:[#allocation2 + $0x18] sm:$0xff]
    %v3509 = vld [vmem:[#allocation2 + $0x20] sm:$0xff]
    %v3510 = vld [vmem:[#allocation2 + $0x28] sm:$0xff]
    %3512 = vrot.lane.b32.xlu0 %v3508, 64
    %v3513 = vpop.permute.xlu0 %3512
    %3515 = vrot.lane.b32.xlu0 %v3509, 64
    %v3516 = vpop.permute.xlu0 %3515
    %v3517 = vsel %vm374, %v3513, 0
    %v3519 = vsel %vm374, %v3516, 0
    %3521 = vmatprep.subr.mxu0 0.0
    %3522 = vmatpush1.xpose.msra.mxu0 0.0
    %3523 = vmatprep.subr.mxu0 0.0
    %3524 = vmatpush1.xpose.msra.mxu0 0.0
    %3525 = vmatprep.subr.mxu0 0.0
    %3526 = vmatpush1.xpose.msra.mxu0 0.0
    %3527 = vmatprep.subr.mxu0 0.0
    %3528 = vmatpush1.xpose.msra.mxu0 0.0
    %3529 = vmatprep.subr.mxu0 0.0
    %3530 = vmatpush1.xpose.msra.mxu0 0.0
    %3531 = vmatprep.subr.mxu0 0.0
    %3532 = vmatpush1.xpose.msra.mxu0 0.0
    %3533 = vmatprep.subr.mxu0 0.0
    %3534 = vmatpush1.xpose.msra.mxu0 0.0
    %3535 = vmatprep.subr.mxu0 0.0
    %3536 = vmatpush1.xpose.msra.mxu0 0.0
    %3537 = vmatprep.subr.mxu0 0.0
    %3538 = vmatpush1.xpose.msra.mxu0 0.0
    %3539 = vmatprep.subr.mxu0 0.0
    %3540 = vmatpush1.xpose.msra.mxu0 0.0
    %3541 = vmatprep.subr.mxu0 0.0
    %3542 = vmatpush1.xpose.msra.mxu0 0.0
    %3543 = vmatprep.subr.mxu0 0.0
    %3544 = vmatpush1.xpose.msra.mxu0 0.0
    %3545 = vmatprep.subr.mxu0 0.0
    %3546 = vmatpush1.xpose.msra.mxu0 0.0
    %3547 = vmatprep.subr.mxu0 0.0
    %3548 = vmatpush1.xpose.msra.mxu0 0.0
    %3549 = vmatprep.subr.mxu0 0.0
    %3550 = vmatpush1.xpose.msra.mxu0 0.0
    %3551 = vmatprep.subr.mxu0 0.0
    %3552 = vmatpush1.xpose.msra.mxu0 %v3519
    %3553 = vmatprep.subr.mxu0 0.0
    %3554 = vmatpush2.xpose.msra.mxu0 0.0
    %3555 = vmatprep.subr.mxu0 0.0
    %3556 = vmatpush2.xpose.msra.mxu0 0.0
    %3557 = vmatprep.subr.mxu0 0.0
    %3558 = vmatpush2.xpose.msra.mxu0 0.0
    %3559 = vmatprep.subr.mxu0 0.0
    %3560 = vmatpush2.xpose.msra.mxu0 0.0
    %3561 = vmatprep.subr.mxu0 0.0
    %3562 = vmatpush2.xpose.msra.mxu0 0.0
    %3563 = vmatprep.subr.mxu0 0.0
    %3564 = vmatpush2.xpose.msra.mxu0 0.0
    %3565 = vmatprep.subr.mxu0 0.0
    %3566 = vmatpush2.xpose.msra.mxu0 0.0
    %3567 = vmatprep.subr.mxu0 0.0
    %3568 = vmatpush2.xpose.msra.mxu0 0.0
    %3569 = vmatprep.subr.mxu0 0.0
    %3570 = vmatpush2.xpose.msra.mxu0 0.0
    %3571 = vmatprep.subr.mxu0 0.0
    %3572 = vmatpush2.xpose.msra.mxu0 0.0
    %3573 = vmatprep.subr.mxu0 0.0
    %3574 = vmatpush2.xpose.msra.mxu0 0.0
    %3575 = vmatprep.subr.mxu0 0.0
    %3576 = vmatpush2.xpose.msra.mxu0 0.0
    %3577 = vmatprep.subr.mxu0 0.0
    %3578 = vmatpush2.xpose.msra.mxu0 0.0
    %3579 = vmatprep.subr.mxu0 0.0
    %3580 = vmatpush2.xpose.msra.mxu0 0.0
    %3581 = vmatprep.subr.mxu0 0.0
    %3582 = vmatpush2.xpose.msra.mxu0 0.0
    %3583 = vmatprep.subr.mxu0 0.0
    %3584 = vmatpush2.xpose.msra.mxu0 0.0
    %3585 = vmatprep.mubr.f32.mxu0 0.0
    %3586 = vmatmul.mubr.f32.gmra.mxu0 %v3517
    %v3587 = vpop.f32.mrf.mxu0
    %v3588 = vadd.f32 0.0, %v3587
    %v3589 = vpop.f32.mrf.mxu0
    %3590 = vdwg.mxu0
    %v3591 = vmul.f32 %v3588, 0.17677669
    %v3592 = vadd.f32 %v3591, %v1163
    %v3593 = vsel %vm457, %v3592, -inf
    %3594 = vmax.xlane.f32.xlu0 %v3593
    %v3595 = vpop.xlane.xlu0 %3594
    %v3596 = vsub.f32 %v3592, %v3595
    %v3597 = vmul.f32 %v3596, 1.442695
    %v3598 = vpow.pop %v3597
    %v3599 = vsel %vm457, %v3598, 0.0
    %3600 = vadd.xlane.f32.xlu0 %v3599
    %v3601 = vpop.xlane.xlu0 %3600
    %v3602 = vrcp.pop %v3601
    %v3603 = vmul.f32 %v3598, %v3602
    %3605 = vrot.lane.b32.xlu0 %v3510, 64
    %v3606 = vpop.permute.xlu0 %3605
    %v3609 = vsel %vm457, %v3603, 0
    %3611 = vmatprep.subr.mxu0 0.0
    %3612 = vmatpush1.msra.mxu0 0.0
    %3613 = vmatprep.subr.mxu0 0.0
    %3614 = vmatpush1.msra.mxu0 0.0
    %3615 = vmatprep.subr.mxu0 0.0
    %3616 = vmatpush1.msra.mxu0 0.0
    %3617 = vmatprep.subr.mxu0 0.0
    %3618 = vmatpush1.msra.mxu0 0.0
    %3619 = vmatprep.subr.mxu0 0.0
    %3620 = vmatpush1.msra.mxu0 0.0
    %3621 = vmatprep.subr.mxu0 0.0
    %3622 = vmatpush1.msra.mxu0 0.0
    %3623 = vmatprep.subr.mxu0 0.0
    %3624 = vmatpush1.msra.mxu0 0.0
    %3625 = vmatprep.subr.mxu0 0.0
    %3626 = vmatpush1.msra.mxu0 0.0
    %3627 = vmatprep.subr.mxu0 0.0
    %3628 = vmatpush1.msra.mxu0 0.0
    %3629 = vmatprep.subr.mxu0 0.0
    %3630 = vmatpush1.msra.mxu0 0.0
    %3631 = vmatprep.subr.mxu0 0.0
    %3632 = vmatpush1.msra.mxu0 0.0
    %3633 = vmatprep.subr.mxu0 0.0
    %3634 = vmatpush1.msra.mxu0 0.0
    %3635 = vmatprep.subr.mxu0 0.0
    %3636 = vmatpush1.msra.mxu0 0.0
    %3637 = vmatprep.subr.mxu0 0.0
    %3638 = vmatpush1.msra.mxu0 0.0
    %3639 = vmatprep.subr.mxu0 0.0
    %3640 = vmatpush1.msra.mxu0 0.0
    %3641 = vmatprep.subr.mxu0 0.0
    %3642 = vmatpush1.msra.mxu0 %v3606
    %3643 = vmatprep.subr.mxu0 0.0
    %3644 = vmatpush2.msra.mxu0 0.0
    %3645 = vmatprep.subr.mxu0 0.0
    %3646 = vmatpush2.msra.mxu0 0.0
    %3647 = vmatprep.subr.mxu0 0.0
    %3648 = vmatpush2.msra.mxu0 0.0
    %3649 = vmatprep.subr.mxu0 0.0
    %3650 = vmatpush2.msra.mxu0 0.0
    %3651 = vmatprep.subr.mxu0 0.0
    %3652 = vmatpush2.msra.mxu0 0.0
    %3653 = vmatprep.subr.mxu0 0.0
    %3654 = vmatpush2.msra.mxu0 0.0
    %3655 = vmatprep.subr.mxu0 0.0
    %3656 = vmatpush2.msra.mxu0 0.0
    %3657 = vmatprep.subr.mxu0 0.0
    %3658 = vmatpush2.msra.mxu0 0.0
    %3659 = vmatprep.subr.mxu0 0.0
    %3660 = vmatpush2.msra.mxu0 0.0
    %3661 = vmatprep.subr.mxu0 0.0
    %3662 = vmatpush2.msra.mxu0 0.0
    %3663 = vmatprep.subr.mxu0 0.0
    %3664 = vmatpush2.msra.mxu0 0.0
    %3665 = vmatprep.subr.mxu0 0.0
    %3666 = vmatpush2.msra.mxu0 0.0
    %3667 = vmatprep.subr.mxu0 0.0
    %3668 = vmatpush2.msra.mxu0 0.0
    %3669 = vmatprep.subr.mxu0 0.0
    %3670 = vmatpush2.msra.mxu0 0.0
    %3671 = vmatprep.subr.mxu0 0.0
    %3672 = vmatpush2.msra.mxu0 0.0
    %3673 = vmatprep.subr.mxu0 0.0
    %3674 = vmatpush2.msra.mxu0 0.0
    %3675 = vmatprep.mubr.f32.mxu0 0.0
    %3676 = vmatmul.mubr.f32.gmra.mxu0 %v3609
    %v3677 = vpop.f32.mrf.mxu0
    %v3678 = vadd.f32 0.0, %v3677
    %v3679 = vpop.f32.mrf.mxu0
    %3680 = vdwg.mxu0
    %3682 = vrot.lane.b32.xlu0 %v3678, 64
    %v3683 = vpop.permute.xlu0 %3682
    %3685 = vst.msk [vmem:[#allocation3 + $0x8] sm:$0xff] %vm899, %v3683
    %v3686 = vld [vmem:[#allocation2 + $0x18] sm:$0xff]
    %v3687 = vld [vmem:[#allocation2 + $0x20] sm:$0xff]
    %v3688 = vld [vmem:[#allocation2 + $0x28] sm:$0xff]
    %3690 = vrot.lane.b32.xlu0 %v3686, 32
    %v3691 = vpop.permute.xlu0 %3690
    %3693 = vrot.lane.b32.xlu0 %v3687, 32
    %v3694 = vpop.permute.xlu0 %3693
    %v3695 = vsel %vm374, %v3691, 0
    %v3697 = vsel %vm374, %v3694, 0
    %3699 = vmatprep.subr.mxu0 0.0
    %3700 = vmatpush1.xpose.msra.mxu0 0.0
    %3701 = vmatprep.subr.mxu0 0.0
    %3702 = vmatpush1.xpose.msra.mxu0 0.0
    %3703 = vmatprep.subr.mxu0 0.0
    %3704 = vmatpush1.xpose.msra.mxu0 0.0
    %3705 = vmatprep.subr.mxu0 0.0
    %3706 = vmatpush1.xpose.msra.mxu0 0.0
    %3707 = vmatprep.subr.mxu0 0.0
    %3708 = vmatpush1.xpose.msra.mxu0 0.0
    %3709 = vmatprep.subr.mxu0 0.0
    %3710 = vmatpush1.xpose.msra.mxu0 0.0
    %3711 = vmatprep.subr.mxu0 0.0
    %3712 = vmatpush1.xpose.msra.mxu0 0.0
    %3713 = vmatprep.subr.mxu0 0.0
    %3714 = vmatpush1.xpose.msra.mxu0 0.0
    %3715 = vmatprep.subr.mxu0 0.0
    %3716 = vmatpush1.xpose.msra.mxu0 0.0
    %3717 = vmatprep.subr.mxu0 0.0
    %3718 = vmatpush1.xpose.msra.mxu0 0.0
    %3719 = vmatprep.subr.mxu0 0.0
    %3720 = vmatpush1.xpose.msra.mxu0 0.0
    %3721 = vmatprep.subr.mxu0 0.0
    %3722 = vmatpush1.xpose.msra.mxu0 0.0
    %3723 = vmatprep.subr.mxu0 0.0
    %3724 = vmatpush1.xpose.msra.mxu0 0.0
    %3725 = vmatprep.subr.mxu0 0.0
    %3726 = vmatpush1.xpose.msra.mxu0 0.0
    %3727 = vmatprep.subr.mxu0 0.0
    %3728 = vmatpush1.xpose.msra.mxu0 0.0
    %3729 = vmatprep.subr.mxu0 0.0
    %3730 = vmatpush1.xpose.msra.mxu0 %v3697
    %3731 = vmatprep.subr.mxu0 0.0
    %3732 = vmatpush2.xpose.msra.mxu0 0.0
    %3733 = vmatprep.subr.mxu0 0.0
    %3734 = vmatpush2.xpose.msra.mxu0 0.0
    %3735 = vmatprep.subr.mxu0 0.0
    %3736 = vmatpush2.xpose.msra.mxu0 0.0
    %3737 = vmatprep.subr.mxu0 0.0
    %3738 = vmatpush2.xpose.msra.mxu0 0.0
    %3739 = vmatprep.subr.mxu0 0.0
    %3740 = vmatpush2.xpose.msra.mxu0 0.0
    %3741 = vmatprep.subr.mxu0 0.0
    %3742 = vmatpush2.xpose.msra.mxu0 0.0
    %3743 = vmatprep.subr.mxu0 0.0
    %3744 = vmatpush2.xpose.msra.mxu0 0.0
    %3745 = vmatprep.subr.mxu0 0.0
    %3746 = vmatpush2.xpose.msra.mxu0 0.0
    %3747 = vmatprep.subr.mxu0 0.0
    %3748 = vmatpush2.xpose.msra.mxu0 0.0
    %3749 = vmatprep.subr.mxu0 0.0
    %3750 = vmatpush2.xpose.msra.mxu0 0.0
    %3751 = vmatprep.subr.mxu0 0.0
    %3752 = vmatpush2.xpose.msra.mxu0 0.0
    %3753 = vmatprep.subr.mxu0 0.0
    %3754 = vmatpush2.xpose.msra.mxu0 0.0
    %3755 = vmatprep.subr.mxu0 0.0
    %3756 = vmatpush2.xpose.msra.mxu0 0.0
    %3757 = vmatprep.subr.mxu0 0.0
    %3758 = vmatpush2.xpose.msra.mxu0 0.0
    %3759 = vmatprep.subr.mxu0 0.0
    %3760 = vmatpush2.xpose.msra.mxu0 0.0
    %3761 = vmatprep.subr.mxu0 0.0
    %3762 = vmatpush2.xpose.msra.mxu0 0.0
    %3763 = vmatprep.mubr.f32.mxu0 0.0
    %3764 = vmatmul.mubr.f32.gmra.mxu0 %v3695
    %v3765 = vpop.f32.mrf.mxu0
    %v3766 = vadd.f32 0.0, %v3765
    %v3767 = vpop.f32.mrf.mxu0
    %3768 = vdwg.mxu0
    %v3769 = vmul.f32 %v3766, 0.17677669
    %v3770 = vadd.f32 %v3769, %v1163
    %v3771 = vsel %vm457, %v3770, -inf
    %3772 = vmax.xlane.f32.xlu0 %v3771
    %v3773 = vpop.xlane.xlu0 %3772
    %v3774 = vsub.f32 %v3770, %v3773
    %v3775 = vmul.f32 %v3774, 1.442695
    %v3776 = vpow.pop %v3775
    %v3777 = vsel %vm457, %v3776, 0.0
    %3778 = vadd.xlane.f32.xlu0 %v3777
    %v3779 = vpop.xlane.xlu0 %3778
    %v3780 = vrcp.pop %v3779
    %v3781 = vmul.f32 %v3776, %v3780
    %3783 = vrot.lane.b32.xlu0 %v3688, 32
    %v3784 = vpop.permute.xlu0 %3783
    %v3787 = vsel %vm457, %v3781, 0
    %3789 = vmatprep.subr.mxu0 0.0
    %3790 = vmatpush1.msra.mxu0 0.0
    %3791 = vmatprep.subr.mxu0 0.0
    %3792 = vmatpush1.msra.mxu0 0.0
    %3793 = vmatprep.subr.mxu0 0.0
    %3794 = vmatpush1.msra.mxu0 0.0
    %3795 = vmatprep.subr.mxu0 0.0
    %3796 = vmatpush1.msra.mxu0 0.0
    %3797 = vmatprep.subr.mxu0 0.0
    %3798 = vmatpush1.msra.mxu0 0.0
    %3799 = vmatprep.subr.mxu0 0.0
    %3800 = vmatpush1.msra.mxu0 0.0
    %3801 = vmatprep.subr.mxu0 0.0
    %3802 = vmatpush1.msra.mxu0 0.0
    %3803 = vmatprep.subr.mxu0 0.0
    %3804 = vmatpush1.msra.mxu0 0.0
    %3805 = vmatprep.subr.mxu0 0.0
    %3806 = vmatpush1.msra.mxu0 0.0
    %3807 = vmatprep.subr.mxu0 0.0
    %3808 = vmatpush1.msra.mxu0 0.0
    %3809 = vmatprep.subr.mxu0 0.0
    %3810 = vmatpush1.msra.mxu0 0.0
    %3811 = vmatprep.subr.mxu0 0.0
    %3812 = vmatpush1.msra.mxu0 0.0
    %3813 = vmatprep.subr.mxu0 0.0
    %3814 = vmatpush1.msra.mxu0 0.0
    %3815 = vmatprep.subr.mxu0 0.0
    %3816 = vmatpush1.msra.mxu0 0.0
    %3817 = vmatprep.subr.mxu0 0.0
    %3818 = vmatpush1.msra.mxu0 0.0
    %3819 = vmatprep.subr.mxu0 0.0
    %3820 = vmatpush1.msra.mxu0 %v3784
    %3821 = vmatprep.subr.mxu0 0.0
    %3822 = vmatpush2.msra.mxu0 0.0
    %3823 = vmatprep.subr.mxu0 0.0
    %3824 = vmatpush2.msra.mxu0 0.0
    %3825 = vmatprep.subr.mxu0 0.0
    %3826 = vmatpush2.msra.mxu0 0.0
    %3827 = vmatprep.subr.mxu0 0.0
    %3828 = vmatpush2.msra.mxu0 0.0
    %3829 = vmatprep.subr.mxu0 0.0
    %3830 = vmatpush2.msra.mxu0 0.0
    %3831 = vmatprep.subr.mxu0 0.0
    %3832 = vmatpush2.msra.mxu0 0.0
    %3833 = vmatprep.subr.mxu0 0.0
    %3834 = vmatpush2.msra.mxu0 0.0
    %3835 = vmatprep.subr.mxu0 0.0
    %3836 = vmatpush2.msra.mxu0 0.0
    %3837 = vmatprep.subr.mxu0 0.0
    %3838 = vmatpush2.msra.mxu0 0.0
    %3839 = vmatprep.subr.mxu0 0.0
    %3840 = vmatpush2.msra.mxu0 0.0
    %3841 = vmatprep.subr.mxu0 0.0
    %3842 = vmatpush2.msra.mxu0 0.0
    %3843 = vmatprep.subr.mxu0 0.0
    %3844 = vmatpush2.msra.mxu0 0.0
    %3845 = vmatprep.subr.mxu0 0.0
    %3846 = vmatpush2.msra.mxu0 0.0
    %3847 = vmatprep.subr.mxu0 0.0
    %3848 = vmatpush2.msra.mxu0 0.0
    %3849 = vmatprep.subr.mxu0 0.0
    %3850 = vmatpush2.msra.mxu0 0.0
    %3851 = vmatprep.subr.mxu0 0.0
    %3852 = vmatpush2.msra.mxu0 0.0
    %3853 = vmatprep.mubr.f32.mxu0 0.0
    %3854 = vmatmul.mubr.f32.gmra.mxu0 %v3787
    %v3855 = vpop.f32.mrf.mxu0
    %v3856 = vadd.f32 0.0, %v3855
    %v3857 = vpop.f32.mrf.mxu0
    %3858 = vdwg.mxu0
    %3860 = vrot.lane.b32.xlu0 %v3856, 96
    %v3861 = vpop.permute.xlu0 %3860
    %3863 = vst.msk [vmem:[#allocation3 + $0x8] sm:$0xff] %vm1078, %v3861
    %v3864 = vld [vmem:[#allocation3] sm:$0xff]
    %v3865 = vld [vmem:[#allocation3 + $0x8] sm:$0xff]
    %s3866 = scalar_lea.vmem %s6, 128
    %v3867 = vld [vmem:[%s3866] sm:$0xff]
    %v3868 = vld [vmem:[%s3866 + $0x8] sm:$0xff]
    %v3869 = vld [vmem:[%s3866 + $0x10] sm:$0xff]
    %v3870 = vld [vmem:[%s3866 + $0x18] sm:$0xff]
    %v3871 = vld [vmem:[%s3866 + $0x20] sm:$0xff]
    %v3872 = vld [vmem:[%s3866 + $0x28] sm:$0xff]
    %v3873 = vld [vmem:[%s3866 + $0x30] sm:$0xff]
    %v3874 = vld [vmem:[%s3866 + $0x38] sm:$0xff]
    %v3875 = vld [vmem:[%s3866 + $0x40] sm:$0xff]
    %v3876 = vld [vmem:[%s3866 + $0x48] sm:$0xff]
    %v3877 = vld [vmem:[%s3866 + $0x50] sm:$0xff]
    %v3878 = vld [vmem:[%s3866 + $0x58] sm:$0xff]
    %v3879 = vld [vmem:[%s3866 + $0x60] sm:$0xff]
    %v3880 = vld [vmem:[%s3866 + $0x68] sm:$0xff]
    %v3881 = vld [vmem:[%s3866 + $0x70] sm:$0xff]
    %v3882 = vld [vmem:[%s3866 + $0x78] sm:$0xff]
    %s3883 = scalar_lea.vmem %s7, 1
    %v3884 = vld [vmem:[%s3883] sm:$0x1]
    %v3886 = vlaneseq
    %v3887 = vshrl.u32 %v3886, 7
    %v3888 = vsub.s32 0, %v3887
    %v3889 = vrot.slane %v3884, %v3888
    %3891 = vmatprep.subr.mxu0 0.0
    %3892 = vmatpush1.msra.mxu0 %v3882
    %3893 = vmatprep.subr.mxu0 0.0
    %3894 = vmatpush1.msra.mxu0 %v3881
    %3895 = vmatprep.subr.mxu0 0.0
    %3896 = vmatpush1.msra.mxu0 %v3880
    %3897 = vmatprep.subr.mxu0 0.0
    %3898 = vmatpush1.msra.mxu0 %v3879
    %3899 = vmatprep.subr.mxu0 0.0
    %3900 = vmatpush1.msra.mxu0 %v3878
    %3901 = vmatprep.subr.mxu0 0.0
    %3902 = vmatpush1.msra.mxu0 %v3877
    %3903 = vmatprep.subr.mxu0 0.0
    %3904 = vmatpush1.msra.mxu0 %v3876
    %3905 = vmatprep.subr.mxu0 0.0
    %3906 = vmatpush1.msra.mxu0 %v3875
    %3907 = vmatprep.subr.mxu0 0.0
    %3908 = vmatpush1.msra.mxu0 %v3874
    %3909 = vmatprep.subr.mxu0 0.0
    %3910 = vmatpush1.msra.mxu0 %v3873
    %3911 = vmatprep.subr.mxu0 0.0
    %3912 = vmatpush1.msra.mxu0 %v3872
    %3913 = vmatprep.subr.mxu0 0.0
    %3914 = vmatpush1.msra.mxu0 %v3871
    %3915 = vmatprep.subr.mxu0 0.0
    %3916 = vmatpush1.msra.mxu0 %v3870
    %3917 = vmatprep.subr.mxu0 0.0
    %3918 = vmatpush1.msra.mxu0 %v3869
    %3919 = vmatprep.subr.mxu0 0.0
    %3920 = vmatpush1.msra.mxu0 %v3868
    %3921 = vmatprep.subr.mxu0 0.0
    %3922 = vmatpush1.msra.mxu0 %v3867
    %3923 = vmatprep.subr.mxu0 0.0
    %3924 = vmatpush2.msra.mxu0 0.0
    %3925 = vmatprep.subr.mxu0 0.0
    %3926 = vmatpush2.msra.mxu0 0.0
    %3927 = vmatprep.subr.mxu0 0.0
    %3928 = vmatpush2.msra.mxu0 0.0
    %3929 = vmatprep.subr.mxu0 0.0
    %3930 = vmatpush2.msra.mxu0 0.0
    %3931 = vmatprep.subr.mxu0 0.0
    %3932 = vmatpush2.msra.mxu0 0.0
    %3933 = vmatprep.subr.mxu0 0.0
    %3934 = vmatpush2.msra.mxu0 0.0
    %3935 = vmatprep.subr.mxu0 0.0
    %3936 = vmatpush2.msra.mxu0 0.0
    %3937 = vmatprep.subr.mxu0 0.0
    %3938 = vmatpush2.msra.mxu0 0.0
    %3939 = vmatprep.subr.mxu0 0.0
    %3940 = vmatpush2.msra.mxu0 0.0
    %3941 = vmatprep.subr.mxu0 0.0
    %3942 = vmatpush2.msra.mxu0 0.0
    %3943 = vmatprep.subr.mxu0 0.0
    %3944 = vmatpush2.msra.mxu0 0.0
    %3945 = vmatprep.subr.mxu0 0.0
    %3946 = vmatpush2.msra.mxu0 0.0
    %3947 = vmatprep.subr.mxu0 0.0
    %3948 = vmatpush2.msra.mxu0 0.0
    %3949 = vmatprep.subr.mxu0 0.0
    %3950 = vmatpush2.msra.mxu0 0.0
    %3951 = vmatprep.subr.mxu0 0.0
    %3952 = vmatpush2.msra.mxu0 0.0
    %3953 = vmatprep.subr.mxu0 0.0
    %3954 = vmatpush2.msra.mxu0 0.0
    %3955 = vmatprep.mubr.f32.mxu0 0.0
    %3956 = vmatmul.mubr.f32.gmra.mxu0 %v3864
    %v3957 = vpop.f32.mrf.mxu0
    %v3958 = vadd.f32 %v3889, %v3957
    %v3959 = vpop.f32.mrf.mxu0
    %3960 = vmatprep.mubr.f32.mxu0 0.0
    %3961 = vmatmul.mubr.f32.gmra.mxu0 %v3865
    %v3962 = vpop.f32.mrf.mxu0
    %v3963 = vadd.f32 %v3889, %v3962
    %v3964 = vpop.f32.mrf.mxu0
    %3965 = vdwg.mxu0
    %v3966 = vadd.f32 %v3958, %v2237
    %v3967 = vadd.f32 %v3963, %v2238
    %s3968 = scalar_lea.vmem %s12, 1
    %v3969 = vld [vmem:[%s3968] sm:$0x1]
    %s3970 = scalar_lea.vmem %s13, 1
    %v3971 = vld [vmem:[%s3970] sm:$0x1]
    %3972 = vadd.xlane.f32.xlu0 %v3966
    %v3973 = vpop.xlane.xlu0 %3972
    %3974 = vadd.xlane.f32.xlu0 %v3967
    %v3975 = vpop.xlane.xlu0 %3974
    %v3976 = vmul.f32 %v3973, %v113
    %v3977 = vmul.f32 %v3975, %v113
    %v3978 = vsub.f32 %v3966, %v3976
    %v3979 = vsub.f32 %v3967, %v3977
    %v3980 = vmul.f32 %v3978, %v3978
    %v3981 = vmul.f32 %v3979, %v3979
    %3982 = vadd.xlane.f32.xlu0 %v3980
    %v3983 = vpop.xlane.xlu0 %3982
    %3984 = vadd.xlane.f32.xlu0 %v3981
    %v3985 = vpop.xlane.xlu0 %3984
    %v3986 = vmul.f32 %v3983, %v113
    %v3987 = vmul.f32 %v3985, %v113
    %v3988 = vadd.f32 %v3986, 1e-12
    %v3989 = vadd.f32 %v3987, 1e-12
    %v3990 = vrsqrt.pop %v3988
    %v3991 = vrsqrt.pop %v3989
    %v3992 = vmul.f32 %v3978, %v3990
    %v3993 = vmul.f32 %v3979, %v3991
    %v3995 = vlaneseq
    %v3996 = vshrl.u32 %v3995, 7
    %v3997 = vsub.s32 0, %v3996
    %v3998 = vrot.slane %v3969, %v3997
    %v4000 = vmul.f32 %v3992, %v3998
    %v4001 = vmul.f32 %v3993, %v3998
    %v4003 = vlaneseq
    %v4004 = vshrl.u32 %v4003, 7
    %v4005 = vsub.s32 0, %v4004
    %v4006 = vrot.slane %v3971, %v4005
    %v4008 = vadd.f32 %v4000, %v4006
    %v4009 = vadd.f32 %v4001, %v4006
    %s4010 = scalar_lea.vmem [#allocation7], 256
    %v4011 = vld [vmem:[%s4010] sm:$0xff]
    %v4012 = vld [vmem:[%s4010 + $0x8] sm:$0xff]
    %v4013 = vld [vmem:[%s4010 + $0x10] sm:$0xff]
    %v4014 = vld [vmem:[%s4010 + $0x18] sm:$0xff]
    %v4015 = vld [vmem:[%s4010 + $0x20] sm:$0xff]
    %v4016 = vld [vmem:[%s4010 + $0x28] sm:$0xff]
    %v4017 = vld [vmem:[%s4010 + $0x30] sm:$0xff]
    %v4018 = vld [vmem:[%s4010 + $0x38] sm:$0xff]
    %v4019 = vld [vmem:[%s4010 + $0x40] sm:$0xff]
    %v4020 = vld [vmem:[%s4010 + $0x48] sm:$0xff]
    %v4021 = vld [vmem:[%s4010 + $0x50] sm:$0xff]
    %v4022 = vld [vmem:[%s4010 + $0x58] sm:$0xff]
    %v4023 = vld [vmem:[%s4010 + $0x60] sm:$0xff]
    %v4024 = vld [vmem:[%s4010 + $0x68] sm:$0xff]
    %v4025 = vld [vmem:[%s4010 + $0x70] sm:$0xff]
    %v4026 = vld [vmem:[%s4010 + $0x78] sm:$0xff]
    %v4027 = vld [vmem:[%s4010 + $0x80] sm:$0xff]
    %v4028 = vld [vmem:[%s4010 + $0x88] sm:$0xff]
    %v4029 = vld [vmem:[%s4010 + $0x90] sm:$0xff]
    %v4030 = vld [vmem:[%s4010 + $0x98] sm:$0xff]
    %v4031 = vld [vmem:[%s4010 + $0xa0] sm:$0xff]
    %v4032 = vld [vmem:[%s4010 + $0xa8] sm:$0xff]
    %v4033 = vld [vmem:[%s4010 + $0xb0] sm:$0xff]
    %v4034 = vld [vmem:[%s4010 + $0xb8] sm:$0xff]
    %v4035 = vld [vmem:[%s4010 + $0xc0] sm:$0xff]
    %v4036 = vld [vmem:[%s4010 + $0xc8] sm:$0xff]
    %v4037 = vld [vmem:[%s4010 + $0xd0] sm:$0xff]
    %v4038 = vld [vmem:[%s4010 + $0xd8] sm:$0xff]
    %v4039 = vld [vmem:[%s4010 + $0xe0] sm:$0xff]
    %v4040 = vld [vmem:[%s4010 + $0xe8] sm:$0xff]
    %v4041 = vld [vmem:[%s4010 + $0xf0] sm:$0xff]
    %v4042 = vld [vmem:[%s4010 + $0xf8] sm:$0xff]
    %s4043 = scalar_lea.vmem %s9, 2
    %v4044 = vld [vmem:[%s4043] sm:$0x3]
    %v4046 = vlaneseq
    %v4047 = vshrl.u32 %v4046, 7
    %v4048 = vsub.s32 0, %v4047
    %v4049 = vrot.slane %v4044, %v4048
    %v4050 = vlaneseq
    %v4051 = vshrl.u32 %v4050, 7
    %v4052 = vsub.s32 1, %v4051
    %v4053 = vrot.slane %v4044, %v4052
    %4056 = vmatprep.subr.mxu0 %v4042
    %4057 = vmatpush1.msra.mxu0 %v4041
    %4058 = vmatprep.subr.mxu0 %v4040
    %4059 = vmatpush1.msra.mxu0 %v4039
    %4060 = vmatprep.subr.mxu0 %v4038
    %4061 = vmatpush1.msra.mxu0 %v4037
    %4062 = vmatprep.subr.mxu0 %v4036
    %4063 = vmatpush1.msra.mxu0 %v4035
    %4064 = vmatprep.subr.mxu0 %v4034
    %4065 = vmatpush1.msra.mxu0 %v4033
    %4066 = vmatprep.subr.mxu0 %v4032
    %4067 = vmatpush1.msra.mxu0 %v4031
    %4068 = vmatprep.subr.mxu0 %v4030
    %4069 = vmatpush1.msra.mxu0 %v4029
    %4070 = vmatprep.subr.mxu0 %v4028
    %4071 = vmatpush1.msra.mxu0 %v4027
    %4072 = vmatprep.subr.mxu0 %v4026
    %4073 = vmatpush1.msra.mxu0 %v4025
    %4074 = vmatprep.subr.mxu0 %v4024
    %4075 = vmatpush1.msra.mxu0 %v4023
    %4076 = vmatprep.subr.mxu0 %v4022
    %4077 = vmatpush1.msra.mxu0 %v4021
    %4078 = vmatprep.subr.mxu0 %v4020
    %4079 = vmatpush1.msra.mxu0 %v4019
    %4080 = vmatprep.subr.mxu0 %v4018
    %4081 = vmatpush1.msra.mxu0 %v4017
    %4082 = vmatprep.subr.mxu0 %v4016
    %4083 = vmatpush1.msra.mxu0 %v4015
    %4084 = vmatprep.subr.mxu0 %v4014
    %4085 = vmatpush1.msra.mxu0 %v4013
    %4086 = vmatprep.subr.mxu0 %v4012
    %4087 = vmatpush1.msra.mxu0 %v4011
    %4088 = vmatprep.subr.mxu0 0.0
    %4089 = vmatpush2.msra.mxu0 0.0
    %4090 = vmatprep.subr.mxu0 0.0
    %4091 = vmatpush2.msra.mxu0 0.0
    %4092 = vmatprep.subr.mxu0 0.0
    %4093 = vmatpush2.msra.mxu0 0.0
    %4094 = vmatprep.subr.mxu0 0.0
    %4095 = vmatpush2.msra.mxu0 0.0
    %4096 = vmatprep.subr.mxu0 0.0
    %4097 = vmatpush2.msra.mxu0 0.0
    %4098 = vmatprep.subr.mxu0 0.0
    %4099 = vmatpush2.msra.mxu0 0.0
    %4100 = vmatprep.subr.mxu0 0.0
    %4101 = vmatpush2.msra.mxu0 0.0
    %4102 = vmatprep.subr.mxu0 0.0
    %4103 = vmatpush2.msra.mxu0 0.0
    %4104 = vmatprep.subr.mxu0 0.0
    %4105 = vmatpush2.msra.mxu0 0.0
    %4106 = vmatprep.subr.mxu0 0.0
    %4107 = vmatpush2.msra.mxu0 0.0
    %4108 = vmatprep.subr.mxu0 0.0
    %4109 = vmatpush2.msra.mxu0 0.0
    %4110 = vmatprep.subr.mxu0 0.0
    %4111 = vmatpush2.msra.mxu0 0.0
    %4112 = vmatprep.subr.mxu0 0.0
    %4113 = vmatpush2.msra.mxu0 0.0
    %4114 = vmatprep.subr.mxu0 0.0
    %4115 = vmatpush2.msra.mxu0 0.0
    %4116 = vmatprep.subr.mxu0 0.0
    %4117 = vmatpush2.msra.mxu0 0.0
    %4118 = vmatprep.subr.mxu0 0.0
    %4119 = vmatpush2.msra.mxu0 0.0
    %4120 = vmatprep.mubr.f32.mxu0 0.0
    %4121 = vmatmul.mubr.f32.gmra.mxu0 %v4008
    %v4122 = vpop.f32.mrf.mxu0
    %v4123 = vadd.f32 %v4049, %v4122
    %v4124 = vpop.f32.mrf.mxu0
    %v4125 = vadd.f32 %v4053, %v4124
    %4126 = vmatprep.mubr.f32.mxu0 0.0
    %4127 = vmatmul.mubr.f32.gmra.mxu0 %v4009
    %v4128 = vpop.f32.mrf.mxu0
    %v4129 = vadd.f32 %v4049, %v4128
    %v4130 = vpop.f32.mrf.mxu0
    %v4131 = vadd.f32 %v4053, %v4130
    %4132 = vdwg.mxu0
    %v4133 = vmul.f32 %v4123, %v4123
    %v4134 = vmul.f32 %v4125, %v4125
    %v4135 = vmul.f32 %v4129, %v4129
    %v4136 = vmul.f32 %v4131, %v4131
    %v4137 = vmul.f32 %v4123, %v4133
    %v4138 = vmul.f32 %v4125, %v4134
    %v4139 = vmul.f32 %v4129, %v4135
    %v4140 = vmul.f32 %v4131, %v4136
    %v4141 = vmul.f32 %v4137, 0.044715
    %v4142 = vmul.f32 %v4138, 0.044715
    %v4143 = vmul.f32 %v4139, 0.044715
    %v4144 = vmul.f32 %v4140, 0.044715
    %v4145 = vadd.f32 %v4123, %v4141
    %v4146 = vadd.f32 %v4125, %v4142
    %v4147 = vadd.f32 %v4129, %v4143
    %v4148 = vadd.f32 %v4131, %v4144
    %v4149 = vmul.f32 %v4145, 0.7978846
    %v4150 = vmul.f32 %v4146, 0.7978846
    %v4151 = vmul.f32 %v4147, 0.7978846
    %v4152 = vmul.f32 %v4148, 0.7978846
    %v4153 = vtanh.pop %v4149
    %v4154 = vtanh.pop %v4150
    %v4155 = vtanh.pop %v4151
    %v4156 = vtanh.pop %v4152
    %v4157 = vadd.f32 %v4153, 1.0
    %v4158 = vadd.f32 %v4154, 1.0
    %v4159 = vadd.f32 %v4155, 1.0
    %v4160 = vadd.f32 %v4156, 1.0
    %v4161 = vmul.f32 %v4157, 0.5
    %v4162 = vmul.f32 %v4158, 0.5
    %v4163 = vmul.f32 %v4159, 0.5
    %v4164 = vmul.f32 %v4160, 0.5
    %v4165 = vmul.f32 %v4123, %v4161
    %v4166 = vmul.f32 %v4125, %v4162
    %v4167 = vmul.f32 %v4129, %v4163
    %v4168 = vmul.f32 %v4131, %v4164
    %s4169 = scalar_lea.vmem [#allocation9], 256
    %v4170 = vld [vmem:[%s4169] sm:$0xff]
    %v4171 = vld [vmem:[%s4169 + $0x8] sm:$0xff]
    %v4172 = vld [vmem:[%s4169 + $0x10] sm:$0xff]
    %v4173 = vld [vmem:[%s4169 + $0x18] sm:$0xff]
    %v4174 = vld [vmem:[%s4169 + $0x20] sm:$0xff]
    %v4175 = vld [vmem:[%s4169 + $0x28] sm:$0xff]
    %v4176 = vld [vmem:[%s4169 + $0x30] sm:$0xff]
    %v4177 = vld [vmem:[%s4169 + $0x38] sm:$0xff]
    %v4178 = vld [vmem:[%s4169 + $0x40] sm:$0xff]
    %v4179 = vld [vmem:[%s4169 + $0x48] sm:$0xff]
    %v4180 = vld [vmem:[%s4169 + $0x50] sm:$0xff]
    %v4181 = vld [vmem:[%s4169 + $0x58] sm:$0xff]
    %v4182 = vld [vmem:[%s4169 + $0x60] sm:$0xff]
    %v4183 = vld [vmem:[%s4169 + $0x68] sm:$0xff]
    %v4184 = vld [vmem:[%s4169 + $0x70] sm:$0xff]
    %v4185 = vld [vmem:[%s4169 + $0x78] sm:$0xff]
    %v4186 = vld [vmem:[%s4169 + $0x80] sm:$0xff]
    %v4187 = vld [vmem:[%s4169 + $0x88] sm:$0xff]
    %v4188 = vld [vmem:[%s4169 + $0x90] sm:$0xff]
    %v4189 = vld [vmem:[%s4169 + $0x98] sm:$0xff]
    %v4190 = vld [vmem:[%s4169 + $0xa0] sm:$0xff]
    %v4191 = vld [vmem:[%s4169 + $0xa8] sm:$0xff]
    %v4192 = vld [vmem:[%s4169 + $0xb0] sm:$0xff]
    %v4193 = vld [vmem:[%s4169 + $0xb8] sm:$0xff]
    %v4194 = vld [vmem:[%s4169 + $0xc0] sm:$0xff]
    %v4195 = vld [vmem:[%s4169 + $0xc8] sm:$0xff]
    %v4196 = vld [vmem:[%s4169 + $0xd0] sm:$0xff]
    %v4197 = vld [vmem:[%s4169 + $0xd8] sm:$0xff]
    %v4198 = vld [vmem:[%s4169 + $0xe0] sm:$0xff]
    %v4199 = vld [vmem:[%s4169 + $0xe8] sm:$0xff]
    %v4200 = vld [vmem:[%s4169 + $0xf0] sm:$0xff]
    %v4201 = vld [vmem:[%s4169 + $0xf8] sm:$0xff]
    %s4202 = scalar_lea.vmem %s11, 1
    %v4203 = vld [vmem:[%s4202] sm:$0x1]
    %v4205 = vlaneseq
    %v4206 = vshrl.u32 %v4205, 7
    %v4207 = vsub.s32 0, %v4206
    %v4208 = vrot.slane %v4203, %v4207
    %4210 = vmatprep.subr.mxu0 0.0
    %4211 = vmatpush1.msra.mxu0 %v4185
    %4212 = vmatprep.subr.mxu0 0.0
    %4213 = vmatpush1.msra.mxu0 %v4184
    %4214 = vmatprep.subr.mxu0 0.0
    %4215 = vmatpush1.msra.mxu0 %v4183
    %4216 = vmatprep.subr.mxu0 0.0
    %4217 = vmatpush1.msra.mxu0 %v4182
    %4218 = vmatprep.subr.mxu0 0.0
    %4219 = vmatpush1.msra.mxu0 %v4181
    %4220 = vmatprep.subr.mxu0 0.0
    %4221 = vmatpush1.msra.mxu0 %v4180
    %4222 = vmatprep.subr.mxu0 0.0
    %4223 = vmatpush1.msra.mxu0 %v4179
    %4224 = vmatprep.subr.mxu0 0.0
    %4225 = vmatpush1.msra.mxu0 %v4178
    %4226 = vmatprep.subr.mxu0 0.0
    %4227 = vmatpush1.msra.mxu0 %v4177
    %4228 = vmatprep.subr.mxu0 0.0
    %4229 = vmatpush1.msra.mxu0 %v4176
    %4230 = vmatprep.subr.mxu0 0.0
    %4231 = vmatpush1.msra.mxu0 %v4175
    %4232 = vmatprep.subr.mxu0 0.0
    %4233 = vmatpush1.msra.mxu0 %v4174
    %4234 = vmatprep.subr.mxu0 0.0
    %4235 = vmatpush1.msra.mxu0 %v4173
    %4236 = vmatprep.subr.mxu0 0.0
    %4237 = vmatpush1.msra.mxu0 %v4172
    %4238 = vmatprep.subr.mxu0 0.0
    %4239 = vmatpush1.msra.mxu0 %v4171
    %4240 = vmatprep.subr.mxu0 0.0
    %4241 = vmatpush1.msra.mxu0 %v4170
    %4242 = vmatprep.subr.mxu0 0.0
    %4243 = vmatpush2.msra.mxu0 %v4201
    %4244 = vmatprep.subr.mxu0 0.0
    %4245 = vmatpush2.msra.mxu0 %v4200
    %4246 = vmatprep.subr.mxu0 0.0
    %4247 = vmatpush2.msra.mxu0 %v4199
    %4248 = vmatprep.subr.mxu0 0.0
    %4249 = vmatpush2.msra.mxu0 %v4198
    %4250 = vmatprep.subr.mxu0 0.0
    %4251 = vmatpush2.msra.mxu0 %v4197
    %4252 = vmatprep.subr.mxu0 0.0
    %4253 = vmatpush2.msra.mxu0 %v4196
    %4254 = vmatprep.subr.mxu0 0.0
    %4255 = vmatpush2.msra.mxu0 %v4195
    %4256 = vmatprep.subr.mxu0 0.0
    %4257 = vmatpush2.msra.mxu0 %v4194
    %4258 = vmatprep.subr.mxu0 0.0
    %4259 = vmatpush2.msra.mxu0 %v4193
    %4260 = vmatprep.subr.mxu0 0.0
    %4261 = vmatpush2.msra.mxu0 %v4192
    %4262 = vmatprep.subr.mxu0 0.0
    %4263 = vmatpush2.msra.mxu0 %v4191
    %4264 = vmatprep.subr.mxu0 0.0
    %4265 = vmatpush2.msra.mxu0 %v4190
    %4266 = vmatprep.subr.mxu0 0.0
    %4267 = vmatpush2.msra.mxu0 %v4189
    %4268 = vmatprep.subr.mxu0 0.0
    %4269 = vmatpush2.msra.mxu0 %v4188
    %4270 = vmatprep.subr.mxu0 0.0
    %4271 = vmatpush2.msra.mxu0 %v4187
    %4272 = vmatprep.subr.mxu0 0.0
    %4273 = vmatpush2.msra.mxu0 %v4186
    %4274 = vmatprep.mubr.f32.mxu0 %v4166
    %4275 = vmatmul.mubr.f32.gmra.mxu0 %v4165
    %v4276 = vpop.f32.mrf.mxu0
    %v4277 = vadd.f32 %v4208, %v4276
    %v4278 = vpop.f32.mrf.mxu0
    %4279 = vmatprep.mubr.f32.mxu0 %v4168
    %4280 = vmatmul.mubr.f32.gmra.mxu0 %v4167
    %v4281 = vpop.f32.mrf.mxu0
    %v4282 = vadd.f32 %v4208, %v4281
    %v4283 = vpop.f32.mrf.mxu0
    %4284 = vdwg.mxu0
    %v4285 = vadd.f32 %v4277, %v4008
    %v4286 = vadd.f32 %v4282, %v4009
    %s4287 = scalar_lea.vmem %s14, 1
    %v4288 = vld [vmem:[%s4287] sm:$0x1]
    %s4289 = scalar_lea.vmem %s15, 1
    %v4290 = vld [vmem:[%s4289] sm:$0x1]
    %4291 = vadd.xlane.f32.xlu0 %v4285
    %v4292 = vpop.xlane.xlu0 %4291
    %4293 = vadd.xlane.f32.xlu0 %v4286
    %v4294 = vpop.xlane.xlu0 %4293
    %v4295 = vmul.f32 %v4292, %v113
    %v4296 = vmul.f32 %v4294, %v113
    %v4297 = vsub.f32 %v4285, %v4295
    %v4298 = vsub.f32 %v4286, %v4296
    %v4299 = vmul.f32 %v4297, %v4297
    %v4300 = vmul.f32 %v4298, %v4298
    %4301 = vadd.xlane.f32.xlu0 %v4299
    %v4302 = vpop.xlane.xlu0 %4301
    %4303 = vadd.xlane.f32.xlu0 %v4300
    %v4304 = vpop.xlane.xlu0 %4303
    %v4305 = vmul.f32 %v4302, %v113
    %v4306 = vmul.f32 %v4304, %v113
    %v4307 = vadd.f32 %v4305, 1e-12
    %v4308 = vadd.f32 %v4306, 1e-12
    %v4309 = vrsqrt.pop %v4307
    %v4310 = vrsqrt.pop %v4308
    %v4311 = vmul.f32 %v4297, %v4309
    %v4312 = vmul.f32 %v4298, %v4310
    %v4314 = vlaneseq
    %v4315 = vshrl.u32 %v4314, 7
    %v4316 = vsub.s32 0, %v4315
    %v4317 = vrot.slane %v4288, %v4316
    %v4319 = vmul.f32 %v4311, %v4317
    %v4320 = vmul.f32 %v4312, %v4317
    %v4322 = vlaneseq
    %v4323 = vshrl.u32 %v4322, 7
    %v4324 = vsub.s32 0, %v4323
    %v4325 = vrot.slane %v4290, %v4324
    %v4327 = vadd.f32 %v4319, %v4325
    %v4328 = vadd.f32 %v4320, %v4325
    %4329 = vst [vmem:[#allocation10] sm:$0xff] %v4327
    %4330 = vst [vmem:[#allocation10 + $0x8] sm:$0xff] %v4328
    %4331 = vst [vmem:[#allocation11] sm:$0x1] %v4327
    %v4332 = vld [vmem:[%s1] sm:$0x1]
    %v4334 = vsel %vm457, %v4332, 0
    %4336 = vmatprep.subr.mxu0 0.0
    %4337 = vmatpush1.msra.mxu0 0.0
    %4338 = vmatprep.subr.mxu0 0.0
    %4339 = vmatpush1.msra.mxu0 0.0
    %4340 = vmatprep.subr.mxu0 0.0
    %4341 = vmatpush1.msra.mxu0 0.0
    %4342 = vmatprep.subr.mxu0 0.0
    %4343 = vmatpush1.msra.mxu0 0.0
    %4344 = vmatprep.subr.mxu0 0.0
    %4345 = vmatpush1.msra.mxu0 0.0
    %4346 = vmatprep.subr.mxu0 0.0
    %4347 = vmatpush1.msra.mxu0 0.0
    %4348 = vmatprep.subr.mxu0 0.0
    %4349 = vmatpush1.msra.mxu0 0.0
    %4350 = vmatprep.subr.mxu0 0.0
    %4351 = vmatpush1.msra.mxu0 0.0
    %4352 = vmatprep.subr.mxu0 0.0
    %4353 = vmatpush1.msra.mxu0 0.0
    %4354 = vmatprep.subr.mxu0 0.0
    %4355 = vmatpush1.msra.mxu0 0.0
    %4356 = vmatprep.subr.mxu0 0.0
    %4357 = vmatpush1.msra.mxu0 0.0
    %4358 = vmatprep.subr.mxu0 0.0
    %4359 = vmatpush1.msra.mxu0 0.0
    %4360 = vmatprep.subr.mxu0 0.0
    %4361 = vmatpush1.msra.mxu0 0.0
    %4362 = vmatprep.subr.mxu0 0.0
    %4363 = vmatpush1.msra.mxu0 0.0
    %4364 = vmatprep.subr.mxu0 0.0
    %4365 = vmatpush1.msra.mxu0 0.0
    %4366 = vmatprep.subr.mxu0 0.0
    %4367 = vmatpush1.msra.mxu0 %v4327
    %4368 = vmatprep.subr.mxu0 0.0
    %4369 = vmatpush2.msra.mxu0 0.0
    %4370 = vmatprep.subr.mxu0 0.0
    %4371 = vmatpush2.msra.mxu0 0.0
    %4372 = vmatprep.subr.mxu0 0.0
    %4373 = vmatpush2.msra.mxu0 0.0
    %4374 = vmatprep.subr.mxu0 0.0
    %4375 = vmatpush2.msra.mxu0 0.0
    %4376 = vmatprep.subr.mxu0 0.0
    %4377 = vmatpush2.msra.mxu0 0.0
    %4378 = vmatprep.subr.mxu0 0.0
    %4379 = vmatpush2.msra.mxu0 0.0
    %4380 = vmatprep.subr.mxu0 0.0
    %4381 = vmatpush2.msra.mxu0 0.0
    %4382 = vmatprep.subr.mxu0 0.0
    %4383 = vmatpush2.msra.mxu0 0.0
    %4384 = vmatprep.subr.mxu0 0.0
    %4385 = vmatpush2.msra.mxu0 0.0
    %4386 = vmatprep.subr.mxu0 0.0
    %4387 = vmatpush2.msra.mxu0 0.0
    %4388 = vmatprep.subr.mxu0 0.0
    %4389 = vmatpush2.msra.mxu0 0.0
    %4390 = vmatprep.subr.mxu0 0.0
    %4391 = vmatpush2.msra.mxu0 0.0
    %4392 = vmatprep.subr.mxu0 0.0
    %4393 = vmatpush2.msra.mxu0 0.0
    %4394 = vmatprep.subr.mxu0 0.0
    %4395 = vmatpush2.msra.mxu0 0.0
    %4396 = vmatprep.subr.mxu0 0.0
    %4397 = vmatpush2.msra.mxu0 0.0
    %4398 = vmatprep.subr.mxu0 0.0
    %4399 = vmatpush2.msra.mxu0 0.0
    %4400 = vmatprep.mubr.f32.mxu0 0.0
    %4401 = vmatmul.mubr.f32.gmra.mxu0 %v4334
    %v4402 = vpop.f32.mrf.mxu0
    %v4403 = vadd.f32 0.0, %v4402
    %v4404 = vpop.f32.mrf.mxu0
    %4405 = vdwg.mxu0
    %vm4406 = vcmask 57344
    %v4407 = vsel %vm4406, %v4332, 0.0
    %4408 = vadd.xlane.f32.xlu0 %v4407
    %v4409 = vpop.xlane.xlu0 %4408
    %v4410 = vrot.slane %v4409, 4
    %v4411 = vadd.f32 %v4409, %v4410
    %v4412 = vrot.slane %v4411, 2
    %v4413 = vadd.f32 %v4411, %v4412
    %v4414 = vrot.slane %v4413, 1
    %v4415 = vadd.f32 %v4413, %v4414
    %s4416 = vtos %v4415
    %v4417 = vstv %s4416
    %v4418 = vrcp.pop %v4417
    %v4419 = vmul.f32 %v4403, %v4418
    %4420 = vst [vmem:[#allocation13] sm:$0x1] %v4419
    %4421 = vst [vmem:[#allocation11 + $0x1] sm:$0x1] %v4328
    %v4422 = vld [vmem:[%s1 + $0x1] sm:$0x1]
    %v4424 = vsel %vm457, %v4422, 0
    %4426 = vmatprep.subr.mxu0 0.0
    %4427 = vmatpush1.msra.mxu0 0.0
    %4428 = vmatprep.subr.mxu0 0.0
    %4429 = vmatpush1.msra.mxu0 0.0
    %4430 = vmatprep.subr.mxu0 0.0
    %4431 = vmatpush1.msra.mxu0 0.0
    %4432 = vmatprep.subr.mxu0 0.0
    %4433 = vmatpush1.msra.mxu0 0.0
    %4434 = vmatprep.subr.mxu0 0.0
    %4435 = vmatpush1.msra.mxu0 0.0
    %4436 = vmatprep.subr.mxu0 0.0
    %4437 = vmatpush1.msra.mxu0 0.0
    %4438 = vmatprep.subr.mxu0 0.0
    %4439 = vmatpush1.msra.mxu0 0.0
    %4440 = vmatprep.subr.mxu0 0.0
    %4441 = vmatpush1.msra.mxu0 0.0
    %4442 = vmatprep.subr.mxu0 0.0
    %4443 = vmatpush1.msra.mxu0 0.0
    %4444 = vmatprep.subr.mxu0 0.0
    %4445 = vmatpush1.msra.mxu0 0.0
    %4446 = vmatprep.subr.mxu0 0.0
    %4447 = vmatpush1.msra.mxu0 0.0
    %4448 = vmatprep.subr.mxu0 0.0
    %4449 = vmatpush1.msra.mxu0 0.0
    %4450 = vmatprep.subr.mxu0 0.0
    %4451 = vmatpush1.msra.mxu0 0.0
    %4452 = vmatprep.subr.mxu0 0.0
    %4453 = vmatpush1.msra.mxu0 0.0
    %4454 = vmatprep.subr.mxu0 0.0
    %4455 = vmatpush1.msra.mxu0 0.0
    %4456 = vmatprep.subr.mxu0 0.0
    %4457 = vmatpush1.msra.mxu0 %v4328
    %4458 = vmatprep.subr.mxu0 0.0
    %4459 = vmatpush2.msra.mxu0 0.0
    %4460 = vmatprep.subr.mxu0 0.0
    %4461 = vmatpush2.msra.mxu0 0.0
    %4462 = vmatprep.subr.mxu0 0.0
    %4463 = vmatpush2.msra.mxu0 0.0
    %4464 = vmatprep.subr.mxu0 0.0
    %4465 = vmatpush2.msra.mxu0 0.0
    %4466 = vmatprep.subr.mxu0 0.0
    %4467 = vmatpush2.msra.mxu0 0.0
    %4468 = vmatprep.subr.mxu0 0.0
    %4469 = vmatpush2.msra.mxu0 0.0
    %4470 = vmatprep.subr.mxu0 0.0
    %4471 = vmatpush2.msra.mxu0 0.0
    %4472 = vmatprep.subr.mxu0 0.0
    %4473 = vmatpush2.msra.mxu0 0.0
    %4474 = vmatprep.subr.mxu0 0.0
    %4475 = vmatpush2.msra.mxu0 0.0
    %4476 = vmatprep.subr.mxu0 0.0
    %4477 = vmatpush2.msra.mxu0 0.0
    %4478 = vmatprep.subr.mxu0 0.0
    %4479 = vmatpush2.msra.mxu0 0.0
    %4480 = vmatprep.subr.mxu0 0.0
    %4481 = vmatpush2.msra.mxu0 0.0
    %4482 = vmatprep.subr.mxu0 0.0
    %4483 = vmatpush2.msra.mxu0 0.0
    %4484 = vmatprep.subr.mxu0 0.0
    %4485 = vmatpush2.msra.mxu0 0.0
    %4486 = vmatprep.subr.mxu0 0.0
    %4487 = vmatpush2.msra.mxu0 0.0
    %4488 = vmatprep.subr.mxu0 0.0
    %4489 = vmatpush2.msra.mxu0 0.0
    %4490 = vmatprep.mubr.f32.mxu0 0.0
    %4491 = vmatmul.mubr.f32.gmra.mxu0 %v4424
    %v4492 = vpop.f32.mrf.mxu0
    %v4493 = vadd.f32 0.0, %v4492
    %v4494 = vpop.f32.mrf.mxu0
    %4495 = vdwg.mxu0
    %v4496 = vsel %vm4406, %v4422, 0.0
    %4497 = vadd.xlane.f32.xlu0 %v4496
    %v4498 = vpop.xlane.xlu0 %4497
    %v4499 = vrot.slane %v4498, 4
    %v4500 = vadd.f32 %v4498, %v4499
    %v4501 = vrot.slane %v4500, 2
    %v4502 = vadd.f32 %v4500, %v4501
    %v4503 = vrot.slane %v4502, 1
    %v4504 = vadd.f32 %v4502, %v4503
    %s4505 = vtos %v4504
    %v4506 = vstv %s4505
    %v4507 = vrcp.pop %v4506
    %v4508 = vmul.f32 %v4493, %v4507
    %4509 = vst [vmem:[#allocation13 + $0x1] sm:$0x1] %v4508
    // Predicated region
    $region78: #{bert_forward.1} parent=1 // pred_check
      _
    $region79: #{bert_forward.1} parent=1 // pred_check_branch
      %4511 = sbr.rel (0) target = $region81
    $region80: #{bert_forward.1} parent=1 // pred_region
      %s4513 = ssub.s32 256, 256
      %4514 = vsyncadd [#allocation6], %s4513
      %s4515 = sshll.u32 [#allocation10], 4
      %s4516 = int_to_ptr.vmem [resolvable:$true] %s4515
      %4521 = dma.vmem_to_hbm [thread:$0]  %s4516, 256, %s16, [#allocation6], 128, 128, 8
    $region81: #{bert_forward.1} parent=1 // pred_fallthru
      _
    // Predicated region
    $region82: #{bert_forward.1} parent=1 // pred_check
      _
    $region83: #{bert_forward.1} parent=1 // pred_check_branch
      %4523 = sbr.rel (0) target = $region85
    $region84: #{bert_forward.1} parent=1 // pred_region
      %s4525 = ssub.s32 32, 32
      %4526 = vsyncadd [#allocation12], %s4525
      %s4528 = sshll.u32 [#allocation11], 4
      %s4529 = int_to_ptr.vmem [resolvable:$true] %s4528
      %4531 = dma.vmem_to_hbm [thread:$0]  %s4529, 32, %s17, [#allocation12]
    $region85: #{bert_forward.1} parent=1 // pred_fallthru
      _
    // Predicated region
    $region86: #{bert_forward.1} parent=1 // pred_check
      _
    $region87: #{bert_forward.1} parent=1 // pred_check_branch
      %4533 = sbr.rel (0) target = $region89
    $region88: #{bert_forward.1} parent=1 // pred_region
      %s4535 = ssub.s32 32, 32
      %4536 = vsyncadd [#allocation12], %s4535
      %s4538 = sshll.u32 [#allocation13], 4
      %s4539 = int_to_ptr.vmem [resolvable:$true] %s4538
      %4541 = dma.vmem_to_hbm [thread:$0]  %s4539, 32, %s18, [#allocation12]
    $region89: #{bert_forward.1} parent=1 // pred_fallthru
      _
    // Predicated region
    $region90: #{bert_forward.1} parent=1 // pred_check
      _
    $region91: #{bert_forward.1} parent=1 // pred_check_branch
      %4543 = sbr.rel (0) target = $region93
    $region92: #{bert_forward.1} parent=1 // pred_region
      %4544 = dma.done [#allocation6], 256
    $region93: #{bert_forward.1} parent=1 // pred_fallthru
      _
    // Predicated region
    $region94: #{bert_forward.1} parent=1 // pred_check
      _
    $region95: #{bert_forward.1} parent=1 // pred_check_branch
      %4546 = sbr.rel (0) target = $region97
    $region96: #{bert_forward.1} parent=1 // pred_region
      %4547 = dma.done [#allocation12], 32
    $region97: #{bert_forward.1} parent=1 // pred_fallthru
      _
    // Predicated region
    $region98: #{bert_forward.1} parent=1 // pred_check
      _
    $region99: #{bert_forward.1} parent=1 // pred_check_branch
      %4549 = sbr.rel (0) target = $region101
    $region100: #{bert_forward.1} parent=1 // pred_region
      %4550 = dma.done [#allocation12], 32
    $region101: #{bert_forward.1} parent=1 // pred_fallthru
      _
    %4551 = vsyncpa [#allocation5], 1
    %4552 = vsyncpa [#allocation8], 1
    %4553 = vsyncpa [#allocation6], 1
    %4554 = vsyncpa [#allocation12], 1

</llo_original>
